<compile_context>
chip_gen: v7x
topology: tpu7x:2x2x1
jax: 0.10.0
libtpu: 0.0.40
codegen_flags: <defaults>
</compile_context>

<pallas_src>
import functools

import jax
import jax.numpy as jnp
from jax import lax
from jax.experimental import pallas as pl
from jax.experimental.pallas import tpu as pltpu


# ----------------------------- small helpers ---------------------------------

_ERF_P = 0.3275911
_ERF_A1, _ERF_A2, _ERF_A3, _ERF_A4, _ERF_A5 = (
    0.254829592, -0.284496736, 1.421413741, -1.453152027, 1.061405429)
_INV_SQRT2 = 0.7071067811865476


def _gelu_exact(x):
    """GELU(x) = 0.5*x*(1+erf(x/sqrt(2))) with erf from A&S 7.1.26.

    Max abs error of the erf polynomial is 1.5e-7 -- numerically
    indistinguishable from exact erf at this kernel's bf16 matmul accuracy --
    and it uses only exp/mul/add/where, so the heavy part goes to the EUP slot.
    """
    z = x * _INV_SQRT2
    az = jnp.abs(z)
    t = 1.0 / (1.0 + _ERF_P * az)
    poly = t * (_ERF_A1 + t * (_ERF_A2 + t * (_ERF_A3 + t * (_ERF_A4 + t * _ERF_A5))))
    erf_abs = 1.0 - poly * jnp.exp(-az * az)
    erf = jnp.where(z >= 0.0, erf_abs, -erf_abs)
    return 0.5 * x * (1.0 + erf)


def _layernorm(v, gamma, beta, eps=1e-5):
    """One-pass statistics (var = E[x^2] - mu^2): two independent lane
    reductions instead of two dependent passes over the slab."""
    mu = jnp.mean(v, axis=-1, keepdims=True)
    ex2 = jnp.mean(v * v, axis=-1, keepdims=True)
    var = jnp.maximum(ex2 - mu * mu, 0.0)
    return (v - mu) * lax.rsqrt(var + eps) * gamma + beta


def _pick_bblk(B, max_bblk=8):
    """Largest batch block (<= max_bblk) giving an even number (>=2) of grid
    steps -- keeps both v7x TensorCores busy and the x/o DMAs pipelined.
    Falls back to >=2 steps, then to a single step only when unavoidable."""
    divisors = [d for d in range(min(B, max_bblk), 0, -1) if B % d == 0]
    for bb in divisors:
        steps = B // bb
        if steps >= 2 and steps % 2 == 0:
            return bb
    for bb in divisors:
        if B // bb >= 2:
            return bb
    return divisors[0] if divisors else 1


def _pick_c_chunk(C, target=512):
    """Largest multiple of 128 (<= target) that divides C; C itself if small."""
    if C <= target:
        return C
    cands = [cc for cc in range(128, target + 1, 128) if C % cc == 0]
    return max(cands) if cands else C


def _supports_pipeline_mode():
    """Narrow capability probe for BlockSpec(pipeline_mode=pl.Buffered(1))."""
    try:
        pl.BlockSpec((8, 128), lambda i: (0, 0), pipeline_mode=pl.Buffered(1))
        return True
    except (TypeError, AttributeError):
        return False


def _vmem_limit_bytes():
    """Per-generation scoped-VMEM limit: ~52 MiB on v7x (64 MiB physical per
    TensorCore), ~112 MiB on v5e/v6e (128 MiB physical)."""
    try:
        cap = int(pltpu.get_tpu_info().vmem_capacity_bytes)
    except Exception:            # not on TPU / older API -> safe default
        cap = 128 << 20
    return max(32 << 20, min(cap - (12 << 20), 112 << 20))


# ----------------------------- the kernel -------------------------------------

def mixer_block_kernel(
    x_ref,              # (BBLK, N, D)  input activations
    g1_ref, be1_ref,    # (1, D) f32    token-mix LayerNorm gamma / beta
    w1t_ref, b1_ref,    # (T, N) bf16, (T, 1) f32   token FF lin1 (W^T, bias)
    w2t_ref, b2_ref,    # (N, T) bf16, (N, 1) f32   token FF lin2 (W^T, bias)
    g2_ref, be2_ref,    # (1, D) f32    channel-mix LayerNorm gamma / beta
    w3_ref, b3_ref,     # (D, C) bf16, (1, C) f32   channel FF lin1
    w4_ref, b4_ref,     # (C, D) bf16, (1, D) f32   channel FF lin2
    o_ref,              # (BBLK, N, D)
    acc_ref,            # (BBLK*N, D) f32 scratch: channel-FF accumulator
    *, c_chunk,
):
    f32, bf16 = jnp.float32, jnp.bfloat16
    bblk, n, d = x_ref.shape
    m = bblk * n
    tdim = w1t_ref.shape[0]
    cdim = w3_ref.shape[1]
    n_cc = cdim // c_chunk                     # static chunk count

    # Fold batch into rows for everything that is per-(b, n) row independent.
    x2 = x_ref[...].reshape(m, d).astype(f32)                    # (M, D)

    # ---------------- token-mix LayerNorm ------------------------------------
    xn = _layernorm(x2, g1_ref[...], be1_ref[...])
    xn3 = xn.astype(bf16).reshape(bblk, n, d)                    # (BBLK, N, D)

    # ---------------- token FeedForward (contracts over the patch axis) ------
    # Single batched contraction per linear: weights broadcast along the batch
    # block so each per-batch matmul is a plain (M,K)x(K,N) MXU op -- no
    # transposes, no Python unroll, no concatenate.
    w1b = jnp.broadcast_to(w1t_ref[...], (bblk, tdim, n))        # (BBLK, T, N)
    h = jnp.einsum('btn,bnd->btd', w1b, xn3,
                   preferred_element_type=f32) + b1_ref[...][None]
    h = _gelu_exact(h)                                           # (BBLK, T, D) f32
    w2b = jnp.broadcast_to(w2t_ref[...], (bblk, n, tdim))        # (BBLK, N, T)
    tok = jnp.einsum('bnt,btd->bnd', w2b, h.astype(bf16),
                     preferred_element_type=f32) + b2_ref[...][None]

    x1 = x2 + tok.reshape(m, d)                                  # residual 1

    # ---------------- channel-mix LayerNorm ----------------------------------
    xn2 = _layernorm(x1, g2_ref[...], be2_ref[...]).astype(bf16)  # (M, D) bf16

    # ---------------- channel FeedForward, tiled over C ----------------------
    # Accumulate per C-chunk into VMEM scratch so the (M, C) hidden activation
    # (and its bf16 copy) never materialise in full.
    acc_ref[...] = x1 + b4_ref[...]

    def cff_chunk(c, carry):
        off = pl.multiple_of(c * c_chunk, c_chunk)
        w3c = w3_ref[:, pl.ds(off, c_chunk)]                     # (D, cc) bf16
        b3c = b3_ref[:, pl.ds(off, c_chunk)]                     # (1, cc) f32
        h2 = jnp.dot(xn2, w3c, preferred_element_type=f32) + b3c
        h2 = _gelu_exact(h2)                                     # (M, cc) f32
        w4c = w4_ref[pl.ds(off, c_chunk), :]                     # (cc, D) bf16
        acc_ref[...] += jnp.dot(h2.astype(bf16), w4c,
                                preferred_element_type=f32)
        return carry

    lax.fori_loop(0, n_cc, cff_chunk, 0, unroll=n_cc <= 4)

    # residual 2
    o_ref[...] = acc_ref[...].reshape(bblk, n, d).astype(o_ref.dtype)


# ----------------------------- the wrapper ------------------------------------

def mixer_block(x, params, *, bblk=None, c_chunk=None):
    """x: (B, N, D) float32.  params: dict of f32 weights (see init_params)."""
    B, N, D = x.shape
    T = params["w1"].shape[1]   # token_dim
    C = params["w3"].shape[1]   # channel_dim

    bblk = _pick_bblk(B) if bblk is None else bblk
    assert B % bblk == 0
    c_chunk = _pick_c_chunk(C) if c_chunk is None else min(int(c_chunk), C)
    assert C % c_chunk == 0

    f32, bf16 = jnp.float32, jnp.bfloat16

    # bf16 weights: MXU-native, half the VMEM / DMA traffic.
    w1t = params["w1"].T.astype(bf16)          # (T, N)
    w2t = params["w2"].T.astype(bf16)          # (N, T)
    w3 = params["w3"].astype(bf16)             # (D, C)
    w4 = params["w4"].astype(bf16)             # (C, D)

    operands = (
        x,
        params["g1"].reshape(1, D).astype(f32), params["be1"].reshape(1, D).astype(f32),
        w1t, params["b1"].reshape(T, 1).astype(f32),
        w2t, params["b2"].reshape(N, 1).astype(f32),
        params["g2"].reshape(1, D).astype(f32), params["be2"].reshape(1, D).astype(f32),
        w3, params["b3"].reshape(1, C).astype(f32),
        w4, params["b4"].reshape(1, D).astype(f32),
    )

    # Advisory cost estimate so XLA doesn't schedule around a "free" custom call.
    flops = int(4 * B * N * D * (T + C) + 12 * B * N * D)
    transcendentals = int(B * T * D + B * N * C)        # one exp per GELU element
    bytes_accessed = int(sum(int(o.size) * o.dtype.itemsize for o in operands)
                         + B * N * D * jnp.dtype(x.dtype).itemsize)
    cost = pl.CostEstimate(flops=flops, transcendentals=transcendentals,
                           bytes_accessed=bytes_accessed)

    supports_pm = _supports_pipeline_mode()

    def const_spec(shape):
        imap = lambda i, _s=shape: (0,) * len(_s)
        if supports_pm:
            # Constant-index blocks never move across grid steps: single-buffer
            # them so they are not needlessly double-buffered.
            return pl.BlockSpec(shape, imap, pipeline_mode=pl.Buffered(1))
        return pl.BlockSpec(shape, imap)

    grid_spec = pltpu.PrefetchScalarGridSpec(
        num_scalar_prefetch=0,
        grid=(B // bblk,),                               # even #steps >= 2 (see _pick_bblk)
        in_specs=[
            pl.BlockSpec((bblk, N, D), lambda i: (i, 0, 0)),   # x
            const_spec((1, D)), const_spec((1, D)),            # LN1 gamma, beta
            const_spec((T, N)), const_spec((T, 1)),            # token FF lin1 (W^T, bias)
            const_spec((N, T)), const_spec((N, 1)),            # token FF lin2 (W^T, bias)
            const_spec((1, D)), const_spec((1, D)),            # LN2 gamma, beta
            const_spec((D, C)), const_spec((1, C)),            # channel FF lin1
            const_spec((C, D)), const_spec((1, D)),            # channel FF lin2
        ],
        out_specs=pl.BlockSpec((bblk, N, D), lambda i: (i, 0, 0)),
        scratch_shapes=[pltpu.VMEM((bblk * N, D), jnp.float32)],
    )

    fn = pl.pallas_call(
        functools.partial(mixer_block_kernel, c_chunk=c_chunk),
        out_shape=jax.ShapeDtypeStruct((B, N, D), x.dtype),
        grid_spec=grid_spec,
        compiler_params=pltpu.CompilerParams(
            dimension_semantics=("parallel",),
            vmem_limit_bytes=_vmem_limit_bytes()),
        cost_estimate=cost,
    )
    return fn(*operands)


# ----------------------------- params & reference -----------------------------

def init_params(key, dim, num_patch, token_dim, channel_dim):
    """Deterministic synthetic parameters (shapes match the PyTorch module)."""
    ks = jax.random.split(key, 8)
    s = 0.05
    return {
        # token_mix LayerNorm(dim)
        "g1": jnp.ones((dim,), jnp.float32),
        "be1": jnp.zeros((dim,), jnp.float32),
        # token FeedForward(num_patch, token_dim)
        "w1": s * jax.random.normal(ks[0], (num_patch, token_dim), jnp.float32),
        "b1": s * jax.random.normal(ks[1], (token_dim,), jnp.float32),
        "w2": s * jax.random.normal(ks[2], (token_dim, num_patch), jnp.float32),
        "b2": s * jax.random.normal(ks[3], (num_patch,), jnp.float32),
        # channel_mix LayerNorm(dim)
        "g2": jnp.ones((dim,), jnp.float32),
        "be2": jnp.zeros((dim,), jnp.float32),
        # channel FeedForward(dim, channel_dim)
        "w3": s * jax.random.normal(ks[4], (dim, channel_dim), jnp.float32),
        "b3": s * jax.random.normal(ks[5], (channel_dim,), jnp.float32),
        "w4": s * jax.random.normal(ks[6], (channel_dim, dim), jnp.float32),
        "b4": s * jax.random.normal(ks[7], (dim,), jnp.float32),
    }


def mixer_block_ref(x, p):
    """Pure-JAX f32 reference matching the PyTorch forward (dropout=0)."""
    eps = 1e-5

    def ln(v, g, b):
        mu = jnp.mean(v, axis=-1, keepdims=True)
        var = jnp.mean((v - mu) ** 2, axis=-1, keepdims=True)
        return (v - mu) / jnp.sqrt(var + eps) * g + b

    # token mix
    xn = ln(x, p["g1"], p["be1"])                 # (B, N, D)
    xt = jnp.swapaxes(xn, 1, 2)                   # (B, D, N)
    h = jax.nn.gelu(xt @ p["w1"] + p["b1"], approximate=False)
    tok = h @ p["w2"] + p["b2"]                   # (B, D, N)
    x = x + jnp.swapaxes(tok, 1, 2)
    # channel mix
    xn2 = ln(x, p["g2"], p["be2"])
    h2 = jax.nn.gelu(xn2 @ p["w3"] + p["b3"], approximate=False)
    return x + (h2 @ p["w4"] + p["b4"])


if __name__ == "__main__":
    # Small shapes: lane-dense D; bblk auto-picks 4 -> grid of 2 "parallel"
    # steps; c_chunk=128 exercises the C-tiled channel FF (2 chunks at C=256).
    B, N, D = 8, 16, 128                 # batch, num_patch, dim
    token_dim, channel_dim = 64, 256

    key = jax.random.PRNGKey(0)
    kx, kp = jax.random.split(key)
    x = jax.random.normal(kx, (B, N, D), jnp.float32)
    params = init_params(kp, D, N, token_dim, channel_dim)

    out = jax.block_until_ready(mixer_block(x, params, c_chunk=128))
    ref = mixer_block_ref(x, params)

    assert out.shape == (B, N, D)
    # bf16 MXU operands with f32 accumulation -> looser tolerance than pure f32.
    err = float(jnp.max(jnp.abs(out - ref)))
    assert jnp.allclose(out, ref, atol=5e-2, rtol=5e-2), err

    print("KERNEL_OK")
</pallas_src>

<mosaic_0001>
module attributes {stable_mosaic.version = 11 : i64} {
  func.func @mixer_block_kernel(%arg0: i32, %arg1: memref<4x16x128xf32, #tpu.memory_space<vmem>>, %arg2: memref<1x128xf32, #tpu.memory_space<vmem>>, %arg3: memref<1x128xf32, #tpu.memory_space<vmem>>, %arg4: memref<64x16xbf16, #tpu.memory_space<vmem>>, %arg5: memref<64x1xf32, #tpu.memory_space<vmem>>, %arg6: memref<16x64xbf16, #tpu.memory_space<vmem>>, %arg7: memref<16x1xf32, #tpu.memory_space<vmem>>, %arg8: memref<1x128xf32, #tpu.memory_space<vmem>>, %arg9: memref<1x128xf32, #tpu.memory_space<vmem>>, %arg10: memref<128x256xbf16, #tpu.memory_space<vmem>>, %arg11: memref<1x256xf32, #tpu.memory_space<vmem>>, %arg12: memref<256x128xbf16, #tpu.memory_space<vmem>>, %arg13: memref<1x128xf32, #tpu.memory_space<vmem>>, %arg14: memref<4x16x128xf32, #tpu.memory_space<vmem>>, %arg15: memref<64x128xf32, #tpu.memory_space<vmem>>) attributes {dimension_semantics = [#tpu.dimension_semantics<parallel>], iteration_bounds = array<i64: 2>, scalar_prefetch = 0 : i64, scratch_operands = 1 : i64, tpu.core_type = #tpu.core_type<tc>, window_params = [{transform_indices = @transform_0, window_bounds = array<i64: 4, 16, 128>}, {pipeline_mode = #tpu.pipeline_mode<synchronous>, transform_indices = @transform_1, window_bounds = array<i64: 1, 128>}, {pipeline_mode = #tpu.pipeline_mode<synchronous>, transform_indices = @transform_2, window_bounds = array<i64: 1, 128>}, {pipeline_mode = #tpu.pipeline_mode<synchronous>, transform_indices = @transform_3, window_bounds = array<i64: 64, 16>}, {pipeline_mode = #tpu.pipeline_mode<synchronous>, transform_indices = @transform_4, window_bounds = array<i64: 64, 1>}, {pipeline_mode = #tpu.pipeline_mode<synchronous>, transform_indices = @transform_5, window_bounds = array<i64: 16, 64>}, {pipeline_mode = #tpu.pipeline_mode<synchronous>, transform_indices = @transform_6, window_bounds = array<i64: 16, 1>}, {pipeline_mode = #tpu.pipeline_mode<synchronous>, transform_indices = @transform_7, window_bounds = array<i64: 1, 128>}, {pipeline_mode = #tpu.pipeline_mode<synchronous>, transform_indices = @transform_8, window_bounds = array<i64: 1, 128>}, {pipeline_mode = #tpu.pipeline_mode<synchronous>, transform_indices = @transform_9, window_bounds = array<i64: 128, 256>}, {pipeline_mode = #tpu.pipeline_mode<synchronous>, transform_indices = @transform_10, window_bounds = array<i64: 1, 256>}, {pipeline_mode = #tpu.pipeline_mode<synchronous>, transform_indices = @transform_11, window_bounds = array<i64: 256, 128>}, {pipeline_mode = #tpu.pipeline_mode<synchronous>, transform_indices = @transform_12, window_bounds = array<i64: 1, 128>}, {transform_indices = @transform_13, window_bounds = array<i64: 4, 16, 128>}]} {
    %c0 = arith.constant 0 : index
    %c0_0 = arith.constant 0 : index
    %c0_1 = arith.constant 0 : index
    %0 = vector.load %arg1[%c0, %c0_0, %c0_1] : memref<4x16x128xf32, #tpu.memory_space<vmem>>, vector<4x16x128xf32>
    %1 = vector.shape_cast %0 : vector<4x16x128xf32> to vector<64x128xf32>
    %c0_2 = arith.constant 0 : index
    %c0_3 = arith.constant 0 : index
    %2 = vector.load %arg2[%c0_2, %c0_3] : memref<1x128xf32, #tpu.memory_space<vmem>>, vector<1x128xf32>
    %c0_4 = arith.constant 0 : index
    %c0_5 = arith.constant 0 : index
    %3 = vector.load %arg3[%c0_4, %c0_5] : memref<1x128xf32, #tpu.memory_space<vmem>>, vector<1x128xf32>
    %cst = arith.constant dense<0.000000e+00> : vector<64xf32>
    %4 = vector.multi_reduction <add>, %1, %cst [1] : vector<64x128xf32> to vector<64xf32>
    %5 = vector.shape_cast %4 : vector<64xf32> to vector<64x1xf32>
    %cst_6 = arith.constant 1.280000e+02 : f32
    %6 = vector.broadcast %cst_6 : f32 to vector<64x1xf32>
    %7 = arith.divf %5, %6 : vector<64x1xf32>
    %8 = arith.mulf %1, %1 : vector<64x128xf32>
    %cst_7 = arith.constant dense<0.000000e+00> : vector<64xf32>
    %9 = vector.multi_reduction <add>, %8, %cst_7 [1] : vector<64x128xf32> to vector<64xf32>
    %10 = vector.shape_cast %9 : vector<64xf32> to vector<64x1xf32>
    %cst_8 = arith.constant 1.280000e+02 : f32
    %11 = vector.broadcast %cst_8 : f32 to vector<64x1xf32>
    %12 = arith.divf %10, %11 : vector<64x1xf32>
    %13 = arith.mulf %7, %7 : vector<64x1xf32>
    %14 = arith.subf %12, %13 : vector<64x1xf32>
    %cst_9 = arith.constant 0.000000e+00 : f32
    %15 = vector.broadcast %cst_9 : f32 to vector<64x1xf32>
    %16 = arith.maximumf %14, %15 : vector<64x1xf32>
    %17 = vector.broadcast %7 : vector<64x1xf32> to vector<64x128xf32>
    %18 = arith.subf %1, %17 : vector<64x128xf32>
    %cst_10 = arith.constant 9.99999974E-6 : f32
    %19 = vector.broadcast %cst_10 : f32 to vector<64x1xf32>
    %20 = arith.addf %16, %19 : vector<64x1xf32>
    %21 = math.rsqrt %20 : vector<64x1xf32>
    %22 = vector.broadcast %21 : vector<64x1xf32> to vector<64x128xf32>
    %23 = arith.mulf %18, %22 : vector<64x128xf32>
    %24 = vector.broadcast %2 : vector<1x128xf32> to vector<64x128xf32>
    %25 = arith.mulf %23, %24 : vector<64x128xf32>
    %26 = vector.broadcast %3 : vector<1x128xf32> to vector<64x128xf32>
    %27 = arith.addf %25, %26 : vector<64x128xf32>
    %28 = arith.truncf %27 : vector<64x128xf32> to vector<64x128xbf16>
    %29 = vector.shape_cast %28 : vector<64x128xbf16> to vector<4x16x128xbf16>
    %c0_11 = arith.constant 0 : index
    %c0_12 = arith.constant 0 : index
    %30 = vector.load %arg4[%c0_11, %c0_12] : memref<64x16xbf16, #tpu.memory_space<vmem>>, vector<64x16xbf16>
    %31 = vector.shape_cast %30 : vector<64x16xbf16> to vector<1x64x16xbf16>
    %32 = vector.broadcast %31 : vector<1x64x16xbf16> to vector<4x64x16xbf16>
    "tpu.trace_start"() <{level = 10 : i32, message = "btn,bnd->btd"}> : () -> ()
    %cst_13 = arith.constant dense<0.000000e+00> : vector<4x64x128xf32>
    %33 = tpu.matmul %32, %29, %cst_13 {dimension_numbers = #tpu.dot_dimension_numbers<[2], [1], [1], [2], [0, 0, 0, 1, 1, 2], [0], [0]>} : vector<4x64x16xbf16>, vector<4x16x128xbf16>, vector<4x64x128xf32> -> vector<4x64x128xf32>
    "tpu.trace_stop"() : () -> ()
    %c0_14 = arith.constant 0 : index
    %c0_15 = arith.constant 0 : index
    %34 = vector.load %arg5[%c0_14, %c0_15] : memref<64x1xf32, #tpu.memory_space<vmem>>, vector<64x1xf32>
    %35 = vector.shape_cast %34 : vector<64x1xf32> to vector<1x64x1xf32>
    %36 = vector.broadcast %35 : vector<1x64x1xf32> to vector<4x64x128xf32>
    %37 = arith.addf %33, %36 : vector<4x64x128xf32>
    %cst_16 = arith.constant 0.707106769 : f32
    %38 = vector.broadcast %cst_16 : f32 to vector<4x64x128xf32>
    %39 = arith.mulf %37, %38 : vector<4x64x128xf32>
    %40 = math.absf %39 : vector<4x64x128xf32>
    %cst_17 = arith.constant 0.327591091 : f32
    %41 = vector.broadcast %cst_17 : f32 to vector<4x64x128xf32>
    %42 = arith.mulf %41, %40 : vector<4x64x128xf32>
    %cst_18 = arith.constant 1.000000e+00 : f32
    %43 = vector.broadcast %cst_18 : f32 to vector<4x64x128xf32>
    %44 = arith.addf %43, %42 : vector<4x64x128xf32>
    %cst_19 = arith.constant 1.000000e+00 : f32
    %45 = vector.broadcast %cst_19 : f32 to vector<4x64x128xf32>
    %46 = arith.divf %45, %44 : vector<4x64x128xf32>
    %cst_20 = arith.constant 1.06140542 : f32
    %47 = vector.broadcast %cst_20 : f32 to vector<4x64x128xf32>
    %48 = arith.mulf %46, %47 : vector<4x64x128xf32>
    %cst_21 = arith.constant -1.45315206 : f32
    %49 = vector.broadcast %cst_21 : f32 to vector<4x64x128xf32>
    %50 = arith.addf %49, %48 : vector<4x64x128xf32>
    %51 = arith.mulf %46, %50 : vector<4x64x128xf32>
    %cst_22 = arith.constant 1.42141378 : f32
    %52 = vector.broadcast %cst_22 : f32 to vector<4x64x128xf32>
    %53 = arith.addf %52, %51 : vector<4x64x128xf32>
    %54 = arith.mulf %46, %53 : vector<4x64x128xf32>
    %cst_23 = arith.constant -0.284496725 : f32
    %55 = vector.broadcast %cst_23 : f32 to vector<4x64x128xf32>
    %56 = arith.addf %55, %54 : vector<4x64x128xf32>
    %57 = arith.mulf %46, %56 : vector<4x64x128xf32>
    %cst_24 = arith.constant 0.254829586 : f32
    %58 = vector.broadcast %cst_24 : f32 to vector<4x64x128xf32>
    %59 = arith.addf %58, %57 : vector<4x64x128xf32>
    %60 = arith.mulf %46, %59 : vector<4x64x128xf32>
    %cst_25 = arith.constant 0.000000e+00 : f32
    %61 = vector.broadcast %cst_25 : f32 to vector<4x64x128xf32>
    %62 = arith.subf %61, %40 : vector<4x64x128xf32>
    %63 = arith.mulf %62, %40 : vector<4x64x128xf32>
    %64 = math.exp %63 : vector<4x64x128xf32>
    %65 = arith.mulf %60, %64 : vector<4x64x128xf32>
    %cst_26 = arith.constant 1.000000e+00 : f32
    %66 = vector.broadcast %cst_26 : f32 to vector<4x64x128xf32>
    %67 = arith.subf %66, %65 : vector<4x64x128xf32>
    %cst_27 = arith.constant 0.000000e+00 : f32
    %68 = vector.broadcast %cst_27 : f32 to vector<4x64x128xf32>
    %69 = arith.cmpf oge, %39, %68 : vector<4x64x128xf32>
    %cst_28 = arith.constant 0.000000e+00 : f32
    %70 = vector.broadcast %cst_28 : f32 to vector<4x64x128xf32>
    %71 = arith.subf %70, %67 : vector<4x64x128xf32>
    %72 = arith.select %69, %67, %71 : vector<4x64x128xi1>, vector<4x64x128xf32>
    %cst_29 = arith.constant 5.000000e-01 : f32
    %73 = vector.broadcast %cst_29 : f32 to vector<4x64x128xf32>
    %74 = arith.mulf %73, %37 : vector<4x64x128xf32>
    %cst_30 = arith.constant 1.000000e+00 : f32
    %75 = vector.broadcast %cst_30 : f32 to vector<4x64x128xf32>
    %76 = arith.addf %75, %72 : vector<4x64x128xf32>
    %77 = arith.mulf %74, %76 : vector<4x64x128xf32>
    %c0_31 = arith.constant 0 : index
    %c0_32 = arith.constant 0 : index
    %78 = vector.load %arg6[%c0_31, %c0_32] : memref<16x64xbf16, #tpu.memory_space<vmem>>, vector<16x64xbf16>
    %79 = vector.shape_cast %78 : vector<16x64xbf16> to vector<1x16x64xbf16>
    %80 = vector.broadcast %79 : vector<1x16x64xbf16> to vector<4x16x64xbf16>
    %81 = arith.truncf %77 : vector<4x64x128xf32> to vector<4x64x128xbf16>
    "tpu.trace_start"() <{level = 10 : i32, message = "bnt,btd->bnd"}> : () -> ()
    %cst_33 = arith.constant dense<0.000000e+00> : vector<4x16x128xf32>
    %82 = tpu.matmul %80, %81, %cst_33 {dimension_numbers = #tpu.dot_dimension_numbers<[2], [1], [1], [2], [0, 0, 0, 1, 1, 2], [0], [0]>} : vector<4x16x64xbf16>, vector<4x64x128xbf16>, vector<4x16x128xf32> -> vector<4x16x128xf32>
    "tpu.trace_stop"() : () -> ()
    %c0_34 = arith.constant 0 : index
    %c0_35 = arith.constant 0 : index
    %83 = vector.load %arg7[%c0_34, %c0_35] : memref<16x1xf32, #tpu.memory_space<vmem>>, vector<16x1xf32>
    %84 = vector.shape_cast %83 : vector<16x1xf32> to vector<1x16x1xf32>
    %85 = vector.broadcast %84 : vector<1x16x1xf32> to vector<4x16x128xf32>
    %86 = arith.addf %82, %85 : vector<4x16x128xf32>
    %87 = vector.shape_cast %86 : vector<4x16x128xf32> to vector<64x128xf32>
    %88 = arith.addf %1, %87 : vector<64x128xf32>
    %c0_36 = arith.constant 0 : index
    %c0_37 = arith.constant 0 : index
    %89 = vector.load %arg8[%c0_36, %c0_37] : memref<1x128xf32, #tpu.memory_space<vmem>>, vector<1x128xf32>
    %c0_38 = arith.constant 0 : index
    %c0_39 = arith.constant 0 : index
    %90 = vector.load %arg9[%c0_38, %c0_39] : memref<1x128xf32, #tpu.memory_space<vmem>>, vector<1x128xf32>
    %cst_40 = arith.constant dense<0.000000e+00> : vector<64xf32>
    %91 = vector.multi_reduction <add>, %88, %cst_40 [1] : vector<64x128xf32> to vector<64xf32>
    %92 = vector.shape_cast %91 : vector<64xf32> to vector<64x1xf32>
    %cst_41 = arith.constant 1.280000e+02 : f32
    %93 = vector.broadcast %cst_41 : f32 to vector<64x1xf32>
    %94 = arith.divf %92, %93 : vector<64x1xf32>
    %95 = arith.mulf %88, %88 : vector<64x128xf32>
    %cst_42 = arith.constant dense<0.000000e+00> : vector<64xf32>
    %96 = vector.multi_reduction <add>, %95, %cst_42 [1] : vector<64x128xf32> to vector<64xf32>
    %97 = vector.shape_cast %96 : vector<64xf32> to vector<64x1xf32>
    %cst_43 = arith.constant 1.280000e+02 : f32
    %98 = vector.broadcast %cst_43 : f32 to vector<64x1xf32>
    %99 = arith.divf %97, %98 : vector<64x1xf32>
    %100 = arith.mulf %94, %94 : vector<64x1xf32>
    %101 = arith.subf %99, %100 : vector<64x1xf32>
    %cst_44 = arith.constant 0.000000e+00 : f32
    %102 = vector.broadcast %cst_44 : f32 to vector<64x1xf32>
    %103 = arith.maximumf %101, %102 : vector<64x1xf32>
    %104 = vector.broadcast %94 : vector<64x1xf32> to vector<64x128xf32>
    %105 = arith.subf %88, %104 : vector<64x128xf32>
    %cst_45 = arith.constant 9.99999974E-6 : f32
    %106 = vector.broadcast %cst_45 : f32 to vector<64x1xf32>
    %107 = arith.addf %103, %106 : vector<64x1xf32>
    %108 = math.rsqrt %107 : vector<64x1xf32>
    %109 = vector.broadcast %108 : vector<64x1xf32> to vector<64x128xf32>
    %110 = arith.mulf %105, %109 : vector<64x128xf32>
    %111 = vector.broadcast %89 : vector<1x128xf32> to vector<64x128xf32>
    %112 = arith.mulf %110, %111 : vector<64x128xf32>
    %113 = vector.broadcast %90 : vector<1x128xf32> to vector<64x128xf32>
    %114 = arith.addf %112, %113 : vector<64x128xf32>
    %115 = arith.truncf %114 : vector<64x128xf32> to vector<64x128xbf16>
    %c0_46 = arith.constant 0 : index
    %c0_47 = arith.constant 0 : index
    %116 = vector.load %arg13[%c0_46, %c0_47] : memref<1x128xf32, #tpu.memory_space<vmem>>, vector<1x128xf32>
    %117 = vector.broadcast %116 : vector<1x128xf32> to vector<64x128xf32>
    %118 = arith.addf %88, %117 : vector<64x128xf32>
    %c0_48 = arith.constant 0 : index
    %c0_49 = arith.constant 0 : index
    %119 = vector.load %arg15[%c0_48, %c0_49] : memref<64x128xf32, #tpu.memory_space<vmem>>, vector<64x128xf32>
    tpu.vector_store %arg15[%c0_48, %c0_49], %118 {strides = array<i32>} : memref<64x128xf32, #tpu.memory_space<vmem>>, vector<64x128xf32>,
    %c0_i32 = arith.constant 0 : i32
    %c128_i32 = arith.constant 128 : i32
    %120 = arith.muli %c0_i32, %c128_i32 : i32
    %121 = tpu.assume_multiple %120, 128 : i32
    %c0_50 = arith.constant 0 : index
    %122 = arith.index_cast %121 : i32 to index
    %123 = vector.load %arg10[%c0_50, %122] : memref<128x256xbf16, #tpu.memory_space<vmem>>, vector<128x128xbf16>
    %c0_51 = arith.constant 0 : index
    %124 = arith.index_cast %121 : i32 to index
    %125 = vector.load %arg11[%c0_51, %124] : memref<1x256xf32, #tpu.memory_space<vmem>>, vector<1x128xf32>
    %cst_52 = arith.constant dense<0.000000e+00> : vector<64x128xf32>
    %126 = tpu.matmul %115, %123, %cst_52 {dimension_numbers = #tpu.dot_dimension_numbers<[1], [0], [0], [1], [0, 0, 1, 1], [], []>} : vector<64x128xbf16>, vector<128x128xbf16>, vector<64x128xf32> -> vector<64x128xf32>
    %127 = vector.broadcast %125 : vector<1x128xf32> to vector<64x128xf32>
    %128 = arith.addf %126, %127 : vector<64x128xf32>
    %cst_53 = arith.constant 0.707106769 : f32
    %129 = vector.broadcast %cst_53 : f32 to vector<64x128xf32>
    %130 = arith.mulf %128, %129 : vector<64x128xf32>
    %131 = math.absf %130 : vector<64x128xf32>
    %cst_54 = arith.constant 0.327591091 : f32
    %132 = vector.broadcast %cst_54 : f32 to vector<64x128xf32>
    %133 = arith.mulf %132, %131 : vector<64x128xf32>
    %cst_55 = arith.constant 1.000000e+00 : f32
    %134 = vector.broadcast %cst_55 : f32 to vector<64x128xf32>
    %135 = arith.addf %134, %133 : vector<64x128xf32>
    %cst_56 = arith.constant 1.000000e+00 : f32
    %136 = vector.broadcast %cst_56 : f32 to vector<64x128xf32>
    %137 = arith.divf %136, %135 : vector<64x128xf32>
    %cst_57 = arith.constant 1.06140542 : f32
    %138 = vector.broadcast %cst_57 : f32 to vector<64x128xf32>
    %139 = arith.mulf %137, %138 : vector<64x128xf32>
    %cst_58 = arith.constant -1.45315206 : f32
    %140 = vector.broadcast %cst_58 : f32 to vector<64x128xf32>
    %141 = arith.addf %140, %139 : vector<64x128xf32>
    %142 = arith.mulf %137, %141 : vector<64x128xf32>
    %cst_59 = arith.constant 1.42141378 : f32
    %143 = vector.broadcast %cst_59 : f32 to vector<64x128xf32>
    %144 = arith.addf %143, %142 : vector<64x128xf32>
    %145 = arith.mulf %137, %144 : vector<64x128xf32>
    %cst_60 = arith.constant -0.284496725 : f32
    %146 = vector.broadcast %cst_60 : f32 to vector<64x128xf32>
    %147 = arith.addf %146, %145 : vector<64x128xf32>
    %148 = arith.mulf %137, %147 : vector<64x128xf32>
    %cst_61 = arith.constant 0.254829586 : f32
    %149 = vector.broadcast %cst_61 : f32 to vector<64x128xf32>
    %150 = arith.addf %149, %148 : vector<64x128xf32>
    %151 = arith.mulf %137, %150 : vector<64x128xf32>
    %cst_62 = arith.constant 0.000000e+00 : f32
    %152 = vector.broadcast %cst_62 : f32 to vector<64x128xf32>
    %153 = arith.subf %152, %131 : vector<64x128xf32>
    %154 = arith.mulf %153, %131 : vector<64x128xf32>
    %155 = math.exp %154 : vector<64x128xf32>
    %156 = arith.mulf %151, %155 : vector<64x128xf32>
    %cst_63 = arith.constant 1.000000e+00 : f32
    %157 = vector.broadcast %cst_63 : f32 to vector<64x128xf32>
    %158 = arith.subf %157, %156 : vector<64x128xf32>
    %cst_64 = arith.constant 0.000000e+00 : f32
    %159 = vector.broadcast %cst_64 : f32 to vector<64x128xf32>
    %160 = arith.cmpf oge, %130, %159 : vector<64x128xf32>
    %cst_65 = arith.constant 0.000000e+00 : f32
    %161 = vector.broadcast %cst_65 : f32 to vector<64x128xf32>
    %162 = arith.subf %161, %158 : vector<64x128xf32>
    %163 = arith.select %160, %158, %162 : vector<64x128xi1>, vector<64x128xf32>
    %cst_66 = arith.constant 5.000000e-01 : f32
    %164 = vector.broadcast %cst_66 : f32 to vector<64x128xf32>
    %165 = arith.mulf %164, %128 : vector<64x128xf32>
    %cst_67 = arith.constant 1.000000e+00 : f32
    %166 = vector.broadcast %cst_67 : f32 to vector<64x128xf32>
    %167 = arith.addf %166, %163 : vector<64x128xf32>
    %168 = arith.mulf %165, %167 : vector<64x128xf32>
    %169 = arith.index_cast %121 : i32 to index
    %c0_68 = arith.constant 0 : index
    %170 = vector.load %arg12[%169, %c0_68] : memref<256x128xbf16, #tpu.memory_space<vmem>>, vector<128x128xbf16>
    %c0_69 = arith.constant 0 : index
    %c0_70 = arith.constant 0 : index
    %171 = vector.load %arg15[%c0_69, %c0_70] : memref<64x128xf32, #tpu.memory_space<vmem>>, vector<64x128xf32>
    %172 = arith.truncf %168 : vector<64x128xf32> to vector<64x128xbf16>
    %cst_71 = arith.constant dense<0.000000e+00> : vector<64x128xf32>
    %173 = tpu.matmul %172, %170, %cst_71 {dimension_numbers = #tpu.dot_dimension_numbers<[1], [0], [0], [1], [0, 0, 1, 1], [], []>} : vector<64x128xbf16>, vector<128x128xbf16>, vector<64x128xf32> -> vector<64x128xf32>
    %174 = arith.addf %171, %173 : vector<64x128xf32>
    %c0_72 = arith.constant 0 : index
    %c0_73 = arith.constant 0 : index
    %175 = vector.load %arg15[%c0_72, %c0_73] : memref<64x128xf32, #tpu.memory_space<vmem>>, vector<64x128xf32>
    tpu.vector_store %arg15[%c0_72, %c0_73], %174 {strides = array<i32>} : memref<64x128xf32, #tpu.memory_space<vmem>>, vector<64x128xf32>,
    %c1_i32 = arith.constant 1 : i32
    %c128_i32_74 = arith.constant 128 : i32
    %176 = arith.muli %c1_i32, %c128_i32_74 : i32
    %177 = tpu.assume_multiple %176, 128 : i32
    %c0_75 = arith.constant 0 : index
    %178 = arith.index_cast %177 : i32 to index
    %179 = vector.load %arg10[%c0_75, %178] : memref<128x256xbf16, #tpu.memory_space<vmem>>, vector<128x128xbf16>
    %c0_76 = arith.constant 0 : index
    %180 = arith.index_cast %177 : i32 to index
    %181 = vector.load %arg11[%c0_76, %180] : memref<1x256xf32, #tpu.memory_space<vmem>>, vector<1x128xf32>
    %cst_77 = arith.constant dense<0.000000e+00> : vector<64x128xf32>
    %182 = tpu.matmul %115, %179, %cst_77 {dimension_numbers = #tpu.dot_dimension_numbers<[1], [0], [0], [1], [0, 0, 1, 1], [], []>} : vector<64x128xbf16>, vector<128x128xbf16>, vector<64x128xf32> -> vector<64x128xf32>
    %183 = vector.broadcast %181 : vector<1x128xf32> to vector<64x128xf32>
    %184 = arith.addf %182, %183 : vector<64x128xf32>
    %cst_78 = arith.constant 0.707106769 : f32
    %185 = vector.broadcast %cst_78 : f32 to vector<64x128xf32>
    %186 = arith.mulf %184, %185 : vector<64x128xf32>
    %187 = math.absf %186 : vector<64x128xf32>
    %cst_79 = arith.constant 0.327591091 : f32
    %188 = vector.broadcast %cst_79 : f32 to vector<64x128xf32>
    %189 = arith.mulf %188, %187 : vector<64x128xf32>
    %cst_80 = arith.constant 1.000000e+00 : f32
    %190 = vector.broadcast %cst_80 : f32 to vector<64x128xf32>
    %191 = arith.addf %190, %189 : vector<64x128xf32>
    %cst_81 = arith.constant 1.000000e+00 : f32
    %192 = vector.broadcast %cst_81 : f32 to vector<64x128xf32>
    %193 = arith.divf %192, %191 : vector<64x128xf32>
    %cst_82 = arith.constant 1.06140542 : f32
    %194 = vector.broadcast %cst_82 : f32 to vector<64x128xf32>
    %195 = arith.mulf %193, %194 : vector<64x128xf32>
    %cst_83 = arith.constant -1.45315206 : f32
    %196 = vector.broadcast %cst_83 : f32 to vector<64x128xf32>
    %197 = arith.addf %196, %195 : vector<64x128xf32>
    %198 = arith.mulf %193, %197 : vector<64x128xf32>
    %cst_84 = arith.constant 1.42141378 : f32
    %199 = vector.broadcast %cst_84 : f32 to vector<64x128xf32>
    %200 = arith.addf %199, %198 : vector<64x128xf32>
    %201 = arith.mulf %193, %200 : vector<64x128xf32>
    %cst_85 = arith.constant -0.284496725 : f32
    %202 = vector.broadcast %cst_85 : f32 to vector<64x128xf32>
    %203 = arith.addf %202, %201 : vector<64x128xf32>
    %204 = arith.mulf %193, %203 : vector<64x128xf32>
    %cst_86 = arith.constant 0.254829586 : f32
    %205 = vector.broadcast %cst_86 : f32 to vector<64x128xf32>
    %206 = arith.addf %205, %204 : vector<64x128xf32>
    %207 = arith.mulf %193, %206 : vector<64x128xf32>
    %cst_87 = arith.constant 0.000000e+00 : f32
    %208 = vector.broadcast %cst_87 : f32 to vector<64x128xf32>
    %209 = arith.subf %208, %187 : vector<64x128xf32>
    %210 = arith.mulf %209, %187 : vector<64x128xf32>
    %211 = math.exp %210 : vector<64x128xf32>
    %212 = arith.mulf %207, %211 : vector<64x128xf32>
    %cst_88 = arith.constant 1.000000e+00 : f32
    %213 = vector.broadcast %cst_88 : f32 to vector<64x128xf32>
    %214 = arith.subf %213, %212 : vector<64x128xf32>
    %cst_89 = arith.constant 0.000000e+00 : f32
    %215 = vector.broadcast %cst_89 : f32 to vector<64x128xf32>
    %216 = arith.cmpf oge, %186, %215 : vector<64x128xf32>
    %cst_90 = arith.constant 0.000000e+00 : f32
    %217 = vector.broadcast %cst_90 : f32 to vector<64x128xf32>
    %218 = arith.subf %217, %214 : vector<64x128xf32>
    %219 = arith.select %216, %214, %218 : vector<64x128xi1>, vector<64x128xf32>
    %cst_91 = arith.constant 5.000000e-01 : f32
    %220 = vector.broadcast %cst_91 : f32 to vector<64x128xf32>
    %221 = arith.mulf %220, %184 : vector<64x128xf32>
    %cst_92 = arith.constant 1.000000e+00 : f32
    %222 = vector.broadcast %cst_92 : f32 to vector<64x128xf32>
    %223 = arith.addf %222, %219 : vector<64x128xf32>
    %224 = arith.mulf %221, %223 : vector<64x128xf32>
    %225 = arith.index_cast %177 : i32 to index
    %c0_93 = arith.constant 0 : index
    %226 = vector.load %arg12[%225, %c0_93] : memref<256x128xbf16, #tpu.memory_space<vmem>>, vector<128x128xbf16>
    %c0_94 = arith.constant 0 : index
    %c0_95 = arith.constant 0 : index
    %227 = vector.load %arg15[%c0_94, %c0_95] : memref<64x128xf32, #tpu.memory_space<vmem>>, vector<64x128xf32>
    %228 = arith.truncf %224 : vector<64x128xf32> to vector<64x128xbf16>
    %cst_96 = arith.constant dense<0.000000e+00> : vector<64x128xf32>
    %229 = tpu.matmul %228, %226, %cst_96 {dimension_numbers = #tpu.dot_dimension_numbers<[1], [0], [0], [1], [0, 0, 1, 1], [], []>} : vector<64x128xbf16>, vector<128x128xbf16>, vector<64x128xf32> -> vector<64x128xf32>
    %230 = arith.addf %227, %229 : vector<64x128xf32>
    %c0_97 = arith.constant 0 : index
    %c0_98 = arith.constant 0 : index
    %231 = vector.load %arg15[%c0_97, %c0_98] : memref<64x128xf32, #tpu.memory_space<vmem>>, vector<64x128xf32>
    tpu.vector_store %arg15[%c0_97, %c0_98], %230 {strides = array<i32>} : memref<64x128xf32, #tpu.memory_space<vmem>>, vector<64x128xf32>,
    %c2_i32 = arith.constant 2 : i32
    %c0_99 = arith.constant 0 : index
    %c0_100 = arith.constant 0 : index
    %232 = vector.load %arg15[%c0_99, %c0_100] : memref<64x128xf32, #tpu.memory_space<vmem>>, vector<64x128xf32>
    %233 = vector.shape_cast %232 : vector<64x128xf32> to vector<4x16x128xf32>
    %c0_101 = arith.constant 0 : index
    %c0_102 = arith.constant 0 : index
    %c0_103 = arith.constant 0 : index
    %234 = vector.load %arg14[%c0_101, %c0_102, %c0_103] : memref<4x16x128xf32, #tpu.memory_space<vmem>>, vector<4x16x128xf32>
    tpu.vector_store %arg14[%c0_101, %c0_102, %c0_103], %233 {strides = array<i32>} : memref<4x16x128xf32, #tpu.memory_space<vmem>>, vector<4x16x128xf32>,
    return
  }
  func.func @transform_0(%arg0: i32) -> (i32, i32, i32) {
    %c0_i32 = arith.constant 0 : i32
    %c0_i32_0 = arith.constant 0 : i32
    %c0_i32_1 = arith.constant 0 : i32
    return %arg0, %c0_i32, %c0_i32_0 : i32, i32, i32
  }
  func.func @transform_1(%arg0: i32) -> (i32, i32) {
    %c0_i32 = arith.constant 0 : i32
    %c0_i32_0 = arith.constant 0 : i32
    %c0_i32_1 = arith.constant 0 : i32
    return %c0_i32, %c0_i32_0 : i32, i32
  }
  func.func @transform_2(%arg0: i32) -> (i32, i32) {
    %c0_i32 = arith.constant 0 : i32
    %c0_i32_0 = arith.constant 0 : i32
    %c0_i32_1 = arith.constant 0 : i32
    return %c0_i32, %c0_i32_0 : i32, i32
  }
  func.func @transform_3(%arg0: i32) -> (i32, i32) {
    %c0_i32 = arith.constant 0 : i32
    %c0_i32_0 = arith.constant 0 : i32
    %c0_i32_1 = arith.constant 0 : i32
    return %c0_i32, %c0_i32_0 : i32, i32
  }
  func.func @transform_4(%arg0: i32) -> (i32, i32) {
    %c0_i32 = arith.constant 0 : i32
    %c0_i32_0 = arith.constant 0 : i32
    %c0_i32_1 = arith.constant 0 : i32
    return %c0_i32, %c0_i32_0 : i32, i32
  }
  func.func @transform_5(%arg0: i32) -> (i32, i32) {
    %c0_i32 = arith.constant 0 : i32
    %c0_i32_0 = arith.constant 0 : i32
    %c0_i32_1 = arith.constant 0 : i32
    return %c0_i32, %c0_i32_0 : i32, i32
  }
  func.func @transform_6(%arg0: i32) -> (i32, i32) {
    %c0_i32 = arith.constant 0 : i32
    %c0_i32_0 = arith.constant 0 : i32
    %c0_i32_1 = arith.constant 0 : i32
    return %c0_i32, %c0_i32_0 : i32, i32
  }
  func.func @transform_7(%arg0: i32) -> (i32, i32) {
    %c0_i32 = arith.constant 0 : i32
    %c0_i32_0 = arith.constant 0 : i32
    %c0_i32_1 = arith.constant 0 : i32
    return %c0_i32, %c0_i32_0 : i32, i32
  }
  func.func @transform_8(%arg0: i32) -> (i32, i32) {
    %c0_i32 = arith.constant 0 : i32
    %c0_i32_0 = arith.constant 0 : i32
    %c0_i32_1 = arith.constant 0 : i32
    return %c0_i32, %c0_i32_0 : i32, i32
  }
  func.func @transform_9(%arg0: i32) -> (i32, i32) {
    %c0_i32 = arith.constant 0 : i32
    %c0_i32_0 = arith.constant 0 : i32
    %c0_i32_1 = arith.constant 0 : i32
    return %c0_i32, %c0_i32_0 : i32, i32
  }
  func.func @transform_10(%arg0: i32) -> (i32, i32) {
    %c0_i32 = arith.constant 0 : i32
    %c0_i32_0 = arith.constant 0 : i32
    %c0_i32_1 = arith.constant 0 : i32
    return %c0_i32, %c0_i32_0 : i32, i32
  }
  func.func @transform_11(%arg0: i32) -> (i32, i32) {
    %c0_i32 = arith.constant 0 : i32
    %c0_i32_0 = arith.constant 0 : i32
    %c0_i32_1 = arith.constant 0 : i32
    return %c0_i32, %c0_i32_0 : i32, i32
  }
  func.func @transform_12(%arg0: i32) -> (i32, i32) {
    %c0_i32 = arith.constant 0 : i32
    %c0_i32_0 = arith.constant 0 : i32
    %c0_i32_1 = arith.constant 0 : i32
    return %c0_i32, %c0_i32_0 : i32, i32
  }
  func.func @transform_13(%arg0: i32) -> (i32, i32, i32) {
    %c0_i32 = arith.constant 0 : i32
    %c0_i32_0 = arith.constant 0 : i32
    %c0_i32_1 = arith.constant 0 : i32
    return %arg0, %c0_i32, %c0_i32_0 : i32, i32, i32
  }
}

</mosaic_0001>

<llo_original>
// kernel: tpu_custom_call.1
$region0: #{tpu_custom_call.1}
  #allocation0 [shape = 'u32[]', space=smem, size = 0x4, offset = 0x4, fixed_abs, tag = 'smem constant byte address 0x4 - core index']
  #allocation1 [shape = 'u32[144,128]{1,0:T(1,128)}', space=vmem, size = 0x12000, scoped, tag = 'internal scratch']
  #allocation2 [shape = 'f32[64,128]{1,0:T(8,128)}', space=vmem, size = 0x8000, scoped, tag = 'scratch operand']
  %s0 = inlined_call_operand.hbm [shape: f32[8,16,128], index: 0, kind: input, shape index: {}]
  %s1 = inlined_call_operand.hbm [shape: f32[1,128], index: 1, kind: input, shape index: {}]
  %s2 = inlined_call_operand.hbm [shape: f32[1,128], index: 2, kind: input, shape index: {}]
  %s3 = inlined_call_operand.hbm [shape: bf16[64,16], index: 3, kind: input, shape index: {}]
  %s4 = inlined_call_operand.hbm [shape: f32[64,1], index: 4, kind: input, shape index: {}]
  %s5 = inlined_call_operand.hbm [shape: bf16[16,64], index: 5, kind: input, shape index: {}]
  %s6 = inlined_call_operand.hbm [shape: f32[16,1], index: 6, kind: input, shape index: {}]
  %s7 = inlined_call_operand.hbm [shape: f32[1,128], index: 7, kind: input, shape index: {}]
  %s8 = inlined_call_operand.hbm [shape: f32[1,128], index: 8, kind: input, shape index: {}]
  %s9 = inlined_call_operand.hbm [shape: bf16[128,256], index: 9, kind: input, shape index: {}]
  %s10 = inlined_call_operand.hbm [shape: f32[1,256], index: 10, kind: input, shape index: {}]
  %s11 = inlined_call_operand.hbm [shape: bf16[256,128], index: 11, kind: input, shape index: {}]
  %s12 = inlined_call_operand.hbm [shape: f32[1,128], index: 12, kind: input, shape index: {}]
  %s13 = inlined_call_operand.hbm [shape: f32[8,16,128], index: 13, kind: output, shape index: {}]
  %s14 = sld [smem:[#allocation0]]
  $region137: #{tpu_custom_call.1} parent=0
    _
  %s16 = ssub.s32 1, %s14
  %s17 = scalar_select 0, %s16, %s14
  $region1: #{tpu_custom_call.1} parent=0
    #allocation3 [shape = 'u8[65536]{0}', space=vmem, size = 0x10000, scoped, tag = 'input window, operand 0']
    #allocation4 [shape = 's32[2]{0}', space=sflag, size = 0x8, scoped, tag = 'scoped memory for tpu_custom_call.1']
    #allocation5 [shape = 's32[2]{0}', space=sflag, size = 0x8, scoped, tag = 'scoped memory for tpu_custom_call.1']
    #allocation6 [shape = 'u8[512]{0}', space=vmem, size = 0x400, scoped, tag = 'input window, operand 1, single buffered']
    #allocation7 [shape = 's32[1]{0}', space=sflag, size = 0x4, scoped, tag = 'scoped memory for tpu_custom_call.1']
    #allocation8 [shape = 'u8[512]{0}', space=vmem, size = 0x400, scoped, tag = 'input window, operand 2, single buffered']
    #allocation9 [shape = 'u8[16384]{0}', space=vmem, size = 0x4000, scoped, tag = 'input window, operand 3, single buffered']
    #allocation10 [shape = 's32[1]{0}', space=sflag, size = 0x4, scoped, tag = 'scoped memory for tpu_custom_call.1']
    #allocation11 [shape = 'u8[32768]{0}', space=vmem, size = 0x8000, scoped, tag = 'input window, operand 4, single buffered']
    #allocation12 [shape = 'u8[4096]{0}', space=vmem, size = 0x1000, scoped, tag = 'input window, operand 5, single buffered']
    #allocation13 [shape = 's32[1]{0}', space=sflag, size = 0x4, scoped, tag = 'scoped memory for tpu_custom_call.1']
    #allocation14 [shape = 'u8[8192]{0}', space=vmem, size = 0x2000, scoped, tag = 'input window, operand 6, single buffered']
    #allocation15 [shape = 'u8[512]{0}', space=vmem, size = 0x400, scoped, tag = 'input window, operand 7, single buffered']
    #allocation16 [shape = 's32[1]{0}', space=sflag, size = 0x4, scoped, tag = 'scoped memory for tpu_custom_call.1']
    #allocation17 [shape = 'u8[512]{0}', space=vmem, size = 0x400, scoped, tag = 'input window, operand 8, single buffered']
    #allocation18 [shape = 'u8[65536]{0}', space=vmem, size = 0x10000, scoped, tag = 'input window, operand 9, single buffered']
    #allocation19 [shape = 's32[1]{0}', space=sflag, size = 0x4, scoped, tag = 'scoped memory for tpu_custom_call.1']
    #allocation20 [shape = 'u8[1024]{0}', space=vmem, size = 0x400, scoped, tag = 'input window, operand 10, single buffered']
    #allocation21 [shape = 'u8[65536]{0}', space=vmem, size = 0x10000, scoped, tag = 'input window, operand 11, single buffered']
    #allocation22 [shape = 's32[1]{0}', space=sflag, size = 0x4, scoped, tag = 'scoped memory for tpu_custom_call.1']
    #allocation23 [shape = 'u8[512]{0}', space=vmem, size = 0x400, scoped, tag = 'input window, operand 12, single buffered']
    #allocation24 [shape = 'u8[65536]{0}', space=vmem, size = 0x10000, scoped, tag = 'output window, operand 0']
    %18 = vsyncpa [#allocation4], 0
    %s19 = scalar_lea.sflag [#allocation4], 1
    %20 = vsyncpa %s19, 0
    %21 = vsyncpa [#allocation7], 0
    %22 = vsyncpa [#allocation10], 0
    %23 = vsyncpa [#allocation13], 0
    %24 = vsyncpa [#allocation16], 0
    %25 = vsyncpa [#allocation19], 0
    %26 = vsyncpa [#allocation22], 0
    %27 = vsyncpa [#allocation5], 0
    %s28 = scalar_lea.sflag [#allocation5], 1
    %29 = vsyncpa %s28, 0
    loop: start=0, step=1, limit=4
    $region2: #{tpu_custom_call.1} parent=1 // loop_pre_header
      _
    $region3: #{tpu_custom_call.1} parent=1 // loop_header
      %s31 = sphi 0, %s35
      %p32 = scmp.ge.s32.totalorder %s31, 4
      %s41 = sphi 0, %s43
      %s44 = sphi 0, %s41
      %s45 = sphi 0, %s44
      %s61 = sphi 0, %s45
      %s65 = sphi 0, %s65
      %s67 = sphi 0, %s65
      %s68 = sphi 0, %s67
      %s82 = sphi 0, %s68
      %s86 = sphi 0, %s86
      %s88 = sphi 0, %s86
      %s89 = sphi 0, %s88
      %s103 = sphi 0, %s89
      %s107 = sphi 0, %s107
      %s109 = sphi 0, %s107
      %s110 = sphi 0, %s109
      %s124 = sphi 0, %s110
      %s128 = sphi 0, %s128
      %s130 = sphi 0, %s128
      %s131 = sphi 0, %s130
      %s145 = sphi 0, %s131
      %s149 = sphi 0, %s149
      %s151 = sphi 0, %s149
      %s152 = sphi 0, %s151
      %s166 = sphi 0, %s152
      %s170 = sphi 0, %s170
      %s172 = sphi 0, %s170
      %s173 = sphi 0, %s172
      %s187 = sphi 0, %s173
      %s191 = sphi 0, %s191
      %s193 = sphi 0, %s191
      %s194 = sphi 0, %s193
      %s208 = sphi 0, %s194
      %s212 = sphi 0, %s212
      %s214 = sphi 0, %s212
      %s215 = sphi 0, %s214
      %s229 = sphi 0, %s215
      %s233 = sphi 0, %s233
      %s235 = sphi 0, %s233
      %s236 = sphi 0, %s235
      %s250 = sphi 0, %s236
      %s254 = sphi 0, %s254
      %s256 = sphi 0, %s254
      %s257 = sphi 0, %s256
      %s271 = sphi 0, %s257
      %s275 = sphi 0, %s275
      %s277 = sphi 0, %s275
      %s278 = sphi 0, %s277
      %s292 = sphi 0, %s278
      %s296 = sphi 0, %s296
      %s298 = sphi 0, %s296
      %s299 = sphi 0, %s298
      %s313 = sphi 0, %s299
      %s319 = sphi 0, %s321
      %s322 = sphi 0, %s319
      %s323 = sphi 0, %s322
      %s339 = sphi 0, %s323
    $region4: #{tpu_custom_call.1} parent=1 // loop_header_branch
      %34 = sbr.rel (%p32) target = $region8
    $region5: #{tpu_custom_call.1} parent=1 // loop_body
      %s36 = ssub.s32 %s31, 1
      %s37 = ssub.s32 %s31, 2
      %s38 = sadd.s32 %s31, 1
      %s39 = ssub.s32 %s31, %s38
      %p40 = scmp.eq.s32.totalorder %s39, 0
      %s42 = sadd.s32 %s41, 1
      %s43 = scalar_select %p40, %s41, %s42
      %p46 = pneg %p40
      %p47 = scmp.eq.s32.totalorder %s31, 1
      %p48 = por %p46, %p47
      %p49 = scmp.ne.s32.totalorder %s41, %s44
      %p50 = scmp.eq.s32.totalorder %s31, 0
      %p51 = por %p49, %p50
      %p52 = scmp.ne.s32.totalorder %s41, %s44
      %p53 = scmp.eq.s32.totalorder %s36, 1
      %p54 = por %p52, %p53
      %p55 = scmp.ne.s32.totalorder %s44, %s45
      %p56 = scmp.eq.s32.totalorder %s36, 0
      %p57 = por %p55, %p56
      %p58 = scmp.ne.s32.totalorder %s44, %s45
      %p59 = scmp.eq.s32.totalorder %s37, 1
      %p60 = por %p58, %p59
      %p62 = scmp.ne.s32.totalorder %s45, %s61
      %p63 = scmp.eq.s32.totalorder %s37, 0
      %p64 = por %p62, %p63
      %s66 = sadd.s32 %s65, 1
      %p69 = scmp.eq.s32.totalorder %s31, 1
      %p70 = scmp.ne.s32.totalorder %s65, %s67
      %p71 = scmp.eq.s32.totalorder %s31, 0
      %p72 = por %p70, %p71
      %p73 = scmp.ne.s32.totalorder %s65, %s67
      %p74 = scmp.eq.s32.totalorder %s36, 1
      %p75 = por %p73, %p74
      %p76 = scmp.ne.s32.totalorder %s67, %s68
      %p77 = scmp.eq.s32.totalorder %s36, 0
      %p78 = por %p76, %p77
      %p79 = scmp.ne.s32.totalorder %s67, %s68
      %p80 = scmp.eq.s32.totalorder %s37, 1
      %p81 = por %p79, %p80
      %p83 = scmp.ne.s32.totalorder %s68, %s82
      %p84 = scmp.eq.s32.totalorder %s37, 0
      %p85 = por %p83, %p84
      %s87 = sadd.s32 %s86, 1
      %p90 = scmp.eq.s32.totalorder %s31, 1
      %p91 = scmp.ne.s32.totalorder %s86, %s88
      %p92 = scmp.eq.s32.totalorder %s31, 0
      %p93 = por %p91, %p92
      %p94 = scmp.ne.s32.totalorder %s86, %s88
      %p95 = scmp.eq.s32.totalorder %s36, 1
      %p96 = por %p94, %p95
      %p97 = scmp.ne.s32.totalorder %s88, %s89
      %p98 = scmp.eq.s32.totalorder %s36, 0
      %p99 = por %p97, %p98
      %p100 = scmp.ne.s32.totalorder %s88, %s89
      %p101 = scmp.eq.s32.totalorder %s37, 1
      %p102 = por %p100, %p101
      %p104 = scmp.ne.s32.totalorder %s89, %s103
      %p105 = scmp.eq.s32.totalorder %s37, 0
      %p106 = por %p104, %p105
      %s108 = sadd.s32 %s107, 1
      %p111 = scmp.eq.s32.totalorder %s31, 1
      %p112 = scmp.ne.s32.totalorder %s107, %s109
      %p113 = scmp.eq.s32.totalorder %s31, 0
      %p114 = por %p112, %p113
      %p115 = scmp.ne.s32.totalorder %s107, %s109
      %p116 = scmp.eq.s32.totalorder %s36, 1
      %p117 = por %p115, %p116
      %p118 = scmp.ne.s32.totalorder %s109, %s110
      %p119 = scmp.eq.s32.totalorder %s36, 0
      %p120 = por %p118, %p119
      %p121 = scmp.ne.s32.totalorder %s109, %s110
      %p122 = scmp.eq.s32.totalorder %s37, 1
      %p123 = por %p121, %p122
      %p125 = scmp.ne.s32.totalorder %s110, %s124
      %p126 = scmp.eq.s32.totalorder %s37, 0
      %p127 = por %p125, %p126
      %s129 = sadd.s32 %s128, 1
      %p132 = scmp.eq.s32.totalorder %s31, 1
      %p133 = scmp.ne.s32.totalorder %s128, %s130
      %p134 = scmp.eq.s32.totalorder %s31, 0
      %p135 = por %p133, %p134
      %p136 = scmp.ne.s32.totalorder %s128, %s130
      %p137 = scmp.eq.s32.totalorder %s36, 1
      %p138 = por %p136, %p137
      %p139 = scmp.ne.s32.totalorder %s130, %s131
      %p140 = scmp.eq.s32.totalorder %s36, 0
      %p141 = por %p139, %p140
      %p142 = scmp.ne.s32.totalorder %s130, %s131
      %p143 = scmp.eq.s32.totalorder %s37, 1
      %p144 = por %p142, %p143
      %p146 = scmp.ne.s32.totalorder %s131, %s145
      %p147 = scmp.eq.s32.totalorder %s37, 0
      %p148 = por %p146, %p147
      %s150 = sadd.s32 %s149, 1
      %p153 = scmp.eq.s32.totalorder %s31, 1
      %p154 = scmp.ne.s32.totalorder %s149, %s151
      %p155 = scmp.eq.s32.totalorder %s31, 0
      %p156 = por %p154, %p155
      %p157 = scmp.ne.s32.totalorder %s149, %s151
      %p158 = scmp.eq.s32.totalorder %s36, 1
      %p159 = por %p157, %p158
      %p160 = scmp.ne.s32.totalorder %s151, %s152
      %p161 = scmp.eq.s32.totalorder %s36, 0
      %p162 = por %p160, %p161
      %p163 = scmp.ne.s32.totalorder %s151, %s152
      %p164 = scmp.eq.s32.totalorder %s37, 1
      %p165 = por %p163, %p164
      %p167 = scmp.ne.s32.totalorder %s152, %s166
      %p168 = scmp.eq.s32.totalorder %s37, 0
      %p169 = por %p167, %p168
      %s171 = sadd.s32 %s170, 1
      %p174 = scmp.eq.s32.totalorder %s31, 1
      %p175 = scmp.ne.s32.totalorder %s170, %s172
      %p176 = scmp.eq.s32.totalorder %s31, 0
      %p177 = por %p175, %p176
      %p178 = scmp.ne.s32.totalorder %s170, %s172
      %p179 = scmp.eq.s32.totalorder %s36, 1
      %p180 = por %p178, %p179
      %p181 = scmp.ne.s32.totalorder %s172, %s173
      %p182 = scmp.eq.s32.totalorder %s36, 0
      %p183 = por %p181, %p182
      %p184 = scmp.ne.s32.totalorder %s172, %s173
      %p185 = scmp.eq.s32.totalorder %s37, 1
      %p186 = por %p184, %p185
      %p188 = scmp.ne.s32.totalorder %s173, %s187
      %p189 = scmp.eq.s32.totalorder %s37, 0
      %p190 = por %p188, %p189
      %s192 = sadd.s32 %s191, 1
      %p195 = scmp.eq.s32.totalorder %s31, 1
      %p196 = scmp.ne.s32.totalorder %s191, %s193
      %p197 = scmp.eq.s32.totalorder %s31, 0
      %p198 = por %p196, %p197
      %p199 = scmp.ne.s32.totalorder %s191, %s193
      %p200 = scmp.eq.s32.totalorder %s36, 1
      %p201 = por %p199, %p200
      %p202 = scmp.ne.s32.totalorder %s193, %s194
      %p203 = scmp.eq.s32.totalorder %s36, 0
      %p204 = por %p202, %p203
      %p205 = scmp.ne.s32.totalorder %s193, %s194
      %p206 = scmp.eq.s32.totalorder %s37, 1
      %p207 = por %p205, %p206
      %p209 = scmp.ne.s32.totalorder %s194, %s208
      %p210 = scmp.eq.s32.totalorder %s37, 0
      %p211 = por %p209, %p210
      %s213 = sadd.s32 %s212, 1
      %p216 = scmp.eq.s32.totalorder %s31, 1
      %p217 = scmp.ne.s32.totalorder %s212, %s214
      %p218 = scmp.eq.s32.totalorder %s31, 0
      %p219 = por %p217, %p218
      %p220 = scmp.ne.s32.totalorder %s212, %s214
      %p221 = scmp.eq.s32.totalorder %s36, 1
      %p222 = por %p220, %p221
      %p223 = scmp.ne.s32.totalorder %s214, %s215
      %p224 = scmp.eq.s32.totalorder %s36, 0
      %p225 = por %p223, %p224
      %p226 = scmp.ne.s32.totalorder %s214, %s215
      %p227 = scmp.eq.s32.totalorder %s37, 1
      %p228 = por %p226, %p227
      %p230 = scmp.ne.s32.totalorder %s215, %s229
      %p231 = scmp.eq.s32.totalorder %s37, 0
      %p232 = por %p230, %p231
      %s234 = sadd.s32 %s233, 1
      %p237 = scmp.eq.s32.totalorder %s31, 1
      %p238 = scmp.ne.s32.totalorder %s233, %s235
      %p239 = scmp.eq.s32.totalorder %s31, 0
      %p240 = por %p238, %p239
      %p241 = scmp.ne.s32.totalorder %s233, %s235
      %p242 = scmp.eq.s32.totalorder %s36, 1
      %p243 = por %p241, %p242
      %p244 = scmp.ne.s32.totalorder %s235, %s236
      %p245 = scmp.eq.s32.totalorder %s36, 0
      %p246 = por %p244, %p245
      %p247 = scmp.ne.s32.totalorder %s235, %s236
      %p248 = scmp.eq.s32.totalorder %s37, 1
      %p249 = por %p247, %p248
      %p251 = scmp.ne.s32.totalorder %s236, %s250
      %p252 = scmp.eq.s32.totalorder %s37, 0
      %p253 = por %p251, %p252
      %s255 = sadd.s32 %s254, 1
      %p258 = scmp.eq.s32.totalorder %s31, 1
      %p259 = scmp.ne.s32.totalorder %s254, %s256
      %p260 = scmp.eq.s32.totalorder %s31, 0
      %p261 = por %p259, %p260
      %p262 = scmp.ne.s32.totalorder %s254, %s256
      %p263 = scmp.eq.s32.totalorder %s36, 1
      %p264 = por %p262, %p263
      %p265 = scmp.ne.s32.totalorder %s256, %s257
      %p266 = scmp.eq.s32.totalorder %s36, 0
      %p267 = por %p265, %p266
      %p268 = scmp.ne.s32.totalorder %s256, %s257
      %p269 = scmp.eq.s32.totalorder %s37, 1
      %p270 = por %p268, %p269
      %p272 = scmp.ne.s32.totalorder %s257, %s271
      %p273 = scmp.eq.s32.totalorder %s37, 0
      %p274 = por %p272, %p273
      %s276 = sadd.s32 %s275, 1
      %p279 = scmp.eq.s32.totalorder %s31, 1
      %p280 = scmp.ne.s32.totalorder %s275, %s277
      %p281 = scmp.eq.s32.totalorder %s31, 0
      %p282 = por %p280, %p281
      %p283 = scmp.ne.s32.totalorder %s275, %s277
      %p284 = scmp.eq.s32.totalorder %s36, 1
      %p285 = por %p283, %p284
      %p286 = scmp.ne.s32.totalorder %s277, %s278
      %p287 = scmp.eq.s32.totalorder %s36, 0
      %p288 = por %p286, %p287
      %p289 = scmp.ne.s32.totalorder %s277, %s278
      %p290 = scmp.eq.s32.totalorder %s37, 1
      %p291 = por %p289, %p290
      %p293 = scmp.ne.s32.totalorder %s278, %s292
      %p294 = scmp.eq.s32.totalorder %s37, 0
      %p295 = por %p293, %p294
      %s297 = sadd.s32 %s296, 1
      %p300 = scmp.eq.s32.totalorder %s31, 1
      %p301 = scmp.ne.s32.totalorder %s296, %s298
      %p302 = scmp.eq.s32.totalorder %s31, 0
      %p303 = por %p301, %p302
      %p304 = scmp.ne.s32.totalorder %s296, %s298
      %p305 = scmp.eq.s32.totalorder %s36, 1
      %p306 = por %p304, %p305
      %p307 = scmp.ne.s32.totalorder %s298, %s299
      %p308 = scmp.eq.s32.totalorder %s36, 0
      %p309 = por %p307, %p308
      %p310 = scmp.ne.s32.totalorder %s298, %s299
      %p311 = scmp.eq.s32.totalorder %s37, 1
      %p312 = por %p310, %p311
      %p314 = scmp.ne.s32.totalorder %s299, %s313
      %p315 = scmp.eq.s32.totalorder %s37, 0
      %p316 = por %p314, %p315
      %s317 = ssub.s32 %s31, %s38
      %p318 = scmp.eq.s32.totalorder %s317, 0
      %s320 = sadd.s32 %s319, 1
      %s321 = scalar_select %p318, %s319, %s320
      %p324 = pneg %p318
      %p325 = scmp.eq.s32.totalorder %s31, 1
      %p326 = por %p324, %p325
      %p327 = scmp.ne.s32.totalorder %s319, %s322
      %p328 = scmp.eq.s32.totalorder %s31, 0
      %p329 = por %p327, %p328
      %p330 = scmp.ne.s32.totalorder %s319, %s322
      %p331 = scmp.eq.s32.totalorder %s36, 1
      %p332 = por %p330, %p331
      %p333 = scmp.ne.s32.totalorder %s322, %s323
      %p334 = scmp.eq.s32.totalorder %s36, 0
      %p335 = por %p333, %p334
      %p336 = scmp.ne.s32.totalorder %s322, %s323
      %p337 = scmp.eq.s32.totalorder %s37, 1
      %p338 = por %p336, %p337
      %p340 = scmp.ne.s32.totalorder %s323, %s339
      %p341 = scmp.eq.s32.totalorder %s37, 0
      %p342 = por %p340, %p341
      %p343 = scmp.le.s32.totalorder 1, %s31
      %p344 = scmp.lt.s32.totalorder %s31, 3
      %p345 = pnand %p343, %p344
      %p346 = pneg %p345
      // Predicated region
      $region9: #{tpu_custom_call.1} parent=5 // pred_check
        _
      $region10: #{tpu_custom_call.1} parent=5 // pred_check_branch
        %348 = sbr.rel (%p345) target = $region12
      $region11: #{tpu_custom_call.1} parent=5 // pred_region
        %s349 = ssub.s32 %s31, 1
        // Predicated region
        $region13: #{tpu_custom_call.1} parent=11 // pred_check
          %p350 = pneg %p78
        $region14: #{tpu_custom_call.1} parent=11 // pred_check_branch
          %352 = sbr.rel (%p350) target = $region16
        $region15: #{tpu_custom_call.1} parent=11 // pred_region
          %s354 = ssub.s32 16, 16
          %355 = vsyncadd [#allocation7], %s354
          %s357 = sshll.u32 [#allocation6], 4
          %s358 = int_to_ptr.vmem [resolvable:$true] %s357
          %360 = dma.hbm_to_vmem [thread:$0]  %s1, 16, %s358, [#allocation7]
        $region16: #{tpu_custom_call.1} parent=11 // pred_fallthru
          _
        // Predicated region
        $region17: #{tpu_custom_call.1} parent=11 // pred_check
          %p361 = pneg %p99
        $region18: #{tpu_custom_call.1} parent=11 // pred_check_branch
          %363 = sbr.rel (%p361) target = $region20
        $region19: #{tpu_custom_call.1} parent=11 // pred_region
          %s365 = ssub.s32 16, 16
          %366 = vsyncadd [#allocation7], %s365
          %s368 = sshll.u32 [#allocation8], 4
          %s369 = int_to_ptr.vmem [resolvable:$true] %s368
          %371 = dma.hbm_to_vmem [thread:$0]  %s2, 16, %s369, [#allocation7]
        $region20: #{tpu_custom_call.1} parent=11 // pred_fallthru
          _
        // Predicated region
        $region21: #{tpu_custom_call.1} parent=11 // pred_check
          %p372 = pneg %p120
        $region22: #{tpu_custom_call.1} parent=11 // pred_check_branch
          %374 = sbr.rel (%p372) target = $region24
        $region23: #{tpu_custom_call.1} parent=11 // pred_region
          %s376 = ssub.s32 512, 512
          %377 = vsyncadd [#allocation10], %s376
          %s378 = sshll.u32 [#allocation9], 4
          %s379 = int_to_ptr.vmem [resolvable:$true] %s378
          %384 = dma.hbm_to_vmem [thread:$0]  %s3, 512, %s379, [#allocation10], 64, 64, 4
        $region24: #{tpu_custom_call.1} parent=11 // pred_fallthru
          _
        // Predicated region
        $region25: #{tpu_custom_call.1} parent=11 // pred_check
          %p385 = pneg %p141
        $region26: #{tpu_custom_call.1} parent=11 // pred_check_branch
          %387 = sbr.rel (%p385) target = $region28
        $region27: #{tpu_custom_call.1} parent=11 // pred_region
          %s389 = ssub.s32 1024, 1024
          %390 = vsyncadd [#allocation10], %s389
          %s391 = sshll.u32 [#allocation11], 4
          %s392 = int_to_ptr.vmem [resolvable:$true] %s391
          %397 = dma.hbm_to_vmem [thread:$0]  %s4, 1024, %s392, [#allocation10], 128, 128, 8
        $region28: #{tpu_custom_call.1} parent=11 // pred_fallthru
          _
        // Predicated region
        $region29: #{tpu_custom_call.1} parent=11 // pred_check
          %p398 = pneg %p162
        $region30: #{tpu_custom_call.1} parent=11 // pred_check_branch
          %400 = sbr.rel (%p398) target = $region32
        $region31: #{tpu_custom_call.1} parent=11 // pred_region
          %s402 = ssub.s32 128, 128
          %403 = vsyncadd [#allocation13], %s402
          %s404 = sshll.u32 [#allocation12], 4
          %s405 = int_to_ptr.vmem [resolvable:$true] %s404
          %410 = dma.hbm_to_vmem [thread:$0]  %s5, 128, %s405, [#allocation13], 64, 64, 4
        $region32: #{tpu_custom_call.1} parent=11 // pred_fallthru
          _
        // Predicated region
        $region33: #{tpu_custom_call.1} parent=11 // pred_check
          %p411 = pneg %p183
        $region34: #{tpu_custom_call.1} parent=11 // pred_check_branch
          %413 = sbr.rel (%p411) target = $region36
        $region35: #{tpu_custom_call.1} parent=11 // pred_region
          %s415 = ssub.s32 256, 256
          %416 = vsyncadd [#allocation13], %s415
          %s417 = sshll.u32 [#allocation14], 4
          %s418 = int_to_ptr.vmem [resolvable:$true] %s417
          %423 = dma.hbm_to_vmem [thread:$0]  %s6, 256, %s418, [#allocation13], 128, 128, 8
        $region36: #{tpu_custom_call.1} parent=11 // pred_fallthru
          _
        // Predicated region
        $region37: #{tpu_custom_call.1} parent=11 // pred_check
          %p424 = pneg %p204
        $region38: #{tpu_custom_call.1} parent=11 // pred_check_branch
          %426 = sbr.rel (%p424) target = $region40
        $region39: #{tpu_custom_call.1} parent=11 // pred_region
          %s428 = ssub.s32 16, 16
          %429 = vsyncadd [#allocation16], %s428
          %s431 = sshll.u32 [#allocation15], 4
          %s432 = int_to_ptr.vmem [resolvable:$true] %s431
          %434 = dma.hbm_to_vmem [thread:$0]  %s7, 16, %s432, [#allocation16]
        $region40: #{tpu_custom_call.1} parent=11 // pred_fallthru
          _
        // Predicated region
        $region41: #{tpu_custom_call.1} parent=11 // pred_check
          %p435 = pneg %p225
        $region42: #{tpu_custom_call.1} parent=11 // pred_check_branch
          %437 = sbr.rel (%p435) target = $region44
        $region43: #{tpu_custom_call.1} parent=11 // pred_region
          %s439 = ssub.s32 16, 16
          %440 = vsyncadd [#allocation16], %s439
          %s442 = sshll.u32 [#allocation17], 4
          %s443 = int_to_ptr.vmem [resolvable:$true] %s442
          %445 = dma.hbm_to_vmem [thread:$0]  %s8, 16, %s443, [#allocation16]
        $region44: #{tpu_custom_call.1} parent=11 // pred_fallthru
          _
        // Predicated region
        $region45: #{tpu_custom_call.1} parent=11 // pred_check
          %p446 = pneg %p246
        $region46: #{tpu_custom_call.1} parent=11 // pred_check_branch
          %448 = sbr.rel (%p446) target = $region48
        $region47: #{tpu_custom_call.1} parent=11 // pred_region
          %s450 = ssub.s32 2048, 2048
          %451 = vsyncadd [#allocation19], %s450
          %s452 = sshll.u32 [#allocation18], 4
          %s453 = int_to_ptr.vmem [resolvable:$true] %s452
          %458 = dma.hbm_to_vmem [thread:$0]  %s9, 2048, %s453, [#allocation19], 128, 128, 8
        $region48: #{tpu_custom_call.1} parent=11 // pred_fallthru
          _
        // Predicated region
        $region49: #{tpu_custom_call.1} parent=11 // pred_check
          %p459 = pneg %p267
        $region50: #{tpu_custom_call.1} parent=11 // pred_check_branch
          %461 = sbr.rel (%p459) target = $region52
        $region51: #{tpu_custom_call.1} parent=11 // pred_region
          %s463 = ssub.s32 32, 32
          %464 = vsyncadd [#allocation19], %s463
          %s466 = sshll.u32 [#allocation20], 4
          %s467 = int_to_ptr.vmem [resolvable:$true] %s466
          %469 = dma.hbm_to_vmem [thread:$0]  %s10, 32, %s467, [#allocation19]
        $region52: #{tpu_custom_call.1} parent=11 // pred_fallthru
          _
        // Predicated region
        $region53: #{tpu_custom_call.1} parent=11 // pred_check
          %p470 = pneg %p288
        $region54: #{tpu_custom_call.1} parent=11 // pred_check_branch
          %472 = sbr.rel (%p470) target = $region56
        $region55: #{tpu_custom_call.1} parent=11 // pred_region
          %s474 = ssub.s32 2048, 2048
          %475 = vsyncadd [#allocation22], %s474
          %s476 = sshll.u32 [#allocation21], 4
          %s477 = int_to_ptr.vmem [resolvable:$true] %s476
          %482 = dma.hbm_to_vmem [thread:$0]  %s11, 2048, %s477, [#allocation22], 64, 64, 4
        $region56: #{tpu_custom_call.1} parent=11 // pred_fallthru
          _
        // Predicated region
        $region57: #{tpu_custom_call.1} parent=11 // pred_check
          %p483 = pneg %p309
        $region58: #{tpu_custom_call.1} parent=11 // pred_check_branch
          %485 = sbr.rel (%p483) target = $region60
        $region59: #{tpu_custom_call.1} parent=11 // pred_region
          %s487 = ssub.s32 16, 16
          %488 = vsyncadd [#allocation22], %s487
          %s490 = sshll.u32 [#allocation23], 4
          %s491 = int_to_ptr.vmem [resolvable:$true] %s490
          %493 = dma.hbm_to_vmem [thread:$0]  %s12, 16, %s491, [#allocation22]
        $region60: #{tpu_custom_call.1} parent=11 // pred_fallthru
          _
      $region12: #{tpu_custom_call.1} parent=5 // pred_fallthru
        _
      %p494 = scmp.lt.s32.totalorder %s31, 2
      // Predicated region
      $region61: #{tpu_custom_call.1} parent=5 // pred_check
        %p495 = pneg %p494
      $region62: #{tpu_custom_call.1} parent=5 // pred_check_branch
        %497 = sbr.rel (%p495) target = $region64
      $region63: #{tpu_custom_call.1} parent=5 // pred_region
        // Predicated region
        $region65: #{tpu_custom_call.1} parent=63 // pred_check
          %p498 = pneg %p51
        $region66: #{tpu_custom_call.1} parent=63 // pred_check_branch
          %500 = sbr.rel (%p498) target = $region68
        $region67: #{tpu_custom_call.1} parent=63 // pred_region
          %s501 = sand.u32 %s41, 1
          %s502 = scalar_lea.sflag [#allocation4], %s501
          %s503 = sand.u32 %s41, 1
          %s504 = smul.addr %s503, 64
          %s505 = scalar_lea.vmem [#allocation3], %s504
          %s506 = smul.u32 4, %s31
          %s508 = ssub.s32 1024, 1024
          %509 = vsyncadd %s502, %s508
          %s510 = smul.addr %s506, 2
          %s511 = smul.addr %s510, 128
          %s512 = scalar_lea.hbm %s0, %s511
          %s513 = sshll.u32 %s505, 4
          %s514 = int_to_ptr.vmem [resolvable:$true] %s513
          %519 = dma.hbm_to_vmem [thread:$0]  %s512, 1024, %s514, %s502, 128, 128, 8
        $region68: #{tpu_custom_call.1} parent=63 // pred_fallthru
          _
      $region64: #{tpu_custom_call.1} parent=5 // pred_fallthru
        _
      %p520 = scmp.le.s32.totalorder 1, %s31
      %p521 = scmp.lt.s32.totalorder %s31, 3
      %p522 = pnand %p520, %p521
      %p523 = pneg %p522
      // Predicated region
      $region69: #{tpu_custom_call.1} parent=5 // pred_check
        _
      $region70: #{tpu_custom_call.1} parent=5 // pred_check_branch
        %525 = sbr.rel (%p522) target = $region72
      $region71: #{tpu_custom_call.1} parent=5 // pred_region
        %s526 = ssub.s32 %s31, 1
        %s527 = sand.u32 %s44, 1
        %s528 = scalar_lea.sflag [#allocation4], %s527
        %s529 = sand.u32 %s44, 1
        %s530 = smul.addr %s529, 64
        %s531 = scalar_lea.vmem [#allocation3], %s530
        // Predicated region
        $region73: #{tpu_custom_call.1} parent=71 // pred_check
          %p532 = pneg %p57
        $region74: #{tpu_custom_call.1} parent=71 // pred_check_branch
          %534 = sbr.rel (%p532) target = $region76
        $region75: #{tpu_custom_call.1} parent=71 // pred_region
          %535 = dma.done %s528, 1024
        $region76: #{tpu_custom_call.1} parent=71 // pred_fallthru
          _
        // Predicated region
        $region77: #{tpu_custom_call.1} parent=71 // pred_check
          %p536 = pneg %p78
        $region78: #{tpu_custom_call.1} parent=71 // pred_check_branch
          %538 = sbr.rel (%p536) target = $region80
        $region79: #{tpu_custom_call.1} parent=71 // pred_region
          %539 = dma.done [#allocation7], 16
        $region80: #{tpu_custom_call.1} parent=71 // pred_fallthru
          _
        // Predicated region
        $region81: #{tpu_custom_call.1} parent=71 // pred_check
          %p540 = pneg %p99
        $region82: #{tpu_custom_call.1} parent=71 // pred_check_branch
          %542 = sbr.rel (%p540) target = $region84
        $region83: #{tpu_custom_call.1} parent=71 // pred_region
          %543 = dma.done [#allocation7], 16
        $region84: #{tpu_custom_call.1} parent=71 // pred_fallthru
          _
        // Predicated region
        $region85: #{tpu_custom_call.1} parent=71 // pred_check
          %p544 = pneg %p120
        $region86: #{tpu_custom_call.1} parent=71 // pred_check_branch
          %546 = sbr.rel (%p544) target = $region88
        $region87: #{tpu_custom_call.1} parent=71 // pred_region
          %547 = dma.done [#allocation10], 512
        $region88: #{tpu_custom_call.1} parent=71 // pred_fallthru
          _
        // Predicated region
        $region89: #{tpu_custom_call.1} parent=71 // pred_check
          %p548 = pneg %p141
        $region90: #{tpu_custom_call.1} parent=71 // pred_check_branch
          %550 = sbr.rel (%p548) target = $region92
        $region91: #{tpu_custom_call.1} parent=71 // pred_region
          %551 = dma.done [#allocation10], 1024
        $region92: #{tpu_custom_call.1} parent=71 // pred_fallthru
          _
        // Predicated region
        $region93: #{tpu_custom_call.1} parent=71 // pred_check
          %p552 = pneg %p162
        $region94: #{tpu_custom_call.1} parent=71 // pred_check_branch
          %554 = sbr.rel (%p552) target = $region96
        $region95: #{tpu_custom_call.1} parent=71 // pred_region
          %555 = dma.done [#allocation13], 128
        $region96: #{tpu_custom_call.1} parent=71 // pred_fallthru
          _
        // Predicated region
        $region97: #{tpu_custom_call.1} parent=71 // pred_check
          %p556 = pneg %p183
        $region98: #{tpu_custom_call.1} parent=71 // pred_check_branch
          %558 = sbr.rel (%p556) target = $region100
        $region99: #{tpu_custom_call.1} parent=71 // pred_region
          %559 = dma.done [#allocation13], 256
        $region100: #{tpu_custom_call.1} parent=71 // pred_fallthru
          _
        // Predicated region
        $region101: #{tpu_custom_call.1} parent=71 // pred_check
          %p560 = pneg %p204
        $region102: #{tpu_custom_call.1} parent=71 // pred_check_branch
          %562 = sbr.rel (%p560) target = $region104
        $region103: #{tpu_custom_call.1} parent=71 // pred_region
          %563 = dma.done [#allocation16], 16
        $region104: #{tpu_custom_call.1} parent=71 // pred_fallthru
          _
        // Predicated region
        $region105: #{tpu_custom_call.1} parent=71 // pred_check
          %p564 = pneg %p225
        $region106: #{tpu_custom_call.1} parent=71 // pred_check_branch
          %566 = sbr.rel (%p564) target = $region108
        $region107: #{tpu_custom_call.1} parent=71 // pred_region
          %567 = dma.done [#allocation16], 16
        $region108: #{tpu_custom_call.1} parent=71 // pred_fallthru
          _
        // Predicated region
        $region109: #{tpu_custom_call.1} parent=71 // pred_check
          %p568 = pneg %p246
        $region110: #{tpu_custom_call.1} parent=71 // pred_check_branch
          %570 = sbr.rel (%p568) target = $region112
        $region111: #{tpu_custom_call.1} parent=71 // pred_region
          %571 = dma.done [#allocation19], 2048
        $region112: #{tpu_custom_call.1} parent=71 // pred_fallthru
          _
        // Predicated region
        $region113: #{tpu_custom_call.1} parent=71 // pred_check
          %p572 = pneg %p267
        $region114: #{tpu_custom_call.1} parent=71 // pred_check_branch
          %574 = sbr.rel (%p572) target = $region116
        $region115: #{tpu_custom_call.1} parent=71 // pred_region
          %575 = dma.done [#allocation19], 32
        $region116: #{tpu_custom_call.1} parent=71 // pred_fallthru
          _
        // Predicated region
        $region117: #{tpu_custom_call.1} parent=71 // pred_check
          %p576 = pneg %p288
        $region118: #{tpu_custom_call.1} parent=71 // pred_check_branch
          %578 = sbr.rel (%p576) target = $region120
        $region119: #{tpu_custom_call.1} parent=71 // pred_region
          %579 = dma.done [#allocation22], 2048
        $region120: #{tpu_custom_call.1} parent=71 // pred_fallthru
          _
        // Predicated region
        $region121: #{tpu_custom_call.1} parent=71 // pred_check
          %p580 = pneg %p309
        $region122: #{tpu_custom_call.1} parent=71 // pred_check_branch
          %582 = sbr.rel (%p580) target = $region124
        $region123: #{tpu_custom_call.1} parent=71 // pred_region
          %583 = dma.done [#allocation22], 16
        $region124: #{tpu_custom_call.1} parent=71 // pred_fallthru
          _
        %s584 = sand.u32 %s44, 1
        %s585 = scalar_lea.sflag [#allocation4], %s584
        %s586 = sand.u32 %s44, 1
        %s587 = smul.addr %s586, 64
        %s588 = scalar_lea.vmem [#allocation3], %s587
        %p589 = pneg %p57
        %p590 = pneg %p54
        %p591 = pneg %p78
        %p592 = pneg %p75
        %p593 = pneg %p99
        %p594 = pneg %p96
        %p595 = pneg %p120
        %p596 = pneg %p117
        %p597 = pneg %p141
        %p598 = pneg %p138
        %p599 = pneg %p162
        %p600 = pneg %p159
        %p601 = pneg %p183
        %p602 = pneg %p180
        %p603 = pneg %p204
        %p604 = pneg %p201
        %p605 = pneg %p225
        %p606 = pneg %p222
        %p607 = pneg %p246
        %p608 = pneg %p243
        %p609 = pneg %p267
        %p610 = pneg %p264
        %p611 = pneg %p288
        %p612 = pneg %p285
        %p613 = pneg %p309
        %p614 = pneg %p306
        %p615 = pneg %p335
        %p616 = pneg %p332
        %s617 = sand.u32 %s322, 1
        %s618 = scalar_lea.sflag [#allocation5], %s617
        %s619 = sand.u32 %s322, 1
        %s620 = smul.addr %s619, 64
        %s621 = scalar_lea.vmem [#allocation24], %s620
        %s622 = smul.u32 4, %s36
        %s623 = smul.u32 4, %s36
        %v625 = vld [vmem:[%s531] sm:$0xff]
        %v626 = vld [vmem:[%s531 + $0x8] sm:$0xff]
        %v627 = vld [vmem:[%s531 + $0x10] sm:$0xff]
        %v628 = vld [vmem:[%s531 + $0x18] sm:$0xff]
        %v629 = vld [vmem:[%s531 + $0x20] sm:$0xff]
        %v630 = vld [vmem:[%s531 + $0x28] sm:$0xff]
        %v631 = vld [vmem:[%s531 + $0x30] sm:$0xff]
        %v632 = vld [vmem:[%s531 + $0x38] sm:$0xff]
        %v633 = vld [vmem:[#allocation6] sm:$0x1]
        %v634 = vld [vmem:[#allocation8] sm:$0x1]
        %635 = vadd.xlane.f32.xlu0 %v625
        %v636 = vpop.xlane.xlu0 %635
        %637 = vadd.xlane.f32.xlu0 %v626
        %v638 = vpop.xlane.xlu0 %637
        %639 = vadd.xlane.f32.xlu0 %v627
        %v640 = vpop.xlane.xlu0 %639
        %641 = vadd.xlane.f32.xlu0 %v628
        %v642 = vpop.xlane.xlu0 %641
        %643 = vadd.xlane.f32.xlu0 %v629
        %v644 = vpop.xlane.xlu0 %643
        %645 = vadd.xlane.f32.xlu0 %v630
        %v646 = vpop.xlane.xlu0 %645
        %647 = vadd.xlane.f32.xlu0 %v631
        %v648 = vpop.xlane.xlu0 %647
        %649 = vadd.xlane.f32.xlu0 %v632
        %v650 = vpop.xlane.xlu0 %649
        %v651 = vrcp.pop 128.0
        %v652 = vmul.f32 %v636, %v651
        %v653 = vmul.f32 %v638, %v651
        %v654 = vmul.f32 %v640, %v651
        %v655 = vmul.f32 %v642, %v651
        %v656 = vmul.f32 %v644, %v651
        %v657 = vmul.f32 %v646, %v651
        %v658 = vmul.f32 %v648, %v651
        %v659 = vmul.f32 %v650, %v651
        %v660 = vmul.f32 %v625, %v625
        %v661 = vmul.f32 %v626, %v626
        %v662 = vmul.f32 %v627, %v627
        %v663 = vmul.f32 %v628, %v628
        %v664 = vmul.f32 %v629, %v629
        %v665 = vmul.f32 %v630, %v630
        %v666 = vmul.f32 %v631, %v631
        %v667 = vmul.f32 %v632, %v632
        %668 = vadd.xlane.f32.xlu0 %v660
        %v669 = vpop.xlane.xlu0 %668
        %670 = vadd.xlane.f32.xlu0 %v661
        %v671 = vpop.xlane.xlu0 %670
        %672 = vadd.xlane.f32.xlu0 %v662
        %v673 = vpop.xlane.xlu0 %672
        %674 = vadd.xlane.f32.xlu0 %v663
        %v675 = vpop.xlane.xlu0 %674
        %676 = vadd.xlane.f32.xlu0 %v664
        %v677 = vpop.xlane.xlu0 %676
        %678 = vadd.xlane.f32.xlu0 %v665
        %v679 = vpop.xlane.xlu0 %678
        %680 = vadd.xlane.f32.xlu0 %v666
        %v681 = vpop.xlane.xlu0 %680
        %682 = vadd.xlane.f32.xlu0 %v667
        %v683 = vpop.xlane.xlu0 %682
        %v684 = vmul.f32 %v669, %v651
        %v685 = vmul.f32 %v671, %v651
        %v686 = vmul.f32 %v673, %v651
        %v687 = vmul.f32 %v675, %v651
        %v688 = vmul.f32 %v677, %v651
        %v689 = vmul.f32 %v679, %v651
        %v690 = vmul.f32 %v681, %v651
        %v691 = vmul.f32 %v683, %v651
        %v692 = vmul.f32 %v652, %v652
        %v693 = vmul.f32 %v653, %v653
        %v694 = vmul.f32 %v654, %v654
        %v695 = vmul.f32 %v655, %v655
        %v696 = vmul.f32 %v656, %v656
        %v697 = vmul.f32 %v657, %v657
        %v698 = vmul.f32 %v658, %v658
        %v699 = vmul.f32 %v659, %v659
        %v700 = vsub.f32 %v684, %v692
        %v701 = vsub.f32 %v685, %v693
        %v702 = vsub.f32 %v686, %v694
        %v703 = vsub.f32 %v687, %v695
        %v704 = vsub.f32 %v688, %v696
        %v705 = vsub.f32 %v689, %v697
        %v706 = vsub.f32 %v690, %v698
        %v707 = vsub.f32 %v691, %v699
        %v708 = vmax.f32 %v700, 0.0
        %v709 = vmax.f32 %v701, 0.0
        %v710 = vmax.f32 %v702, 0.0
        %v711 = vmax.f32 %v703, 0.0
        %v712 = vmax.f32 %v704, 0.0
        %v713 = vmax.f32 %v705, 0.0
        %v714 = vmax.f32 %v706, 0.0
        %v715 = vmax.f32 %v707, 0.0
        %v716 = vsub.f32 %v625, %v652
        %v717 = vsub.f32 %v626, %v653
        %v718 = vsub.f32 %v627, %v654
        %v719 = vsub.f32 %v628, %v655
        %v720 = vsub.f32 %v629, %v656
        %v721 = vsub.f32 %v630, %v657
        %v722 = vsub.f32 %v631, %v658
        %v723 = vsub.f32 %v632, %v659
        %v724 = vadd.f32 %v708, 1e-05
        %v725 = vadd.f32 %v709, 1e-05
        %v726 = vadd.f32 %v710, 1e-05
        %v727 = vadd.f32 %v711, 1e-05
        %v728 = vadd.f32 %v712, 1e-05
        %v729 = vadd.f32 %v713, 1e-05
        %v730 = vadd.f32 %v714, 1e-05
        %v731 = vadd.f32 %v715, 1e-05
        %v732 = vrsqrt.pop %v724
        %v733 = vrsqrt.pop %v725
        %v734 = vrsqrt.pop %v726
        %v735 = vrsqrt.pop %v727
        %v736 = vrsqrt.pop %v728
        %v737 = vrsqrt.pop %v729
        %v738 = vrsqrt.pop %v730
        %v739 = vrsqrt.pop %v731
        %v740 = vmul.f32 %v716, %v732
        %v741 = vmul.f32 %v717, %v733
        %v742 = vmul.f32 %v718, %v734
        %v743 = vmul.f32 %v719, %v735
        %v744 = vmul.f32 %v720, %v736
        %v745 = vmul.f32 %v721, %v737
        %v746 = vmul.f32 %v722, %v738
        %v747 = vmul.f32 %v723, %v739
        %v749 = vlaneseq
        %v750 = vshrl.u32 %v749, 7
        %v751 = vsub.s32 0, %v750
        %v752 = vrot.slane %v633, %v751
        %v754 = vmul.f32 %v740, %v752
        %v755 = vmul.f32 %v741, %v752
        %v756 = vmul.f32 %v742, %v752
        %v757 = vmul.f32 %v743, %v752
        %v758 = vmul.f32 %v744, %v752
        %v759 = vmul.f32 %v745, %v752
        %v760 = vmul.f32 %v746, %v752
        %v761 = vmul.f32 %v747, %v752
        %v763 = vlaneseq
        %v764 = vshrl.u32 %v763, 7
        %v765 = vsub.s32 0, %v764
        %v766 = vrot.slane %v634, %v765
        %v768 = vadd.f32 %v754, %v766
        %v769 = vadd.f32 %v755, %v766
        %v770 = vadd.f32 %v756, %v766
        %v771 = vadd.f32 %v757, %v766
        %v772 = vadd.f32 %v758, %v766
        %v773 = vadd.f32 %v759, %v766
        %v774 = vadd.f32 %v760, %v766
        %v775 = vadd.f32 %v761, %v766
        %v776 = vpack.c.bf16 %v769, %v768
        %v777 = vpack.c.bf16 %v771, %v770
        %v778 = vpack.c.bf16 %v773, %v772
        %v779 = vpack.c.bf16 %v775, %v774
        %v780 = vld [vmem:[#allocation9] sm:$0xf]
        %v781 = vld [vmem:[#allocation9 + $0x4] sm:$0xf]
        %v782 = vld [vmem:[#allocation9 + $0x8] sm:$0xf]
        %v783 = vld [vmem:[#allocation9 + $0xc] sm:$0xf]
        %v784 = vld [vmem:[#allocation9 + $0x10] sm:$0xf]
        %v785 = vld [vmem:[#allocation9 + $0x14] sm:$0xf]
        %v786 = vld [vmem:[#allocation9 + $0x18] sm:$0xf]
        %v787 = vld [vmem:[#allocation9 + $0x1c] sm:$0xf]
        %v788 = vld [vmem:[#allocation11] sm:$0xff]
        %v789 = vld [vmem:[#allocation11 + $0x8] sm:$0xff]
        %v790 = vld [vmem:[#allocation11 + $0x10] sm:$0xff]
        %v791 = vld [vmem:[#allocation11 + $0x18] sm:$0xff]
        %v792 = vld [vmem:[#allocation11 + $0x20] sm:$0xff]
        %v793 = vld [vmem:[#allocation11 + $0x28] sm:$0xff]
        %v794 = vld [vmem:[#allocation11 + $0x30] sm:$0xff]
        %v795 = vld [vmem:[#allocation11 + $0x38] sm:$0xff]
        %797 = vset.pattern.permute.xlu0 0
        %798 = vperm.xlu0 %797, %v788
        %v799 = vpop.permute.xlu0 %798
        %802 = vset.pattern.permute.xlu0 0
        %803 = vperm.xlu0 %802, %v789
        %v804 = vpop.permute.xlu0 %803
        %807 = vset.pattern.permute.xlu0 0
        %808 = vperm.xlu0 %807, %v790
        %v809 = vpop.permute.xlu0 %808
        %812 = vset.pattern.permute.xlu0 0
        %813 = vperm.xlu0 %812, %v791
        %v814 = vpop.permute.xlu0 %813
        %817 = vset.pattern.permute.xlu0 0
        %818 = vperm.xlu0 %817, %v792
        %v819 = vpop.permute.xlu0 %818
        %822 = vset.pattern.permute.xlu0 0
        %823 = vperm.xlu0 %822, %v793
        %v824 = vpop.permute.xlu0 %823
        %827 = vset.pattern.permute.xlu0 0
        %828 = vperm.xlu0 %827, %v794
        %v829 = vpop.permute.xlu0 %828
        %832 = vset.pattern.permute.xlu0 0
        %833 = vperm.xlu0 %832, %v795
        %v834 = vpop.permute.xlu0 %833
        %v844 = vunpack.c.l.b16 %v780
        %v845 = vunpack.c.l.b16 %v781
        %v846 = vunpack.c.l.b16 %v782
        %v847 = vunpack.c.l.b16 %v783
        %v848 = vunpack.c.l.b16 %v784
        %v849 = vunpack.c.l.b16 %v785
        %v850 = vunpack.c.l.b16 %v786
        %v851 = vunpack.c.l.b16 %v787
        %v852 = vpack.c.b16 %v845, %v844
        %v853 = vpack.c.b16 %v847, %v846
        %v854 = vpack.c.b16 %v849, %v848
        %v855 = vpack.c.b16 %v851, %v850
        %vm856 = vcmask 130048
        %v858 = vsel %vm856, %v852, 0
        %v861 = vsel %vm856, %v853, 0
        %v864 = vsel %vm856, %v854, 0
        %v867 = vsel %vm856, %v855, 0
        %869 = vmatprep.subr.bf16.mxu0 0
        %870 = vmatpush1.bf16.msra.mxu0 %v776
        %871 = vmatprep.subr.bf16.mxu0 0
        %872 = vmatpush1.bf16.msra.mxu0 0
        %873 = vmatprep.subr.bf16.mxu0 0
        %874 = vmatpush1.bf16.msra.mxu0 0
        %875 = vmatprep.subr.bf16.mxu0 0
        %876 = vmatpush1.bf16.msra.mxu0 0
        %877 = vmatprep.subr.bf16.mxu0 0
        %878 = vmatpush1.bf16.msra.mxu0 0
        %879 = vmatprep.subr.bf16.mxu0 0
        %880 = vmatpush1.bf16.msra.mxu0 0
        %881 = vmatprep.subr.bf16.mxu0 0
        %882 = vmatpush1.bf16.msra.mxu0 0
        %883 = vmatprep.subr.bf16.mxu0 0
        %884 = vmatpush1.bf16.msra.mxu0 0
        %885 = vmatprep.subr.bf16.mxu0 0
        %886 = vmatpush1.bf16.msra.mxu0 0
        %887 = vmatprep.subr.bf16.mxu0 0
        %888 = vmatpush1.bf16.msra.mxu0 0
        %889 = vmatprep.subr.bf16.mxu0 0
        %890 = vmatpush1.bf16.msra.mxu0 0
        %891 = vmatprep.subr.bf16.mxu0 0
        %892 = vmatpush1.bf16.msra.mxu0 0
        %893 = vmatprep.subr.bf16.mxu0 0
        %894 = vmatpush1.bf16.msra.mxu0 0
        %895 = vmatprep.subr.bf16.mxu0 0
        %896 = vmatpush1.bf16.msra.mxu0 0
        %897 = vmatprep.subr.bf16.mxu0 0
        %898 = vmatpush1.bf16.msra.mxu0 0
        %899 = vmatprep.subr.bf16.mxu0 0
        %900 = vmatpush1.bf16.msra.mxu0 0
        %901 = vmatprep.mubr.bf16.mxu0 0
        %902 = vmatmul.mubr.bf16.gmra.mrb[0].mxu0 %v858
        %v903 = vpop.f32.mrb[0].mxu0
        %v904 = vadd.f32 %v799, %v903
        %v905 = vpop.f32.mrb[0].mxu0
        %v906 = vpop.f32.mrb[0].mxu0
        %v907 = vadd.f32 %v804, %v906
        %v908 = vpop.f32.mrb[0].mxu0
        %909 = vmatprep.mubr.bf16.mxu0 0
        %910 = vmatmul.mubr.bf16.gmra.mrb[0].mxu0 %v861
        %v911 = vpop.f32.mrb[0].mxu0
        %v912 = vadd.f32 %v809, %v911
        %v913 = vpop.f32.mrb[0].mxu0
        %v914 = vpop.f32.mrb[0].mxu0
        %v915 = vadd.f32 %v814, %v914
        %v916 = vpop.f32.mrb[0].mxu0
        %917 = vmatprep.mubr.bf16.mxu0 0
        %918 = vmatmul.mubr.bf16.gmra.mrb[0].mxu0 %v864
        %v919 = vpop.f32.mrb[0].mxu0
        %v920 = vadd.f32 %v819, %v919
        %v921 = vpop.f32.mrb[0].mxu0
        %v922 = vpop.f32.mrb[0].mxu0
        %v923 = vadd.f32 %v824, %v922
        %v924 = vpop.f32.mrb[0].mxu0
        %925 = vmatprep.mubr.bf16.mxu0 0
        %926 = vmatmul.mubr.bf16.gmra.mrb[0].mxu0 %v867
        %v927 = vpop.f32.mrb[0].mxu0
        %v928 = vadd.f32 %v829, %v927
        %v929 = vpop.f32.mrb[0].mxu0
        %v930 = vpop.f32.mrb[0].mxu0
        %v931 = vadd.f32 %v834, %v930
        %v932 = vpop.f32.mrb[0].mxu0
        %933 = vdwg.mxu0
        %934 = vmatprep.subr.bf16.mxu0 0
        %935 = vmatpush1.bf16.msra.mxu0 %v777
        %936 = vmatprep.subr.bf16.mxu0 0
        %937 = vmatpush1.bf16.msra.mxu0 0
        %938 = vmatprep.subr.bf16.mxu0 0
        %939 = vmatpush1.bf16.msra.mxu0 0
        %940 = vmatprep.subr.bf16.mxu0 0
        %941 = vmatpush1.bf16.msra.mxu0 0
        %942 = vmatprep.subr.bf16.mxu0 0
        %943 = vmatpush1.bf16.msra.mxu0 0
        %944 = vmatprep.subr.bf16.mxu0 0
        %945 = vmatpush1.bf16.msra.mxu0 0
        %946 = vmatprep.subr.bf16.mxu0 0
        %947 = vmatpush1.bf16.msra.mxu0 0
        %948 = vmatprep.subr.bf16.mxu0 0
        %949 = vmatpush1.bf16.msra.mxu0 0
        %950 = vmatprep.subr.bf16.mxu0 0
        %951 = vmatpush1.bf16.msra.mxu0 0
        %952 = vmatprep.subr.bf16.mxu0 0
        %953 = vmatpush1.bf16.msra.mxu0 0
        %954 = vmatprep.subr.bf16.mxu0 0
        %955 = vmatpush1.bf16.msra.mxu0 0
        %956 = vmatprep.subr.bf16.mxu0 0
        %957 = vmatpush1.bf16.msra.mxu0 0
        %958 = vmatprep.subr.bf16.mxu0 0
        %959 = vmatpush1.bf16.msra.mxu0 0
        %960 = vmatprep.subr.bf16.mxu0 0
        %961 = vmatpush1.bf16.msra.mxu0 0
        %962 = vmatprep.subr.bf16.mxu0 0
        %963 = vmatpush1.bf16.msra.mxu0 0
        %964 = vmatprep.subr.bf16.mxu0 0
        %965 = vmatpush1.bf16.msra.mxu0 0
        %966 = vmatprep.mubr.bf16.mxu0 0
        %967 = vmatmul.mubr.bf16.gmra.mrb[0].mxu0 %v858
        %v968 = vpop.f32.mrb[0].mxu0
        %v969 = vadd.f32 %v799, %v968
        %v970 = vpop.f32.mrb[0].mxu0
        %v971 = vpop.f32.mrb[0].mxu0
        %v972 = vadd.f32 %v804, %v971
        %v973 = vpop.f32.mrb[0].mxu0
        %974 = vmatprep.mubr.bf16.mxu0 0
        %975 = vmatmul.mubr.bf16.gmra.mrb[0].mxu0 %v861
        %v976 = vpop.f32.mrb[0].mxu0
        %v977 = vadd.f32 %v809, %v976
        %v978 = vpop.f32.mrb[0].mxu0
        %v979 = vpop.f32.mrb[0].mxu0
        %v980 = vadd.f32 %v814, %v979
        %v981 = vpop.f32.mrb[0].mxu0
        %982 = vmatprep.mubr.bf16.mxu0 0
        %983 = vmatmul.mubr.bf16.gmra.mrb[0].mxu0 %v864
        %v984 = vpop.f32.mrb[0].mxu0
        %v985 = vadd.f32 %v819, %v984
        %v986 = vpop.f32.mrb[0].mxu0
        %v987 = vpop.f32.mrb[0].mxu0
        %v988 = vadd.f32 %v824, %v987
        %v989 = vpop.f32.mrb[0].mxu0
        %990 = vmatprep.mubr.bf16.mxu0 0
        %991 = vmatmul.mubr.bf16.gmra.mrb[0].mxu0 %v867
        %v992 = vpop.f32.mrb[0].mxu0
        %v993 = vadd.f32 %v829, %v992
        %v994 = vpop.f32.mrb[0].mxu0
        %v995 = vpop.f32.mrb[0].mxu0
        %v996 = vadd.f32 %v834, %v995
        %v997 = vpop.f32.mrb[0].mxu0
        %998 = vdwg.mxu0
        %999 = vmatprep.subr.bf16.mxu0 0
        %1000 = vmatpush1.bf16.msra.mxu0 %v778
        %1001 = vmatprep.subr.bf16.mxu0 0
        %1002 = vmatpush1.bf16.msra.mxu0 0
        %1003 = vmatprep.subr.bf16.mxu0 0
        %1004 = vmatpush1.bf16.msra.mxu0 0
        %1005 = vmatprep.subr.bf16.mxu0 0
        %1006 = vmatpush1.bf16.msra.mxu0 0
        %1007 = vmatprep.subr.bf16.mxu0 0
        %1008 = vmatpush1.bf16.msra.mxu0 0
        %1009 = vmatprep.subr.bf16.mxu0 0
        %1010 = vmatpush1.bf16.msra.mxu0 0
        %1011 = vmatprep.subr.bf16.mxu0 0
        %1012 = vmatpush1.bf16.msra.mxu0 0
        %1013 = vmatprep.subr.bf16.mxu0 0
        %1014 = vmatpush1.bf16.msra.mxu0 0
        %1015 = vmatprep.subr.bf16.mxu0 0
        %1016 = vmatpush1.bf16.msra.mxu0 0
        %1017 = vmatprep.subr.bf16.mxu0 0
        %1018 = vmatpush1.bf16.msra.mxu0 0
        %1019 = vmatprep.subr.bf16.mxu0 0
        %1020 = vmatpush1.bf16.msra.mxu0 0
        %1021 = vmatprep.subr.bf16.mxu0 0
        %1022 = vmatpush1.bf16.msra.mxu0 0
        %1023 = vmatprep.subr.bf16.mxu0 0
        %1024 = vmatpush1.bf16.msra.mxu0 0
        %1025 = vmatprep.subr.bf16.mxu0 0
        %1026 = vmatpush1.bf16.msra.mxu0 0
        %1027 = vmatprep.subr.bf16.mxu0 0
        %1028 = vmatpush1.bf16.msra.mxu0 0
        %1029 = vmatprep.subr.bf16.mxu0 0
        %1030 = vmatpush1.bf16.msra.mxu0 0
        %1031 = vmatprep.mubr.bf16.mxu0 0
        %1032 = vmatmul.mubr.bf16.gmra.mrb[0].mxu0 %v858
        %v1033 = vpop.f32.mrb[0].mxu0
        %v1034 = vadd.f32 %v799, %v1033
        %v1035 = vpop.f32.mrb[0].mxu0
        %v1036 = vpop.f32.mrb[0].mxu0
        %v1037 = vadd.f32 %v804, %v1036
        %v1038 = vpop.f32.mrb[0].mxu0
        %1039 = vmatprep.mubr.bf16.mxu0 0
        %1040 = vmatmul.mubr.bf16.gmra.mrb[0].mxu0 %v861
        %v1041 = vpop.f32.mrb[0].mxu0
        %v1042 = vadd.f32 %v809, %v1041
        %v1043 = vpop.f32.mrb[0].mxu0
        %v1044 = vpop.f32.mrb[0].mxu0
        %v1045 = vadd.f32 %v814, %v1044
        %v1046 = vpop.f32.mrb[0].mxu0
        %1047 = vmatprep.mubr.bf16.mxu0 0
        %1048 = vmatmul.mubr.bf16.gmra.mrb[0].mxu0 %v864
        %v1049 = vpop.f32.mrb[0].mxu0
        %v1050 = vadd.f32 %v819, %v1049
        %v1051 = vpop.f32.mrb[0].mxu0
        %v1052 = vpop.f32.mrb[0].mxu0
        %v1053 = vadd.f32 %v824, %v1052
        %v1054 = vpop.f32.mrb[0].mxu0
        %1055 = vmatprep.mubr.bf16.mxu0 0
        %1056 = vmatmul.mubr.bf16.gmra.mrb[0].mxu0 %v867
        %v1057 = vpop.f32.mrb[0].mxu0
        %v1058 = vadd.f32 %v829, %v1057
        %v1059 = vpop.f32.mrb[0].mxu0
        %v1060 = vpop.f32.mrb[0].mxu0
        %v1061 = vadd.f32 %v834, %v1060
        %v1062 = vpop.f32.mrb[0].mxu0
        %1063 = vdwg.mxu0
        %1064 = vmatprep.subr.bf16.mxu0 0
        %1065 = vmatpush1.bf16.msra.mxu0 %v779
        %1066 = vmatprep.subr.bf16.mxu0 0
        %1067 = vmatpush1.bf16.msra.mxu0 0
        %1068 = vmatprep.subr.bf16.mxu0 0
        %1069 = vmatpush1.bf16.msra.mxu0 0
        %1070 = vmatprep.subr.bf16.mxu0 0
        %1071 = vmatpush1.bf16.msra.mxu0 0
        %1072 = vmatprep.subr.bf16.mxu0 0
        %1073 = vmatpush1.bf16.msra.mxu0 0
        %1074 = vmatprep.subr.bf16.mxu0 0
        %1075 = vmatpush1.bf16.msra.mxu0 0
        %1076 = vmatprep.subr.bf16.mxu0 0
        %1077 = vmatpush1.bf16.msra.mxu0 0
        %1078 = vmatprep.subr.bf16.mxu0 0
        %1079 = vmatpush1.bf16.msra.mxu0 0
        %1080 = vmatprep.subr.bf16.mxu0 0
        %1081 = vmatpush1.bf16.msra.mxu0 0
        %1082 = vmatprep.subr.bf16.mxu0 0
        %1083 = vmatpush1.bf16.msra.mxu0 0
        %1084 = vmatprep.subr.bf16.mxu0 0
        %1085 = vmatpush1.bf16.msra.mxu0 0
        %1086 = vmatprep.subr.bf16.mxu0 0
        %1087 = vmatpush1.bf16.msra.mxu0 0
        %1088 = vmatprep.subr.bf16.mxu0 0
        %1089 = vmatpush1.bf16.msra.mxu0 0
        %1090 = vmatprep.subr.bf16.mxu0 0
        %1091 = vmatpush1.bf16.msra.mxu0 0
        %1092 = vmatprep.subr.bf16.mxu0 0
        %1093 = vmatpush1.bf16.msra.mxu0 0
        %1094 = vmatprep.subr.bf16.mxu0 0
        %1095 = vmatpush1.bf16.msra.mxu0 0
        %1096 = vmatprep.mubr.bf16.mxu0 0
        %1097 = vmatmul.mubr.bf16.gmra.mrb[0].mxu0 %v858
        %v1098 = vpop.f32.mrb[0].mxu0
        %v1099 = vadd.f32 %v799, %v1098
        %v1100 = vpop.f32.mrb[0].mxu0
        %v1101 = vpop.f32.mrb[0].mxu0
        %v1102 = vadd.f32 %v804, %v1101
        %v1103 = vpop.f32.mrb[0].mxu0
        %1104 = vmatprep.mubr.bf16.mxu0 0
        %1105 = vmatmul.mubr.bf16.gmra.mrb[0].mxu0 %v861
        %v1106 = vpop.f32.mrb[0].mxu0
        %v1107 = vadd.f32 %v809, %v1106
        %v1108 = vpop.f32.mrb[0].mxu0
        %v1109 = vpop.f32.mrb[0].mxu0
        %v1110 = vadd.f32 %v814, %v1109
        %v1111 = vpop.f32.mrb[0].mxu0
        %1112 = vmatprep.mubr.bf16.mxu0 0
        %1113 = vmatmul.mubr.bf16.gmra.mrb[0].mxu0 %v864
        %v1114 = vpop.f32.mrb[0].mxu0
        %v1115 = vadd.f32 %v819, %v1114
        %v1116 = vpop.f32.mrb[0].mxu0
        %v1117 = vpop.f32.mrb[0].mxu0
        %v1118 = vadd.f32 %v824, %v1117
        %v1119 = vpop.f32.mrb[0].mxu0
        %1120 = vmatprep.mubr.bf16.mxu0 0
        %1121 = vmatmul.mubr.bf16.gmra.mrb[0].mxu0 %v867
        %v1122 = vpop.f32.mrb[0].mxu0
        %v1123 = vadd.f32 %v829, %v1122
        %v1124 = vpop.f32.mrb[0].mxu0
        %v1125 = vpop.f32.mrb[0].mxu0
        %v1126 = vadd.f32 %v834, %v1125
        %v1127 = vpop.f32.mrb[0].mxu0
        %1128 = vdwg.mxu0
        %v1129 = vmul.f32 %v904, 0.70710677
        %v1130 = vmul.f32 %v907, 0.70710677
        %v1131 = vmul.f32 %v912, 0.70710677
        %v1132 = vmul.f32 %v915, 0.70710677
        %v1133 = vmul.f32 %v920, 0.70710677
        %v1134 = vmul.f32 %v923, 0.70710677
        %v1135 = vmul.f32 %v928, 0.70710677
        %v1136 = vmul.f32 %v931, 0.70710677
        %v1137 = vmul.f32 %v969, 0.70710677
        %v1138 = vmul.f32 %v972, 0.70710677
        %v1139 = vmul.f32 %v977, 0.70710677
        %v1140 = vmul.f32 %v980, 0.70710677
        %v1141 = vmul.f32 %v985, 0.70710677
        %v1142 = vmul.f32 %v988, 0.70710677
        %v1143 = vmul.f32 %v993, 0.70710677
        %v1144 = vmul.f32 %v996, 0.70710677
        %v1145 = vmul.f32 %v1034, 0.70710677
        %v1146 = vmul.f32 %v1037, 0.70710677
        %v1147 = vmul.f32 %v1042, 0.70710677
        %v1148 = vmul.f32 %v1045, 0.70710677
        %v1149 = vmul.f32 %v1050, 0.70710677
        %v1150 = vmul.f32 %v1053, 0.70710677
        %v1151 = vmul.f32 %v1058, 0.70710677
        %v1152 = vmul.f32 %v1061, 0.70710677
        %v1153 = vmul.f32 %v1099, 0.70710677
        %v1154 = vmul.f32 %v1102, 0.70710677
        %v1155 = vmul.f32 %v1107, 0.70710677
        %v1156 = vmul.f32 %v1110, 0.70710677
        %v1157 = vmul.f32 %v1115, 0.70710677
        %v1158 = vmul.f32 %v1118, 0.70710677
        %v1159 = vmul.f32 %v1123, 0.70710677
        %v1160 = vmul.f32 %v1126, 0.70710677
        %v1161 = vand.u32 2147483647, %v1129
        %v1162 = vand.u32 2147483647, %v1130
        %v1163 = vand.u32 2147483647, %v1131
        %v1164 = vand.u32 2147483647, %v1132
        %v1165 = vand.u32 2147483647, %v1133
        %v1166 = vand.u32 2147483647, %v1134
        %v1167 = vand.u32 2147483647, %v1135
        %v1168 = vand.u32 2147483647, %v1136
        %v1169 = vand.u32 2147483647, %v1137
        %v1170 = vand.u32 2147483647, %v1138
        %v1171 = vand.u32 2147483647, %v1139
        %v1172 = vand.u32 2147483647, %v1140
        %v1173 = vand.u32 2147483647, %v1141
        %v1174 = vand.u32 2147483647, %v1142
        %v1175 = vand.u32 2147483647, %v1143
        %v1176 = vand.u32 2147483647, %v1144
        %v1177 = vand.u32 2147483647, %v1145
        %v1178 = vand.u32 2147483647, %v1146
        %v1179 = vand.u32 2147483647, %v1147
        %v1180 = vand.u32 2147483647, %v1148
        %v1181 = vand.u32 2147483647, %v1149
        %v1182 = vand.u32 2147483647, %v1150
        %v1183 = vand.u32 2147483647, %v1151
        %v1184 = vand.u32 2147483647, %v1152
        %v1185 = vand.u32 2147483647, %v1153
        %v1186 = vand.u32 2147483647, %v1154
        %v1187 = vand.u32 2147483647, %v1155
        %v1188 = vand.u32 2147483647, %v1156
        %v1189 = vand.u32 2147483647, %v1157
        %v1190 = vand.u32 2147483647, %v1158
        %v1191 = vand.u32 2147483647, %v1159
        %v1192 = vand.u32 2147483647, %v1160
        %v1193 = vmul.f32 %v1161, 0.3275911
        %v1194 = vmul.f32 %v1162, 0.3275911
        %v1195 = vmul.f32 %v1163, 0.3275911
        %v1196 = vmul.f32 %v1164, 0.3275911
        %v1197 = vmul.f32 %v1165, 0.3275911
        %v1198 = vmul.f32 %v1166, 0.3275911
        %v1199 = vmul.f32 %v1167, 0.3275911
        %v1200 = vmul.f32 %v1168, 0.3275911
        %v1201 = vmul.f32 %v1169, 0.3275911
        %v1202 = vmul.f32 %v1170, 0.3275911
        %v1203 = vmul.f32 %v1171, 0.3275911
        %v1204 = vmul.f32 %v1172, 0.3275911
        %v1205 = vmul.f32 %v1173, 0.3275911
        %v1206 = vmul.f32 %v1174, 0.3275911
        %v1207 = vmul.f32 %v1175, 0.3275911
        %v1208 = vmul.f32 %v1176, 0.3275911
        %v1209 = vmul.f32 %v1177, 0.3275911
        %v1210 = vmul.f32 %v1178, 0.3275911
        %v1211 = vmul.f32 %v1179, 0.3275911
        %v1212 = vmul.f32 %v1180, 0.3275911
        %v1213 = vmul.f32 %v1181, 0.3275911
        %v1214 = vmul.f32 %v1182, 0.3275911
        %v1215 = vmul.f32 %v1183, 0.3275911
        %v1216 = vmul.f32 %v1184, 0.3275911
        %v1217 = vmul.f32 %v1185, 0.3275911
        %v1218 = vmul.f32 %v1186, 0.3275911
        %v1219 = vmul.f32 %v1187, 0.3275911
        %v1220 = vmul.f32 %v1188, 0.3275911
        %v1221 = vmul.f32 %v1189, 0.3275911
        %v1222 = vmul.f32 %v1190, 0.3275911
        %v1223 = vmul.f32 %v1191, 0.3275911
        %v1224 = vmul.f32 %v1192, 0.3275911
        %v1225 = vadd.f32 %v1193, 1.0
        %v1226 = vadd.f32 %v1194, 1.0
        %v1227 = vadd.f32 %v1195, 1.0
        %v1228 = vadd.f32 %v1196, 1.0
        %v1229 = vadd.f32 %v1197, 1.0
        %v1230 = vadd.f32 %v1198, 1.0
        %v1231 = vadd.f32 %v1199, 1.0
        %v1232 = vadd.f32 %v1200, 1.0
        %v1233 = vadd.f32 %v1201, 1.0
        %v1234 = vadd.f32 %v1202, 1.0
        %v1235 = vadd.f32 %v1203, 1.0
        %v1236 = vadd.f32 %v1204, 1.0
        %v1237 = vadd.f32 %v1205, 1.0
        %v1238 = vadd.f32 %v1206, 1.0
        %v1239 = vadd.f32 %v1207, 1.0
        %v1240 = vadd.f32 %v1208, 1.0
        %v1241 = vadd.f32 %v1209, 1.0
        %v1242 = vadd.f32 %v1210, 1.0
        %v1243 = vadd.f32 %v1211, 1.0
        %v1244 = vadd.f32 %v1212, 1.0
        %v1245 = vadd.f32 %v1213, 1.0
        %v1246 = vadd.f32 %v1214, 1.0
        %v1247 = vadd.f32 %v1215, 1.0
        %v1248 = vadd.f32 %v1216, 1.0
        %v1249 = vadd.f32 %v1217, 1.0
        %v1250 = vadd.f32 %v1218, 1.0
        %v1251 = vadd.f32 %v1219, 1.0
        %v1252 = vadd.f32 %v1220, 1.0
        %v1253 = vadd.f32 %v1221, 1.0
        %v1254 = vadd.f32 %v1222, 1.0
        %v1255 = vadd.f32 %v1223, 1.0
        %v1256 = vadd.f32 %v1224, 1.0
        %v1257 = vrcp.pop %v1225
        %v1258 = vmul.f32 1.0, %v1257
        %v1259 = vrcp.pop %v1226
        %v1260 = vmul.f32 1.0, %v1259
        %v1261 = vrcp.pop %v1227
        %v1262 = vmul.f32 1.0, %v1261
        %v1263 = vrcp.pop %v1228
        %v1264 = vmul.f32 1.0, %v1263
        %v1265 = vrcp.pop %v1229
        %v1266 = vmul.f32 1.0, %v1265
        %v1267 = vrcp.pop %v1230
        %v1268 = vmul.f32 1.0, %v1267
        %v1269 = vrcp.pop %v1231
        %v1270 = vmul.f32 1.0, %v1269
        %v1271 = vrcp.pop %v1232
        %v1272 = vmul.f32 1.0, %v1271
        %v1273 = vrcp.pop %v1233
        %v1274 = vmul.f32 1.0, %v1273
        %v1275 = vrcp.pop %v1234
        %v1276 = vmul.f32 1.0, %v1275
        %v1277 = vrcp.pop %v1235
        %v1278 = vmul.f32 1.0, %v1277
        %v1279 = vrcp.pop %v1236
        %v1280 = vmul.f32 1.0, %v1279
        %v1281 = vrcp.pop %v1237
        %v1282 = vmul.f32 1.0, %v1281
        %v1283 = vrcp.pop %v1238
        %v1284 = vmul.f32 1.0, %v1283
        %v1285 = vrcp.pop %v1239
        %v1286 = vmul.f32 1.0, %v1285
        %v1287 = vrcp.pop %v1240
        %v1288 = vmul.f32 1.0, %v1287
        %v1289 = vrcp.pop %v1241
        %v1290 = vmul.f32 1.0, %v1289
        %v1291 = vrcp.pop %v1242
        %v1292 = vmul.f32 1.0, %v1291
        %v1293 = vrcp.pop %v1243
        %v1294 = vmul.f32 1.0, %v1293
        %v1295 = vrcp.pop %v1244
        %v1296 = vmul.f32 1.0, %v1295
        %v1297 = vrcp.pop %v1245
        %v1298 = vmul.f32 1.0, %v1297
        %v1299 = vrcp.pop %v1246
        %v1300 = vmul.f32 1.0, %v1299
        %v1301 = vrcp.pop %v1247
        %v1302 = vmul.f32 1.0, %v1301
        %v1303 = vrcp.pop %v1248
        %v1304 = vmul.f32 1.0, %v1303
        %v1305 = vrcp.pop %v1249
        %v1306 = vmul.f32 1.0, %v1305
        %v1307 = vrcp.pop %v1250
        %v1308 = vmul.f32 1.0, %v1307
        %v1309 = vrcp.pop %v1251
        %v1310 = vmul.f32 1.0, %v1309
        %v1311 = vrcp.pop %v1252
        %v1312 = vmul.f32 1.0, %v1311
        %v1313 = vrcp.pop %v1253
        %v1314 = vmul.f32 1.0, %v1313
        %v1315 = vrcp.pop %v1254
        %v1316 = vmul.f32 1.0, %v1315
        %v1317 = vrcp.pop %v1255
        %v1318 = vmul.f32 1.0, %v1317
        %v1319 = vrcp.pop %v1256
        %v1320 = vmul.f32 1.0, %v1319
        %v1321 = vmul.f32 %v1258, 1.0614054
        %v1322 = vmul.f32 %v1260, 1.0614054
        %v1323 = vmul.f32 %v1262, 1.0614054
        %v1324 = vmul.f32 %v1264, 1.0614054
        %v1325 = vmul.f32 %v1266, 1.0614054
        %v1326 = vmul.f32 %v1268, 1.0614054
        %v1327 = vmul.f32 %v1270, 1.0614054
        %v1328 = vmul.f32 %v1272, 1.0614054
        %v1329 = vmul.f32 %v1274, 1.0614054
        %v1330 = vmul.f32 %v1276, 1.0614054
        %v1331 = vmul.f32 %v1278, 1.0614054
        %v1332 = vmul.f32 %v1280, 1.0614054
        %v1333 = vmul.f32 %v1282, 1.0614054
        %v1334 = vmul.f32 %v1284, 1.0614054
        %v1335 = vmul.f32 %v1286, 1.0614054
        %v1336 = vmul.f32 %v1288, 1.0614054
        %v1337 = vmul.f32 %v1290, 1.0614054
        %v1338 = vmul.f32 %v1292, 1.0614054
        %v1339 = vmul.f32 %v1294, 1.0614054
        %v1340 = vmul.f32 %v1296, 1.0614054
        %v1341 = vmul.f32 %v1298, 1.0614054
        %v1342 = vmul.f32 %v1300, 1.0614054
        %v1343 = vmul.f32 %v1302, 1.0614054
        %v1344 = vmul.f32 %v1304, 1.0614054
        %v1345 = vmul.f32 %v1306, 1.0614054
        %v1346 = vmul.f32 %v1308, 1.0614054
        %v1347 = vmul.f32 %v1310, 1.0614054
        %v1348 = vmul.f32 %v1312, 1.0614054
        %v1349 = vmul.f32 %v1314, 1.0614054
        %v1350 = vmul.f32 %v1316, 1.0614054
        %v1351 = vmul.f32 %v1318, 1.0614054
        %v1352 = vmul.f32 %v1320, 1.0614054
        %v1353 = vadd.f32 %v1321, -1.4531521
        %v1354 = vadd.f32 %v1322, -1.4531521
        %v1355 = vadd.f32 %v1323, -1.4531521
        %v1356 = vadd.f32 %v1324, -1.4531521
        %v1357 = vadd.f32 %v1325, -1.4531521
        %v1358 = vadd.f32 %v1326, -1.4531521
        %v1359 = vadd.f32 %v1327, -1.4531521
        %v1360 = vadd.f32 %v1328, -1.4531521
        %v1361 = vadd.f32 %v1329, -1.4531521
        %v1362 = vadd.f32 %v1330, -1.4531521
        %v1363 = vadd.f32 %v1331, -1.4531521
        %v1364 = vadd.f32 %v1332, -1.4531521
        %v1365 = vadd.f32 %v1333, -1.4531521
        %v1366 = vadd.f32 %v1334, -1.4531521
        %v1367 = vadd.f32 %v1335, -1.4531521
        %v1368 = vadd.f32 %v1336, -1.4531521
        %v1369 = vadd.f32 %v1337, -1.4531521
        %v1370 = vadd.f32 %v1338, -1.4531521
        %v1371 = vadd.f32 %v1339, -1.4531521
        %v1372 = vadd.f32 %v1340, -1.4531521
        %v1373 = vadd.f32 %v1341, -1.4531521
        %v1374 = vadd.f32 %v1342, -1.4531521
        %v1375 = vadd.f32 %v1343, -1.4531521
        %v1376 = vadd.f32 %v1344, -1.4531521
        %v1377 = vadd.f32 %v1345, -1.4531521
        %v1378 = vadd.f32 %v1346, -1.4531521
        %v1379 = vadd.f32 %v1347, -1.4531521
        %v1380 = vadd.f32 %v1348, -1.4531521
        %v1381 = vadd.f32 %v1349, -1.4531521
        %v1382 = vadd.f32 %v1350, -1.4531521
        %v1383 = vadd.f32 %v1351, -1.4531521
        %v1384 = vadd.f32 %v1352, -1.4531521
        %v1385 = vmul.f32 %v1258, %v1353
        %v1386 = vmul.f32 %v1260, %v1354
        %v1387 = vmul.f32 %v1262, %v1355
        %v1388 = vmul.f32 %v1264, %v1356
        %v1389 = vmul.f32 %v1266, %v1357
        %v1390 = vmul.f32 %v1268, %v1358
        %v1391 = vmul.f32 %v1270, %v1359
        %v1392 = vmul.f32 %v1272, %v1360
        %v1393 = vmul.f32 %v1274, %v1361
        %v1394 = vmul.f32 %v1276, %v1362
        %v1395 = vmul.f32 %v1278, %v1363
        %v1396 = vmul.f32 %v1280, %v1364
        %v1397 = vmul.f32 %v1282, %v1365
        %v1398 = vmul.f32 %v1284, %v1366
        %v1399 = vmul.f32 %v1286, %v1367
        %v1400 = vmul.f32 %v1288, %v1368
        %v1401 = vmul.f32 %v1290, %v1369
        %v1402 = vmul.f32 %v1292, %v1370
        %v1403 = vmul.f32 %v1294, %v1371
        %v1404 = vmul.f32 %v1296, %v1372
        %v1405 = vmul.f32 %v1298, %v1373
        %v1406 = vmul.f32 %v1300, %v1374
        %v1407 = vmul.f32 %v1302, %v1375
        %v1408 = vmul.f32 %v1304, %v1376
        %v1409 = vmul.f32 %v1306, %v1377
        %v1410 = vmul.f32 %v1308, %v1378
        %v1411 = vmul.f32 %v1310, %v1379
        %v1412 = vmul.f32 %v1312, %v1380
        %v1413 = vmul.f32 %v1314, %v1381
        %v1414 = vmul.f32 %v1316, %v1382
        %v1415 = vmul.f32 %v1318, %v1383
        %v1416 = vmul.f32 %v1320, %v1384
        %v1417 = vadd.f32 %v1385, 1.4214138
        %v1418 = vadd.f32 %v1386, 1.4214138
        %v1419 = vadd.f32 %v1387, 1.4214138
        %v1420 = vadd.f32 %v1388, 1.4214138
        %v1421 = vadd.f32 %v1389, 1.4214138
        %v1422 = vadd.f32 %v1390, 1.4214138
        %v1423 = vadd.f32 %v1391, 1.4214138
        %v1424 = vadd.f32 %v1392, 1.4214138
        %v1425 = vadd.f32 %v1393, 1.4214138
        %v1426 = vadd.f32 %v1394, 1.4214138
        %v1427 = vadd.f32 %v1395, 1.4214138
        %v1428 = vadd.f32 %v1396, 1.4214138
        %v1429 = vadd.f32 %v1397, 1.4214138
        %v1430 = vadd.f32 %v1398, 1.4214138
        %v1431 = vadd.f32 %v1399, 1.4214138
        %v1432 = vadd.f32 %v1400, 1.4214138
        %v1433 = vadd.f32 %v1401, 1.4214138
        %v1434 = vadd.f32 %v1402, 1.4214138
        %v1435 = vadd.f32 %v1403, 1.4214138
        %v1436 = vadd.f32 %v1404, 1.4214138
        %v1437 = vadd.f32 %v1405, 1.4214138
        %v1438 = vadd.f32 %v1406, 1.4214138
        %v1439 = vadd.f32 %v1407, 1.4214138
        %v1440 = vadd.f32 %v1408, 1.4214138
        %v1441 = vadd.f32 %v1409, 1.4214138
        %v1442 = vadd.f32 %v1410, 1.4214138
        %v1443 = vadd.f32 %v1411, 1.4214138
        %v1444 = vadd.f32 %v1412, 1.4214138
        %v1445 = vadd.f32 %v1413, 1.4214138
        %v1446 = vadd.f32 %v1414, 1.4214138
        %v1447 = vadd.f32 %v1415, 1.4214138
        %v1448 = vadd.f32 %v1416, 1.4214138
        %v1449 = vmul.f32 %v1258, %v1417
        %v1450 = vmul.f32 %v1260, %v1418
        %v1451 = vmul.f32 %v1262, %v1419
        %v1452 = vmul.f32 %v1264, %v1420
        %v1453 = vmul.f32 %v1266, %v1421
        %v1454 = vmul.f32 %v1268, %v1422
        %v1455 = vmul.f32 %v1270, %v1423
        %v1456 = vmul.f32 %v1272, %v1424
        %v1457 = vmul.f32 %v1274, %v1425
        %v1458 = vmul.f32 %v1276, %v1426
        %v1459 = vmul.f32 %v1278, %v1427
        %v1460 = vmul.f32 %v1280, %v1428
        %v1461 = vmul.f32 %v1282, %v1429
        %v1462 = vmul.f32 %v1284, %v1430
        %v1463 = vmul.f32 %v1286, %v1431
        %v1464 = vmul.f32 %v1288, %v1432
        %v1465 = vmul.f32 %v1290, %v1433
        %v1466 = vmul.f32 %v1292, %v1434
        %v1467 = vmul.f32 %v1294, %v1435
        %v1468 = vmul.f32 %v1296, %v1436
        %v1469 = vmul.f32 %v1298, %v1437
        %v1470 = vmul.f32 %v1300, %v1438
        %v1471 = vmul.f32 %v1302, %v1439
        %v1472 = vmul.f32 %v1304, %v1440
        %v1473 = vmul.f32 %v1306, %v1441
        %v1474 = vmul.f32 %v1308, %v1442
        %v1475 = vmul.f32 %v1310, %v1443
        %v1476 = vmul.f32 %v1312, %v1444
        %v1477 = vmul.f32 %v1314, %v1445
        %v1478 = vmul.f32 %v1316, %v1446
        %v1479 = vmul.f32 %v1318, %v1447
        %v1480 = vmul.f32 %v1320, %v1448
        %v1481 = vadd.f32 %v1449, -0.28449672
        %v1482 = vadd.f32 %v1450, -0.28449672
        %v1483 = vadd.f32 %v1451, -0.28449672
        %v1484 = vadd.f32 %v1452, -0.28449672
        %v1485 = vadd.f32 %v1453, -0.28449672
        %v1486 = vadd.f32 %v1454, -0.28449672
        %v1487 = vadd.f32 %v1455, -0.28449672
        %v1488 = vadd.f32 %v1456, -0.28449672
        %v1489 = vadd.f32 %v1457, -0.28449672
        %v1490 = vadd.f32 %v1458, -0.28449672
        %v1491 = vadd.f32 %v1459, -0.28449672
        %v1492 = vadd.f32 %v1460, -0.28449672
        %v1493 = vadd.f32 %v1461, -0.28449672
        %v1494 = vadd.f32 %v1462, -0.28449672
        %v1495 = vadd.f32 %v1463, -0.28449672
        %v1496 = vadd.f32 %v1464, -0.28449672
        %v1497 = vadd.f32 %v1465, -0.28449672
        %v1498 = vadd.f32 %v1466, -0.28449672
        %v1499 = vadd.f32 %v1467, -0.28449672
        %v1500 = vadd.f32 %v1468, -0.28449672
        %v1501 = vadd.f32 %v1469, -0.28449672
        %v1502 = vadd.f32 %v1470, -0.28449672
        %v1503 = vadd.f32 %v1471, -0.28449672
        %v1504 = vadd.f32 %v1472, -0.28449672
        %v1505 = vadd.f32 %v1473, -0.28449672
        %v1506 = vadd.f32 %v1474, -0.28449672
        %v1507 = vadd.f32 %v1475, -0.28449672
        %v1508 = vadd.f32 %v1476, -0.28449672
        %v1509 = vadd.f32 %v1477, -0.28449672
        %v1510 = vadd.f32 %v1478, -0.28449672
        %v1511 = vadd.f32 %v1479, -0.28449672
        %v1512 = vadd.f32 %v1480, -0.28449672
        %v1513 = vmul.f32 %v1258, %v1481
        %v1514 = vmul.f32 %v1260, %v1482
        %v1515 = vmul.f32 %v1262, %v1483
        %v1516 = vmul.f32 %v1264, %v1484
        %v1517 = vmul.f32 %v1266, %v1485
        %v1518 = vmul.f32 %v1268, %v1486
        %v1519 = vmul.f32 %v1270, %v1487
        %v1520 = vmul.f32 %v1272, %v1488
        %v1521 = vmul.f32 %v1274, %v1489
        %v1522 = vmul.f32 %v1276, %v1490
        %v1523 = vmul.f32 %v1278, %v1491
        %v1524 = vmul.f32 %v1280, %v1492
        %v1525 = vmul.f32 %v1282, %v1493
        %v1526 = vmul.f32 %v1284, %v1494
        %v1527 = vmul.f32 %v1286, %v1495
        %v1528 = vmul.f32 %v1288, %v1496
        %v1529 = vmul.f32 %v1290, %v1497
        %v1530 = vmul.f32 %v1292, %v1498
        %v1531 = vmul.f32 %v1294, %v1499
        %v1532 = vmul.f32 %v1296, %v1500
        %v1533 = vmul.f32 %v1298, %v1501
        %v1534 = vmul.f32 %v1300, %v1502
        %v1535 = vmul.f32 %v1302, %v1503
        %v1536 = vmul.f32 %v1304, %v1504
        %v1537 = vmul.f32 %v1306, %v1505
        %v1538 = vmul.f32 %v1308, %v1506
        %v1539 = vmul.f32 %v1310, %v1507
        %v1540 = vmul.f32 %v1312, %v1508
        %v1541 = vmul.f32 %v1314, %v1509
        %v1542 = vmul.f32 %v1316, %v1510
        %v1543 = vmul.f32 %v1318, %v1511
        %v1544 = vmul.f32 %v1320, %v1512
        %v1545 = vadd.f32 %v1513, 0.2548296
        %v1546 = vadd.f32 %v1514, 0.2548296
        %v1547 = vadd.f32 %v1515, 0.2548296
        %v1548 = vadd.f32 %v1516, 0.2548296
        %v1549 = vadd.f32 %v1517, 0.2548296
        %v1550 = vadd.f32 %v1518, 0.2548296
        %v1551 = vadd.f32 %v1519, 0.2548296
        %v1552 = vadd.f32 %v1520, 0.2548296
        %v1553 = vadd.f32 %v1521, 0.2548296
        %v1554 = vadd.f32 %v1522, 0.2548296
        %v1555 = vadd.f32 %v1523, 0.2548296
        %v1556 = vadd.f32 %v1524, 0.2548296
        %v1557 = vadd.f32 %v1525, 0.2548296
        %v1558 = vadd.f32 %v1526, 0.2548296
        %v1559 = vadd.f32 %v1527, 0.2548296
        %v1560 = vadd.f32 %v1528, 0.2548296
        %v1561 = vadd.f32 %v1529, 0.2548296
        %v1562 = vadd.f32 %v1530, 0.2548296
        %v1563 = vadd.f32 %v1531, 0.2548296
        %v1564 = vadd.f32 %v1532, 0.2548296
        %v1565 = vadd.f32 %v1533, 0.2548296
        %v1566 = vadd.f32 %v1534, 0.2548296
        %v1567 = vadd.f32 %v1535, 0.2548296
        %v1568 = vadd.f32 %v1536, 0.2548296
        %v1569 = vadd.f32 %v1537, 0.2548296
        %v1570 = vadd.f32 %v1538, 0.2548296
        %v1571 = vadd.f32 %v1539, 0.2548296
        %v1572 = vadd.f32 %v1540, 0.2548296
        %v1573 = vadd.f32 %v1541, 0.2548296
        %v1574 = vadd.f32 %v1542, 0.2548296
        %v1575 = vadd.f32 %v1543, 0.2548296
        %v1576 = vadd.f32 %v1544, 0.2548296
        %v1577 = vmul.f32 %v1258, %v1545
        %v1578 = vmul.f32 %v1260, %v1546
        %v1579 = vmul.f32 %v1262, %v1547
        %v1580 = vmul.f32 %v1264, %v1548
        %v1581 = vmul.f32 %v1266, %v1549
        %v1582 = vmul.f32 %v1268, %v1550
        %v1583 = vmul.f32 %v1270, %v1551
        %v1584 = vmul.f32 %v1272, %v1552
        %v1585 = vmul.f32 %v1274, %v1553
        %v1586 = vmul.f32 %v1276, %v1554
        %v1587 = vmul.f32 %v1278, %v1555
        %v1588 = vmul.f32 %v1280, %v1556
        %v1589 = vmul.f32 %v1282, %v1557
        %v1590 = vmul.f32 %v1284, %v1558
        %v1591 = vmul.f32 %v1286, %v1559
        %v1592 = vmul.f32 %v1288, %v1560
        %v1593 = vmul.f32 %v1290, %v1561
        %v1594 = vmul.f32 %v1292, %v1562
        %v1595 = vmul.f32 %v1294, %v1563
        %v1596 = vmul.f32 %v1296, %v1564
        %v1597 = vmul.f32 %v1298, %v1565
        %v1598 = vmul.f32 %v1300, %v1566
        %v1599 = vmul.f32 %v1302, %v1567
        %v1600 = vmul.f32 %v1304, %v1568
        %v1601 = vmul.f32 %v1306, %v1569
        %v1602 = vmul.f32 %v1308, %v1570
        %v1603 = vmul.f32 %v1310, %v1571
        %v1604 = vmul.f32 %v1312, %v1572
        %v1605 = vmul.f32 %v1314, %v1573
        %v1606 = vmul.f32 %v1316, %v1574
        %v1607 = vmul.f32 %v1318, %v1575
        %v1608 = vmul.f32 %v1320, %v1576
        %v1609 = vsub.f32 0.0, %v1161
        %v1610 = vsub.f32 0.0, %v1162
        %v1611 = vsub.f32 0.0, %v1163
        %v1612 = vsub.f32 0.0, %v1164
        %v1613 = vsub.f32 0.0, %v1165
        %v1614 = vsub.f32 0.0, %v1166
        %v1615 = vsub.f32 0.0, %v1167
        %v1616 = vsub.f32 0.0, %v1168
        %v1617 = vsub.f32 0.0, %v1169
        %v1618 = vsub.f32 0.0, %v1170
        %v1619 = vsub.f32 0.0, %v1171
        %v1620 = vsub.f32 0.0, %v1172
        %v1621 = vsub.f32 0.0, %v1173
        %v1622 = vsub.f32 0.0, %v1174
        %v1623 = vsub.f32 0.0, %v1175
        %v1624 = vsub.f32 0.0, %v1176
        %v1625 = vsub.f32 0.0, %v1177
        %v1626 = vsub.f32 0.0, %v1178
        %v1627 = vsub.f32 0.0, %v1179
        %v1628 = vsub.f32 0.0, %v1180
        %v1629 = vsub.f32 0.0, %v1181
        %v1630 = vsub.f32 0.0, %v1182
        %v1631 = vsub.f32 0.0, %v1183
        %v1632 = vsub.f32 0.0, %v1184
        %v1633 = vsub.f32 0.0, %v1185
        %v1634 = vsub.f32 0.0, %v1186
        %v1635 = vsub.f32 0.0, %v1187
        %v1636 = vsub.f32 0.0, %v1188
        %v1637 = vsub.f32 0.0, %v1189
        %v1638 = vsub.f32 0.0, %v1190
        %v1639 = vsub.f32 0.0, %v1191
        %v1640 = vsub.f32 0.0, %v1192
        %v1641 = vmul.f32 %v1609, %v1161
        %v1642 = vmul.f32 %v1610, %v1162
        %v1643 = vmul.f32 %v1611, %v1163
        %v1644 = vmul.f32 %v1612, %v1164
        %v1645 = vmul.f32 %v1613, %v1165
        %v1646 = vmul.f32 %v1614, %v1166
        %v1647 = vmul.f32 %v1615, %v1167
        %v1648 = vmul.f32 %v1616, %v1168
        %v1649 = vmul.f32 %v1617, %v1169
        %v1650 = vmul.f32 %v1618, %v1170
        %v1651 = vmul.f32 %v1619, %v1171
        %v1652 = vmul.f32 %v1620, %v1172
        %v1653 = vmul.f32 %v1621, %v1173
        %v1654 = vmul.f32 %v1622, %v1174
        %v1655 = vmul.f32 %v1623, %v1175
        %v1656 = vmul.f32 %v1624, %v1176
        %v1657 = vmul.f32 %v1625, %v1177
        %v1658 = vmul.f32 %v1626, %v1178
        %v1659 = vmul.f32 %v1627, %v1179
        %v1660 = vmul.f32 %v1628, %v1180
        %v1661 = vmul.f32 %v1629, %v1181
        %v1662 = vmul.f32 %v1630, %v1182
        %v1663 = vmul.f32 %v1631, %v1183
        %v1664 = vmul.f32 %v1632, %v1184
        %v1665 = vmul.f32 %v1633, %v1185
        %v1666 = vmul.f32 %v1634, %v1186
        %v1667 = vmul.f32 %v1635, %v1187
        %v1668 = vmul.f32 %v1636, %v1188
        %v1669 = vmul.f32 %v1637, %v1189
        %v1670 = vmul.f32 %v1638, %v1190
        %v1671 = vmul.f32 %v1639, %v1191
        %v1672 = vmul.f32 %v1640, %v1192
        %v1673 = vmul.f32 %v1641, 1.442695
        %v1674 = vpow.pop %v1673
        %v1675 = vmul.f32 %v1642, 1.442695
        %v1676 = vpow.pop %v1675
        %v1677 = vmul.f32 %v1643, 1.442695
        %v1678 = vpow.pop %v1677
        %v1679 = vmul.f32 %v1644, 1.442695
        %v1680 = vpow.pop %v1679
        %v1681 = vmul.f32 %v1645, 1.442695
        %v1682 = vpow.pop %v1681
        %v1683 = vmul.f32 %v1646, 1.442695
        %v1684 = vpow.pop %v1683
        %v1685 = vmul.f32 %v1647, 1.442695
        %v1686 = vpow.pop %v1685
        %v1687 = vmul.f32 %v1648, 1.442695
        %v1688 = vpow.pop %v1687
        %v1689 = vmul.f32 %v1649, 1.442695
        %v1690 = vpow.pop %v1689
        %v1691 = vmul.f32 %v1650, 1.442695
        %v1692 = vpow.pop %v1691
        %v1693 = vmul.f32 %v1651, 1.442695
        %v1694 = vpow.pop %v1693
        %v1695 = vmul.f32 %v1652, 1.442695
        %v1696 = vpow.pop %v1695
        %v1697 = vmul.f32 %v1653, 1.442695
        %v1698 = vpow.pop %v1697
        %v1699 = vmul.f32 %v1654, 1.442695
        %v1700 = vpow.pop %v1699
        %v1701 = vmul.f32 %v1655, 1.442695
        %v1702 = vpow.pop %v1701
        %v1703 = vmul.f32 %v1656, 1.442695
        %v1704 = vpow.pop %v1703
        %v1705 = vmul.f32 %v1657, 1.442695
        %v1706 = vpow.pop %v1705
        %v1707 = vmul.f32 %v1658, 1.442695
        %v1708 = vpow.pop %v1707
        %v1709 = vmul.f32 %v1659, 1.442695
        %v1710 = vpow.pop %v1709
        %v1711 = vmul.f32 %v1660, 1.442695
        %v1712 = vpow.pop %v1711
        %v1713 = vmul.f32 %v1661, 1.442695
        %v1714 = vpow.pop %v1713
        %v1715 = vmul.f32 %v1662, 1.442695
        %v1716 = vpow.pop %v1715
        %v1717 = vmul.f32 %v1663, 1.442695
        %v1718 = vpow.pop %v1717
        %v1719 = vmul.f32 %v1664, 1.442695
        %v1720 = vpow.pop %v1719
        %v1721 = vmul.f32 %v1665, 1.442695
        %v1722 = vpow.pop %v1721
        %v1723 = vmul.f32 %v1666, 1.442695
        %v1724 = vpow.pop %v1723
        %v1725 = vmul.f32 %v1667, 1.442695
        %v1726 = vpow.pop %v1725
        %v1727 = vmul.f32 %v1668, 1.442695
        %v1728 = vpow.pop %v1727
        %v1729 = vmul.f32 %v1669, 1.442695
        %v1730 = vpow.pop %v1729
        %v1731 = vmul.f32 %v1670, 1.442695
        %v1732 = vpow.pop %v1731
        %v1733 = vmul.f32 %v1671, 1.442695
        %v1734 = vpow.pop %v1733
        %v1735 = vmul.f32 %v1672, 1.442695
        %v1736 = vpow.pop %v1735
        %v1737 = vmul.f32 %v1577, %v1674
        %v1738 = vmul.f32 %v1578, %v1676
        %v1739 = vmul.f32 %v1579, %v1678
        %v1740 = vmul.f32 %v1580, %v1680
        %v1741 = vmul.f32 %v1581, %v1682
        %v1742 = vmul.f32 %v1582, %v1684
        %v1743 = vmul.f32 %v1583, %v1686
        %v1744 = vmul.f32 %v1584, %v1688
        %v1745 = vmul.f32 %v1585, %v1690
        %v1746 = vmul.f32 %v1586, %v1692
        %v1747 = vmul.f32 %v1587, %v1694
        %v1748 = vmul.f32 %v1588, %v1696
        %v1749 = vmul.f32 %v1589, %v1698
        %v1750 = vmul.f32 %v1590, %v1700
        %v1751 = vmul.f32 %v1591, %v1702
        %v1752 = vmul.f32 %v1592, %v1704
        %v1753 = vmul.f32 %v1593, %v1706
        %v1754 = vmul.f32 %v1594, %v1708
        %v1755 = vmul.f32 %v1595, %v1710
        %v1756 = vmul.f32 %v1596, %v1712
        %v1757 = vmul.f32 %v1597, %v1714
        %v1758 = vmul.f32 %v1598, %v1716
        %v1759 = vmul.f32 %v1599, %v1718
        %v1760 = vmul.f32 %v1600, %v1720
        %v1761 = vmul.f32 %v1601, %v1722
        %v1762 = vmul.f32 %v1602, %v1724
        %v1763 = vmul.f32 %v1603, %v1726
        %v1764 = vmul.f32 %v1604, %v1728
        %v1765 = vmul.f32 %v1605, %v1730
        %v1766 = vmul.f32 %v1606, %v1732
        %v1767 = vmul.f32 %v1607, %v1734
        %v1768 = vmul.f32 %v1608, %v1736
        %v1769 = vsub.f32 1.0, %v1737
        %v1770 = vsub.f32 1.0, %v1738
        %v1771 = vsub.f32 1.0, %v1739
        %v1772 = vsub.f32 1.0, %v1740
        %v1773 = vsub.f32 1.0, %v1741
        %v1774 = vsub.f32 1.0, %v1742
        %v1775 = vsub.f32 1.0, %v1743
        %v1776 = vsub.f32 1.0, %v1744
        %v1777 = vsub.f32 1.0, %v1745
        %v1778 = vsub.f32 1.0, %v1746
        %v1779 = vsub.f32 1.0, %v1747
        %v1780 = vsub.f32 1.0, %v1748
        %v1781 = vsub.f32 1.0, %v1749
        %v1782 = vsub.f32 1.0, %v1750
        %v1783 = vsub.f32 1.0, %v1751
        %v1784 = vsub.f32 1.0, %v1752
        %v1785 = vsub.f32 1.0, %v1753
        %v1786 = vsub.f32 1.0, %v1754
        %v1787 = vsub.f32 1.0, %v1755
        %v1788 = vsub.f32 1.0, %v1756
        %v1789 = vsub.f32 1.0, %v1757
        %v1790 = vsub.f32 1.0, %v1758
        %v1791 = vsub.f32 1.0, %v1759
        %v1792 = vsub.f32 1.0, %v1760
        %v1793 = vsub.f32 1.0, %v1761
        %v1794 = vsub.f32 1.0, %v1762
        %v1795 = vsub.f32 1.0, %v1763
        %v1796 = vsub.f32 1.0, %v1764
        %v1797 = vsub.f32 1.0, %v1765
        %v1798 = vsub.f32 1.0, %v1766
        %v1799 = vsub.f32 1.0, %v1767
        %v1800 = vsub.f32 1.0, %v1768
        %vm1801 = vcmp.ge.f32.partialorder %v1129, 0.0
        %vm1802 = vcmp.ge.f32.partialorder %v1130, 0.0
        %vm1803 = vcmp.ge.f32.partialorder %v1131, 0.0
        %vm1804 = vcmp.ge.f32.partialorder %v1132, 0.0
        %vm1805 = vcmp.ge.f32.partialorder %v1133, 0.0
        %vm1806 = vcmp.ge.f32.partialorder %v1134, 0.0
        %vm1807 = vcmp.ge.f32.partialorder %v1135, 0.0
        %vm1808 = vcmp.ge.f32.partialorder %v1136, 0.0
        %vm1809 = vcmp.ge.f32.partialorder %v1137, 0.0
        %vm1810 = vcmp.ge.f32.partialorder %v1138, 0.0
        %vm1811 = vcmp.ge.f32.partialorder %v1139, 0.0
        %vm1812 = vcmp.ge.f32.partialorder %v1140, 0.0
        %vm1813 = vcmp.ge.f32.partialorder %v1141, 0.0
        %vm1814 = vcmp.ge.f32.partialorder %v1142, 0.0
        %vm1815 = vcmp.ge.f32.partialorder %v1143, 0.0
        %vm1816 = vcmp.ge.f32.partialorder %v1144, 0.0
        %vm1817 = vcmp.ge.f32.partialorder %v1145, 0.0
        %vm1818 = vcmp.ge.f32.partialorder %v1146, 0.0
        %vm1819 = vcmp.ge.f32.partialorder %v1147, 0.0
        %vm1820 = vcmp.ge.f32.partialorder %v1148, 0.0
        %vm1821 = vcmp.ge.f32.partialorder %v1149, 0.0
        %vm1822 = vcmp.ge.f32.partialorder %v1150, 0.0
        %vm1823 = vcmp.ge.f32.partialorder %v1151, 0.0
        %vm1824 = vcmp.ge.f32.partialorder %v1152, 0.0
        %vm1825 = vcmp.ge.f32.partialorder %v1153, 0.0
        %vm1826 = vcmp.ge.f32.partialorder %v1154, 0.0
        %vm1827 = vcmp.ge.f32.partialorder %v1155, 0.0
        %vm1828 = vcmp.ge.f32.partialorder %v1156, 0.0
        %vm1829 = vcmp.ge.f32.partialorder %v1157, 0.0
        %vm1830 = vcmp.ge.f32.partialorder %v1158, 0.0
        %vm1831 = vcmp.ge.f32.partialorder %v1159, 0.0
        %vm1832 = vcmp.ge.f32.partialorder %v1160, 0.0
        %v1833 = vsub.f32 0.0, %v1769
        %v1834 = vsub.f32 0.0, %v1770
        %v1835 = vsub.f32 0.0, %v1771
        %v1836 = vsub.f32 0.0, %v1772
        %v1837 = vsub.f32 0.0, %v1773
        %v1838 = vsub.f32 0.0, %v1774
        %v1839 = vsub.f32 0.0, %v1775
        %v1840 = vsub.f32 0.0, %v1776
        %v1841 = vsub.f32 0.0, %v1777
        %v1842 = vsub.f32 0.0, %v1778
        %v1843 = vsub.f32 0.0, %v1779
        %v1844 = vsub.f32 0.0, %v1780
        %v1845 = vsub.f32 0.0, %v1781
        %v1846 = vsub.f32 0.0, %v1782
        %v1847 = vsub.f32 0.0, %v1783
        %v1848 = vsub.f32 0.0, %v1784
        %v1849 = vsub.f32 0.0, %v1785
        %v1850 = vsub.f32 0.0, %v1786
        %v1851 = vsub.f32 0.0, %v1787
        %v1852 = vsub.f32 0.0, %v1788
        %v1853 = vsub.f32 0.0, %v1789
        %v1854 = vsub.f32 0.0, %v1790
        %v1855 = vsub.f32 0.0, %v1791
        %v1856 = vsub.f32 0.0, %v1792
        %v1857 = vsub.f32 0.0, %v1793
        %v1858 = vsub.f32 0.0, %v1794
        %v1859 = vsub.f32 0.0, %v1795
        %v1860 = vsub.f32 0.0, %v1796
        %v1861 = vsub.f32 0.0, %v1797
        %v1862 = vsub.f32 0.0, %v1798
        %v1863 = vsub.f32 0.0, %v1799
        %v1864 = vsub.f32 0.0, %v1800
        %v1865 = vsel %vm1801, %v1769, %v1833
        %v1866 = vsel %vm1802, %v1770, %v1834
        %v1867 = vsel %vm1803, %v1771, %v1835
        %v1868 = vsel %vm1804, %v1772, %v1836
        %v1869 = vsel %vm1805, %v1773, %v1837
        %v1870 = vsel %vm1806, %v1774, %v1838
        %v1871 = vsel %vm1807, %v1775, %v1839
        %v1872 = vsel %vm1808, %v1776, %v1840
        %v1873 = vsel %vm1809, %v1777, %v1841
        %v1874 = vsel %vm1810, %v1778, %v1842
        %v1875 = vsel %vm1811, %v1779, %v1843
        %v1876 = vsel %vm1812, %v1780, %v1844
        %v1877 = vsel %vm1813, %v1781, %v1845
        %v1878 = vsel %vm1814, %v1782, %v1846
        %v1879 = vsel %vm1815, %v1783, %v1847
        %v1880 = vsel %vm1816, %v1784, %v1848
        %v1881 = vsel %vm1817, %v1785, %v1849
        %v1882 = vsel %vm1818, %v1786, %v1850
        %v1883 = vsel %vm1819, %v1787, %v1851
        %v1884 = vsel %vm1820, %v1788, %v1852
        %v1885 = vsel %vm1821, %v1789, %v1853
        %v1886 = vsel %vm1822, %v1790, %v1854
        %v1887 = vsel %vm1823, %v1791, %v1855
        %v1888 = vsel %vm1824, %v1792, %v1856
        %v1889 = vsel %vm1825, %v1793, %v1857
        %v1890 = vsel %vm1826, %v1794, %v1858
        %v1891 = vsel %vm1827, %v1795, %v1859
        %v1892 = vsel %vm1828, %v1796, %v1860
        %v1893 = vsel %vm1829, %v1797, %v1861
        %v1894 = vsel %vm1830, %v1798, %v1862
        %v1895 = vsel %vm1831, %v1799, %v1863
        %v1896 = vsel %vm1832, %v1800, %v1864
        %v1897 = vmul.f32 %v904, 0.5
        %v1898 = vmul.f32 %v907, 0.5
        %v1899 = vmul.f32 %v912, 0.5
        %v1900 = vmul.f32 %v915, 0.5
        %v1901 = vmul.f32 %v920, 0.5
        %v1902 = vmul.f32 %v923, 0.5
        %v1903 = vmul.f32 %v928, 0.5
        %v1904 = vmul.f32 %v931, 0.5
        %v1905 = vmul.f32 %v969, 0.5
        %v1906 = vmul.f32 %v972, 0.5
        %v1907 = vmul.f32 %v977, 0.5
        %v1908 = vmul.f32 %v980, 0.5
        %v1909 = vmul.f32 %v985, 0.5
        %v1910 = vmul.f32 %v988, 0.5
        %v1911 = vmul.f32 %v993, 0.5
        %v1912 = vmul.f32 %v996, 0.5
        %v1913 = vmul.f32 %v1034, 0.5
        %v1914 = vmul.f32 %v1037, 0.5
        %v1915 = vmul.f32 %v1042, 0.5
        %v1916 = vmul.f32 %v1045, 0.5
        %v1917 = vmul.f32 %v1050, 0.5
        %v1918 = vmul.f32 %v1053, 0.5
        %v1919 = vmul.f32 %v1058, 0.5
        %v1920 = vmul.f32 %v1061, 0.5
        %v1921 = vmul.f32 %v1099, 0.5
        %v1922 = vmul.f32 %v1102, 0.5
        %v1923 = vmul.f32 %v1107, 0.5
        %v1924 = vmul.f32 %v1110, 0.5
        %v1925 = vmul.f32 %v1115, 0.5
        %v1926 = vmul.f32 %v1118, 0.5
        %v1927 = vmul.f32 %v1123, 0.5
        %v1928 = vmul.f32 %v1126, 0.5
        %v1929 = vadd.f32 %v1865, 1.0
        %v1930 = vadd.f32 %v1866, 1.0
        %v1931 = vadd.f32 %v1867, 1.0
        %v1932 = vadd.f32 %v1868, 1.0
        %v1933 = vadd.f32 %v1869, 1.0
        %v1934 = vadd.f32 %v1870, 1.0
        %v1935 = vadd.f32 %v1871, 1.0
        %v1936 = vadd.f32 %v1872, 1.0
        %v1937 = vadd.f32 %v1873, 1.0
        %v1938 = vadd.f32 %v1874, 1.0
        %v1939 = vadd.f32 %v1875, 1.0
        %v1940 = vadd.f32 %v1876, 1.0
        %v1941 = vadd.f32 %v1877, 1.0
        %v1942 = vadd.f32 %v1878, 1.0
        %v1943 = vadd.f32 %v1879, 1.0
        %v1944 = vadd.f32 %v1880, 1.0
        %v1945 = vadd.f32 %v1881, 1.0
        %v1946 = vadd.f32 %v1882, 1.0
        %v1947 = vadd.f32 %v1883, 1.0
        %v1948 = vadd.f32 %v1884, 1.0
        %v1949 = vadd.f32 %v1885, 1.0
        %v1950 = vadd.f32 %v1886, 1.0
        %v1951 = vadd.f32 %v1887, 1.0
        %v1952 = vadd.f32 %v1888, 1.0
        %v1953 = vadd.f32 %v1889, 1.0
        %v1954 = vadd.f32 %v1890, 1.0
        %v1955 = vadd.f32 %v1891, 1.0
        %v1956 = vadd.f32 %v1892, 1.0
        %v1957 = vadd.f32 %v1893, 1.0
        %v1958 = vadd.f32 %v1894, 1.0
        %v1959 = vadd.f32 %v1895, 1.0
        %v1960 = vadd.f32 %v1896, 1.0
        %v1961 = vmul.f32 %v1897, %v1929
        %v1962 = vmul.f32 %v1898, %v1930
        %v1963 = vmul.f32 %v1899, %v1931
        %v1964 = vmul.f32 %v1900, %v1932
        %v1965 = vmul.f32 %v1901, %v1933
        %v1966 = vmul.f32 %v1902, %v1934
        %v1967 = vmul.f32 %v1903, %v1935
        %v1968 = vmul.f32 %v1904, %v1936
        %v1969 = vmul.f32 %v1905, %v1937
        %v1970 = vmul.f32 %v1906, %v1938
        %v1971 = vmul.f32 %v1907, %v1939
        %v1972 = vmul.f32 %v1908, %v1940
        %v1973 = vmul.f32 %v1909, %v1941
        %v1974 = vmul.f32 %v1910, %v1942
        %v1975 = vmul.f32 %v1911, %v1943
        %v1976 = vmul.f32 %v1912, %v1944
        %v1977 = vmul.f32 %v1913, %v1945
        %v1978 = vmul.f32 %v1914, %v1946
        %v1979 = vmul.f32 %v1915, %v1947
        %v1980 = vmul.f32 %v1916, %v1948
        %v1981 = vmul.f32 %v1917, %v1949
        %v1982 = vmul.f32 %v1918, %v1950
        %v1983 = vmul.f32 %v1919, %v1951
        %v1984 = vmul.f32 %v1920, %v1952
        %v1985 = vmul.f32 %v1921, %v1953
        %v1986 = vmul.f32 %v1922, %v1954
        %v1987 = vmul.f32 %v1923, %v1955
        %v1988 = vmul.f32 %v1924, %v1956
        %v1989 = vmul.f32 %v1925, %v1957
        %v1990 = vmul.f32 %v1926, %v1958
        %v1991 = vmul.f32 %v1927, %v1959
        %v1992 = vmul.f32 %v1928, %v1960
        %v1993 = vld [vmem:[#allocation12] sm:$0xf]
        %v1994 = vld [vmem:[#allocation12 + $0x4] sm:$0xf]
        %v1995 = vpack.c.bf16 %v1962, %v1961
        %v1996 = vpack.c.bf16 %v1964, %v1963
        %v1997 = vpack.c.bf16 %v1966, %v1965
        %v1998 = vpack.c.bf16 %v1968, %v1967
        %v1999 = vpack.c.bf16 %v1970, %v1969
        %v2000 = vpack.c.bf16 %v1972, %v1971
        %v2001 = vpack.c.bf16 %v1974, %v1973
        %v2002 = vpack.c.bf16 %v1976, %v1975
        %v2003 = vpack.c.bf16 %v1978, %v1977
        %v2004 = vpack.c.bf16 %v1980, %v1979
        %v2005 = vpack.c.bf16 %v1982, %v1981
        %v2006 = vpack.c.bf16 %v1984, %v1983
        %v2007 = vpack.c.bf16 %v1986, %v1985
        %v2008 = vpack.c.bf16 %v1988, %v1987
        %v2009 = vpack.c.bf16 %v1990, %v1989
        %v2010 = vpack.c.bf16 %v1992, %v1991
        %v2011 = vld [vmem:[#allocation14] sm:$0xff]
        %v2012 = vld [vmem:[#allocation14 + $0x8] sm:$0xff]
        %2014 = vset.pattern.permute.xlu0 0
        %2015 = vperm.xlu0 %2014, %v2011
        %v2016 = vpop.permute.xlu0 %2015
        %2019 = vset.pattern.permute.xlu0 0
        %2020 = vperm.xlu0 %2019, %v2012
        %v2021 = vpop.permute.xlu0 %2020
        %v2025 = vunpack.c.l.b16 %v1993
        %v2026 = vunpack.c.l.b16 %v1994
        %v2027 = vpack.c.b16 %v2026, %v2025
        %vm2028 = vcmask 523264
        %v2030 = vsel %vm2028, %v2027, 0
        %2032 = vmatprep.subr.bf16.mxu0 0
        %2033 = vmatpush1.bf16.msra.mxu0 %v1995
        %2034 = vmatprep.subr.bf16.mxu0 0
        %2035 = vmatpush1.bf16.msra.mxu0 %v1996
        %2036 = vmatprep.subr.bf16.mxu0 0
        %2037 = vmatpush1.bf16.msra.mxu0 %v1997
        %2038 = vmatprep.subr.bf16.mxu0 0
        %2039 = vmatpush1.bf16.msra.mxu0 %v1998
        %2040 = vmatprep.subr.bf16.mxu0 0
        %2041 = vmatpush1.bf16.msra.mxu0 0
        %2042 = vmatprep.subr.bf16.mxu0 0
        %2043 = vmatpush1.bf16.msra.mxu0 0
        %2044 = vmatprep.subr.bf16.mxu0 0
        %2045 = vmatpush1.bf16.msra.mxu0 0
        %2046 = vmatprep.subr.bf16.mxu0 0
        %2047 = vmatpush1.bf16.msra.mxu0 0
        %2048 = vmatprep.subr.bf16.mxu0 0
        %2049 = vmatpush1.bf16.msra.mxu0 0
        %2050 = vmatprep.subr.bf16.mxu0 0
        %2051 = vmatpush1.bf16.msra.mxu0 0
        %2052 = vmatprep.subr.bf16.mxu0 0
        %2053 = vmatpush1.bf16.msra.mxu0 0
        %2054 = vmatprep.subr.bf16.mxu0 0
        %2055 = vmatpush1.bf16.msra.mxu0 0
        %2056 = vmatprep.subr.bf16.mxu0 0
        %2057 = vmatpush1.bf16.msra.mxu0 0
        %2058 = vmatprep.subr.bf16.mxu0 0
        %2059 = vmatpush1.bf16.msra.mxu0 0
        %2060 = vmatprep.subr.bf16.mxu0 0
        %2061 = vmatpush1.bf16.msra.mxu0 0
        %2062 = vmatprep.subr.bf16.mxu0 0
        %2063 = vmatpush1.bf16.msra.mxu0 0
        %2064 = vmatprep.mubr.bf16.mxu0 0
        %2065 = vmatmul.mubr.bf16.gmra.mrb[0].mxu0 %v2030
        %v2066 = vpop.f32.mrb[0].mxu0
        %v2067 = vadd.f32 %v2016, %v2066
        %v2068 = vpop.f32.mrb[0].mxu0
        %v2069 = vpop.f32.mrb[0].mxu0
        %v2070 = vadd.f32 %v2021, %v2069
        %v2071 = vpop.f32.mrb[0].mxu0
        %2072 = vdwg.mxu0
        %2073 = vmatprep.subr.bf16.mxu0 0
        %2074 = vmatpush1.bf16.msra.mxu0 %v1999
        %2075 = vmatprep.subr.bf16.mxu0 0
        %2076 = vmatpush1.bf16.msra.mxu0 %v2000
        %2077 = vmatprep.subr.bf16.mxu0 0
        %2078 = vmatpush1.bf16.msra.mxu0 %v2001
        %2079 = vmatprep.subr.bf16.mxu0 0
        %2080 = vmatpush1.bf16.msra.mxu0 %v2002
        %2081 = vmatprep.subr.bf16.mxu0 0
        %2082 = vmatpush1.bf16.msra.mxu0 0
        %2083 = vmatprep.subr.bf16.mxu0 0
        %2084 = vmatpush1.bf16.msra.mxu0 0
        %2085 = vmatprep.subr.bf16.mxu0 0
        %2086 = vmatpush1.bf16.msra.mxu0 0
        %2087 = vmatprep.subr.bf16.mxu0 0
        %2088 = vmatpush1.bf16.msra.mxu0 0
        %2089 = vmatprep.subr.bf16.mxu0 0
        %2090 = vmatpush1.bf16.msra.mxu0 0
        %2091 = vmatprep.subr.bf16.mxu0 0
        %2092 = vmatpush1.bf16.msra.mxu0 0
        %2093 = vmatprep.subr.bf16.mxu0 0
        %2094 = vmatpush1.bf16.msra.mxu0 0
        %2095 = vmatprep.subr.bf16.mxu0 0
        %2096 = vmatpush1.bf16.msra.mxu0 0
        %2097 = vmatprep.subr.bf16.mxu0 0
        %2098 = vmatpush1.bf16.msra.mxu0 0
        %2099 = vmatprep.subr.bf16.mxu0 0
        %2100 = vmatpush1.bf16.msra.mxu0 0
        %2101 = vmatprep.subr.bf16.mxu0 0
        %2102 = vmatpush1.bf16.msra.mxu0 0
        %2103 = vmatprep.subr.bf16.mxu0 0
        %2104 = vmatpush1.bf16.msra.mxu0 0
        %2105 = vmatprep.mubr.bf16.mxu0 0
        %2106 = vmatmul.mubr.bf16.gmra.mrb[0].mxu0 %v2030
        %v2107 = vpop.f32.mrb[0].mxu0
        %v2108 = vadd.f32 %v2016, %v2107
        %v2109 = vpop.f32.mrb[0].mxu0
        %v2110 = vpop.f32.mrb[0].mxu0
        %v2111 = vadd.f32 %v2021, %v2110
        %v2112 = vpop.f32.mrb[0].mxu0
        %2113 = vdwg.mxu0
        %2114 = vmatprep.subr.bf16.mxu0 0
        %2115 = vmatpush1.bf16.msra.mxu0 %v2003
        %2116 = vmatprep.subr.bf16.mxu0 0
        %2117 = vmatpush1.bf16.msra.mxu0 %v2004
        %2118 = vmatprep.subr.bf16.mxu0 0
        %2119 = vmatpush1.bf16.msra.mxu0 %v2005
        %2120 = vmatprep.subr.bf16.mxu0 0
        %2121 = vmatpush1.bf16.msra.mxu0 %v2006
        %2122 = vmatprep.subr.bf16.mxu0 0
        %2123 = vmatpush1.bf16.msra.mxu0 0
        %2124 = vmatprep.subr.bf16.mxu0 0
        %2125 = vmatpush1.bf16.msra.mxu0 0
        %2126 = vmatprep.subr.bf16.mxu0 0
        %2127 = vmatpush1.bf16.msra.mxu0 0
        %2128 = vmatprep.subr.bf16.mxu0 0
        %2129 = vmatpush1.bf16.msra.mxu0 0
        %2130 = vmatprep.subr.bf16.mxu0 0
        %2131 = vmatpush1.bf16.msra.mxu0 0
        %2132 = vmatprep.subr.bf16.mxu0 0
        %2133 = vmatpush1.bf16.msra.mxu0 0
        %2134 = vmatprep.subr.bf16.mxu0 0
        %2135 = vmatpush1.bf16.msra.mxu0 0
        %2136 = vmatprep.subr.bf16.mxu0 0
        %2137 = vmatpush1.bf16.msra.mxu0 0
        %2138 = vmatprep.subr.bf16.mxu0 0
        %2139 = vmatpush1.bf16.msra.mxu0 0
        %2140 = vmatprep.subr.bf16.mxu0 0
        %2141 = vmatpush1.bf16.msra.mxu0 0
        %2142 = vmatprep.subr.bf16.mxu0 0
        %2143 = vmatpush1.bf16.msra.mxu0 0
        %2144 = vmatprep.subr.bf16.mxu0 0
        %2145 = vmatpush1.bf16.msra.mxu0 0
        %2146 = vmatprep.mubr.bf16.mxu0 0
        %2147 = vmatmul.mubr.bf16.gmra.mrb[0].mxu0 %v2030
        %v2148 = vpop.f32.mrb[0].mxu0
        %v2149 = vadd.f32 %v2016, %v2148
        %v2150 = vpop.f32.mrb[0].mxu0
        %v2151 = vpop.f32.mrb[0].mxu0
        %v2152 = vadd.f32 %v2021, %v2151
        %v2153 = vpop.f32.mrb[0].mxu0
        %2154 = vdwg.mxu0
        %2155 = vmatprep.subr.bf16.mxu0 0
        %2156 = vmatpush1.bf16.msra.mxu0 %v2007
        %2157 = vmatprep.subr.bf16.mxu0 0
        %2158 = vmatpush1.bf16.msra.mxu0 %v2008
        %2159 = vmatprep.subr.bf16.mxu0 0
        %2160 = vmatpush1.bf16.msra.mxu0 %v2009
        %2161 = vmatprep.subr.bf16.mxu0 0
        %2162 = vmatpush1.bf16.msra.mxu0 %v2010
        %2163 = vmatprep.subr.bf16.mxu0 0
        %2164 = vmatpush1.bf16.msra.mxu0 0
        %2165 = vmatprep.subr.bf16.mxu0 0
        %2166 = vmatpush1.bf16.msra.mxu0 0
        %2167 = vmatprep.subr.bf16.mxu0 0
        %2168 = vmatpush1.bf16.msra.mxu0 0
        %2169 = vmatprep.subr.bf16.mxu0 0
        %2170 = vmatpush1.bf16.msra.mxu0 0
        %2171 = vmatprep.subr.bf16.mxu0 0
        %2172 = vmatpush1.bf16.msra.mxu0 0
        %2173 = vmatprep.subr.bf16.mxu0 0
        %2174 = vmatpush1.bf16.msra.mxu0 0
        %2175 = vmatprep.subr.bf16.mxu0 0
        %2176 = vmatpush1.bf16.msra.mxu0 0
        %2177 = vmatprep.subr.bf16.mxu0 0
        %2178 = vmatpush1.bf16.msra.mxu0 0
        %2179 = vmatprep.subr.bf16.mxu0 0
        %2180 = vmatpush1.bf16.msra.mxu0 0
        %2181 = vmatprep.subr.bf16.mxu0 0
        %2182 = vmatpush1.bf16.msra.mxu0 0
        %2183 = vmatprep.subr.bf16.mxu0 0
        %2184 = vmatpush1.bf16.msra.mxu0 0
        %2185 = vmatprep.subr.bf16.mxu0 0
        %2186 = vmatpush1.bf16.msra.mxu0 0
        %2187 = vmatprep.mubr.bf16.mxu0 0
        %2188 = vmatmul.mubr.bf16.gmra.mrb[0].mxu0 %v2030
        %v2189 = vpop.f32.mrb[0].mxu0
        %v2190 = vadd.f32 %v2016, %v2189
        %v2191 = vpop.f32.mrb[0].mxu0
        %v2192 = vpop.f32.mrb[0].mxu0
        %v2193 = vadd.f32 %v2021, %v2192
        %v2194 = vpop.f32.mrb[0].mxu0
        %2195 = vdwg.mxu0
        %v2196 = vadd.f32 %v625, %v2067
        %v2197 = vadd.f32 %v626, %v2070
        %v2198 = vadd.f32 %v627, %v2108
        %v2199 = vadd.f32 %v628, %v2111
        %v2200 = vadd.f32 %v629, %v2149
        %v2201 = vadd.f32 %v630, %v2152
        %v2202 = vadd.f32 %v631, %v2190
        %v2203 = vadd.f32 %v632, %v2193
        %v2204 = vld [vmem:[#allocation15] sm:$0x1]
        %v2205 = vld [vmem:[#allocation17] sm:$0x1]
        %2206 = vadd.xlane.f32.xlu0 %v2196
        %v2207 = vpop.xlane.xlu0 %2206
        %2208 = vadd.xlane.f32.xlu0 %v2197
        %v2209 = vpop.xlane.xlu0 %2208
        %2210 = vadd.xlane.f32.xlu0 %v2198
        %v2211 = vpop.xlane.xlu0 %2210
        %2212 = vadd.xlane.f32.xlu0 %v2199
        %v2213 = vpop.xlane.xlu0 %2212
        %2214 = vadd.xlane.f32.xlu0 %v2200
        %v2215 = vpop.xlane.xlu0 %2214
        %2216 = vadd.xlane.f32.xlu0 %v2201
        %v2217 = vpop.xlane.xlu0 %2216
        %2218 = vadd.xlane.f32.xlu0 %v2202
        %v2219 = vpop.xlane.xlu0 %2218
        %2220 = vadd.xlane.f32.xlu0 %v2203
        %v2221 = vpop.xlane.xlu0 %2220
        %v2222 = vmul.f32 %v2207, %v651
        %v2223 = vmul.f32 %v2209, %v651
        %v2224 = vmul.f32 %v2211, %v651
        %v2225 = vmul.f32 %v2213, %v651
        %v2226 = vmul.f32 %v2215, %v651
        %v2227 = vmul.f32 %v2217, %v651
        %v2228 = vmul.f32 %v2219, %v651
        %v2229 = vmul.f32 %v2221, %v651
        %v2230 = vmul.f32 %v2196, %v2196
        %v2231 = vmul.f32 %v2197, %v2197
        %v2232 = vmul.f32 %v2198, %v2198
        %v2233 = vmul.f32 %v2199, %v2199
        %v2234 = vmul.f32 %v2200, %v2200
        %v2235 = vmul.f32 %v2201, %v2201
        %v2236 = vmul.f32 %v2202, %v2202
        %v2237 = vmul.f32 %v2203, %v2203
        %2238 = vadd.xlane.f32.xlu0 %v2230
        %v2239 = vpop.xlane.xlu0 %2238
        %2240 = vadd.xlane.f32.xlu0 %v2231
        %v2241 = vpop.xlane.xlu0 %2240
        %2242 = vadd.xlane.f32.xlu0 %v2232
        %v2243 = vpop.xlane.xlu0 %2242
        %2244 = vadd.xlane.f32.xlu0 %v2233
        %v2245 = vpop.xlane.xlu0 %2244
        %2246 = vadd.xlane.f32.xlu0 %v2234
        %v2247 = vpop.xlane.xlu0 %2246
        %2248 = vadd.xlane.f32.xlu0 %v2235
        %v2249 = vpop.xlane.xlu0 %2248
        %2250 = vadd.xlane.f32.xlu0 %v2236
        %v2251 = vpop.xlane.xlu0 %2250
        %2252 = vadd.xlane.f32.xlu0 %v2237
        %v2253 = vpop.xlane.xlu0 %2252
        %v2254 = vmul.f32 %v2239, %v651
        %v2255 = vmul.f32 %v2241, %v651
        %v2256 = vmul.f32 %v2243, %v651
        %v2257 = vmul.f32 %v2245, %v651
        %v2258 = vmul.f32 %v2247, %v651
        %v2259 = vmul.f32 %v2249, %v651
        %v2260 = vmul.f32 %v2251, %v651
        %v2261 = vmul.f32 %v2253, %v651
        %v2262 = vmul.f32 %v2222, %v2222
        %v2263 = vmul.f32 %v2223, %v2223
        %v2264 = vmul.f32 %v2224, %v2224
        %v2265 = vmul.f32 %v2225, %v2225
        %v2266 = vmul.f32 %v2226, %v2226
        %v2267 = vmul.f32 %v2227, %v2227
        %v2268 = vmul.f32 %v2228, %v2228
        %v2269 = vmul.f32 %v2229, %v2229
        %v2270 = vsub.f32 %v2254, %v2262
        %v2271 = vsub.f32 %v2255, %v2263
        %v2272 = vsub.f32 %v2256, %v2264
        %v2273 = vsub.f32 %v2257, %v2265
        %v2274 = vsub.f32 %v2258, %v2266
        %v2275 = vsub.f32 %v2259, %v2267
        %v2276 = vsub.f32 %v2260, %v2268
        %v2277 = vsub.f32 %v2261, %v2269
        %v2278 = vmax.f32 %v2270, 0.0
        %v2279 = vmax.f32 %v2271, 0.0
        %v2280 = vmax.f32 %v2272, 0.0
        %v2281 = vmax.f32 %v2273, 0.0
        %v2282 = vmax.f32 %v2274, 0.0
        %v2283 = vmax.f32 %v2275, 0.0
        %v2284 = vmax.f32 %v2276, 0.0
        %v2285 = vmax.f32 %v2277, 0.0
        %v2286 = vsub.f32 %v2196, %v2222
        %v2287 = vsub.f32 %v2197, %v2223
        %v2288 = vsub.f32 %v2198, %v2224
        %v2289 = vsub.f32 %v2199, %v2225
        %v2290 = vsub.f32 %v2200, %v2226
        %v2291 = vsub.f32 %v2201, %v2227
        %v2292 = vsub.f32 %v2202, %v2228
        %v2293 = vsub.f32 %v2203, %v2229
        %v2294 = vadd.f32 %v2278, 1e-05
        %v2295 = vadd.f32 %v2279, 1e-05
        %v2296 = vadd.f32 %v2280, 1e-05
        %v2297 = vadd.f32 %v2281, 1e-05
        %v2298 = vadd.f32 %v2282, 1e-05
        %v2299 = vadd.f32 %v2283, 1e-05
        %v2300 = vadd.f32 %v2284, 1e-05
        %v2301 = vadd.f32 %v2285, 1e-05
        %v2302 = vrsqrt.pop %v2294
        %v2303 = vrsqrt.pop %v2295
        %v2304 = vrsqrt.pop %v2296
        %v2305 = vrsqrt.pop %v2297
        %v2306 = vrsqrt.pop %v2298
        %v2307 = vrsqrt.pop %v2299
        %v2308 = vrsqrt.pop %v2300
        %v2309 = vrsqrt.pop %v2301
        %v2310 = vmul.f32 %v2286, %v2302
        %v2311 = vmul.f32 %v2287, %v2303
        %v2312 = vmul.f32 %v2288, %v2304
        %v2313 = vmul.f32 %v2289, %v2305
        %v2314 = vmul.f32 %v2290, %v2306
        %v2315 = vmul.f32 %v2291, %v2307
        %v2316 = vmul.f32 %v2292, %v2308
        %v2317 = vmul.f32 %v2293, %v2309
        %v2319 = vlaneseq
        %v2320 = vshrl.u32 %v2319, 7
        %v2321 = vsub.s32 0, %v2320
        %v2322 = vrot.slane %v2204, %v2321
        %v2324 = vmul.f32 %v2310, %v2322
        %v2325 = vmul.f32 %v2311, %v2322
        %v2326 = vmul.f32 %v2312, %v2322
        %v2327 = vmul.f32 %v2313, %v2322
        %v2328 = vmul.f32 %v2314, %v2322
        %v2329 = vmul.f32 %v2315, %v2322
        %v2330 = vmul.f32 %v2316, %v2322
        %v2331 = vmul.f32 %v2317, %v2322
        %v2333 = vlaneseq
        %v2334 = vshrl.u32 %v2333, 7
        %v2335 = vsub.s32 0, %v2334
        %v2336 = vrot.slane %v2205, %v2335
        %v2338 = vadd.f32 %v2324, %v2336
        %v2339 = vadd.f32 %v2325, %v2336
        %v2340 = vadd.f32 %v2326, %v2336
        %v2341 = vadd.f32 %v2327, %v2336
        %v2342 = vadd.f32 %v2328, %v2336
        %v2343 = vadd.f32 %v2329, %v2336
        %v2344 = vadd.f32 %v2330, %v2336
        %v2345 = vadd.f32 %v2331, %v2336
        %v2346 = vpack.c.bf16 %v2339, %v2338
        %v2347 = vpack.c.bf16 %v2341, %v2340
        %v2348 = vpack.c.bf16 %v2343, %v2342
        %v2349 = vpack.c.bf16 %v2345, %v2344
        %v2350 = vld [vmem:[#allocation23] sm:$0x1]
        %v2352 = vlaneseq
        %v2353 = vshrl.u32 %v2352, 7
        %v2354 = vsub.s32 0, %v2353
        %v2355 = vrot.slane %v2350, %v2354
        %v2357 = vadd.f32 %v2196, %v2355
        %v2358 = vadd.f32 %v2197, %v2355
        %v2359 = vadd.f32 %v2198, %v2355
        %v2360 = vadd.f32 %v2199, %v2355
        %v2361 = vadd.f32 %v2200, %v2355
        %v2362 = vadd.f32 %v2201, %v2355
        %v2363 = vadd.f32 %v2202, %v2355
        %v2364 = vadd.f32 %v2203, %v2355
        %2365 = vst [vmem:[#allocation2] sm:$0xff] %v2357
        %2366 = vst [vmem:[#allocation2 + $0x8] sm:$0xff] %v2358
        %2367 = vst [vmem:[#allocation2 + $0x10] sm:$0xff] %v2359
        %2368 = vst [vmem:[#allocation2 + $0x18] sm:$0xff] %v2360
        %2369 = vst [vmem:[#allocation2 + $0x20] sm:$0xff] %v2361
        %2370 = vst [vmem:[#allocation2 + $0x28] sm:$0xff] %v2362
        %2371 = vst [vmem:[#allocation2 + $0x30] sm:$0xff] %v2363
        %2372 = vst [vmem:[#allocation2 + $0x38] sm:$0xff] %v2364
        %v2373 = vld [vmem:[#allocation18] sm:$0xf]
        %v2374 = vld [vmem:[#allocation18 + $0x8] sm:$0xf]
        %v2375 = vld [vmem:[#allocation18 + $0x10] sm:$0xf]
        %v2376 = vld [vmem:[#allocation18 + $0x18] sm:$0xf]
        %v2377 = vld [vmem:[#allocation18 + $0x20] sm:$0xf]
        %v2378 = vld [vmem:[#allocation18 + $0x28] sm:$0xf]
        %v2379 = vld [vmem:[#allocation18 + $0x30] sm:$0xf]
        %v2380 = vld [vmem:[#allocation18 + $0x38] sm:$0xf]
        %v2381 = vld [vmem:[#allocation18 + $0x40] sm:$0xf]
        %v2382 = vld [vmem:[#allocation18 + $0x48] sm:$0xf]
        %v2383 = vld [vmem:[#allocation18 + $0x50] sm:$0xf]
        %v2384 = vld [vmem:[#allocation18 + $0x58] sm:$0xf]
        %v2385 = vld [vmem:[#allocation18 + $0x60] sm:$0xf]
        %v2386 = vld [vmem:[#allocation18 + $0x68] sm:$0xf]
        %v2387 = vld [vmem:[#allocation18 + $0x70] sm:$0xf]
        %v2388 = vld [vmem:[#allocation18 + $0x78] sm:$0xf]
        %v2389 = vld [vmem:[#allocation20] sm:$0x1]
        %v2391 = vlaneseq
        %v2392 = vshrl.u32 %v2391, 7
        %v2393 = vsub.s32 0, %v2392
        %v2394 = vrot.slane %v2389, %v2393
        %v2412 = vunpack.c.l.b16 %v2373
        %v2413 = vunpack.c.l.b16 %v2374
        %v2414 = vunpack.c.l.b16 %v2375
        %v2415 = vunpack.c.l.b16 %v2376
        %v2416 = vunpack.c.l.b16 %v2377
        %v2417 = vunpack.c.l.b16 %v2378
        %v2418 = vunpack.c.l.b16 %v2379
        %v2419 = vunpack.c.l.b16 %v2380
        %v2420 = vunpack.c.l.b16 %v2381
        %v2421 = vunpack.c.l.b16 %v2382
        %v2422 = vunpack.c.l.b16 %v2383
        %v2423 = vunpack.c.l.b16 %v2384
        %v2424 = vunpack.c.l.b16 %v2385
        %v2425 = vunpack.c.l.b16 %v2386
        %v2426 = vunpack.c.l.b16 %v2387
        %v2427 = vunpack.c.l.b16 %v2388
        %v2428 = vpack.c.b16 %v2413, %v2412
        %v2429 = vpack.c.b16 %v2415, %v2414
        %v2430 = vpack.c.b16 %v2417, %v2416
        %v2431 = vpack.c.b16 %v2419, %v2418
        %v2432 = vpack.c.b16 %v2421, %v2420
        %v2433 = vpack.c.b16 %v2423, %v2422
        %v2434 = vpack.c.b16 %v2425, %v2424
        %v2435 = vpack.c.b16 %v2427, %v2426
        %2444 = vmatprep.subr.bf16.mxu0 0
        %2445 = vmatpush1.bf16.msra.mxu0 %v2428
        %2446 = vmatprep.subr.bf16.mxu0 0
        %2447 = vmatpush1.bf16.msra.mxu0 %v2429
        %2448 = vmatprep.subr.bf16.mxu0 0
        %2449 = vmatpush1.bf16.msra.mxu0 %v2430
        %2450 = vmatprep.subr.bf16.mxu0 0
        %2451 = vmatpush1.bf16.msra.mxu0 %v2431
        %2452 = vmatprep.subr.bf16.mxu0 0
        %2453 = vmatpush1.bf16.msra.mxu0 %v2432
        %2454 = vmatprep.subr.bf16.mxu0 0
        %2455 = vmatpush1.bf16.msra.mxu0 %v2433
        %2456 = vmatprep.subr.bf16.mxu0 0
        %2457 = vmatpush1.bf16.msra.mxu0 %v2434
        %2458 = vmatprep.subr.bf16.mxu0 0
        %2459 = vmatpush1.bf16.msra.mxu0 %v2435
        %2460 = vmatprep.subr.bf16.mxu0 0
        %2461 = vmatpush1.bf16.msra.mxu0 0
        %2462 = vmatprep.subr.bf16.mxu0 0
        %2463 = vmatpush1.bf16.msra.mxu0 0
        %2464 = vmatprep.subr.bf16.mxu0 0
        %2465 = vmatpush1.bf16.msra.mxu0 0
        %2466 = vmatprep.subr.bf16.mxu0 0
        %2467 = vmatpush1.bf16.msra.mxu0 0
        %2468 = vmatprep.subr.bf16.mxu0 0
        %2469 = vmatpush1.bf16.msra.mxu0 0
        %2470 = vmatprep.subr.bf16.mxu0 0
        %2471 = vmatpush1.bf16.msra.mxu0 0
        %2472 = vmatprep.subr.bf16.mxu0 0
        %2473 = vmatpush1.bf16.msra.mxu0 0
        %2474 = vmatprep.subr.bf16.mxu0 0
        %2475 = vmatpush1.bf16.msra.mxu0 0
        %2476 = vmatprep.mubr.bf16.mxu0 0
        %2477 = vmatmul.mubr.bf16.gmra.mrb[0].mxu0 %v2346
        %v2478 = vpop.f32.mrb[0].mxu0
        %v2479 = vadd.f32 %v2394, %v2478
        %v2480 = vpop.f32.mrb[0].mxu0
        %v2481 = vpop.f32.mrb[0].mxu0
        %v2482 = vadd.f32 %v2394, %v2481
        %v2483 = vpop.f32.mrb[0].mxu0
        %2484 = vmatprep.mubr.bf16.mxu0 0
        %2485 = vmatmul.mubr.bf16.gmra.mrb[0].mxu0 %v2347
        %v2486 = vpop.f32.mrb[0].mxu0
        %v2487 = vadd.f32 %v2394, %v2486
        %v2488 = vpop.f32.mrb[0].mxu0
        %v2489 = vpop.f32.mrb[0].mxu0
        %v2490 = vadd.f32 %v2394, %v2489
        %v2491 = vpop.f32.mrb[0].mxu0
        %2492 = vmatprep.mubr.bf16.mxu0 0
        %2493 = vmatmul.mubr.bf16.gmra.mrb[0].mxu0 %v2348
        %v2494 = vpop.f32.mrb[0].mxu0
        %v2495 = vadd.f32 %v2394, %v2494
        %v2496 = vpop.f32.mrb[0].mxu0
        %v2497 = vpop.f32.mrb[0].mxu0
        %v2498 = vadd.f32 %v2394, %v2497
        %v2499 = vpop.f32.mrb[0].mxu0
        %2500 = vmatprep.mubr.bf16.mxu0 0
        %2501 = vmatmul.mubr.bf16.gmra.mrb[0].mxu0 %v2349
        %v2502 = vpop.f32.mrb[0].mxu0
        %v2503 = vadd.f32 %v2394, %v2502
        %v2504 = vpop.f32.mrb[0].mxu0
        %v2505 = vpop.f32.mrb[0].mxu0
        %v2506 = vadd.f32 %v2394, %v2505
        %v2507 = vpop.f32.mrb[0].mxu0
        %2508 = vdwg.mxu0
        %v2509 = vmul.f32 %v2479, 0.70710677
        %v2510 = vmul.f32 %v2482, 0.70710677
        %v2511 = vmul.f32 %v2487, 0.70710677
        %v2512 = vmul.f32 %v2490, 0.70710677
        %v2513 = vmul.f32 %v2495, 0.70710677
        %v2514 = vmul.f32 %v2498, 0.70710677
        %v2515 = vmul.f32 %v2503, 0.70710677
        %v2516 = vmul.f32 %v2506, 0.70710677
        %v2517 = vand.u32 2147483647, %v2509
        %v2518 = vand.u32 2147483647, %v2510
        %v2519 = vand.u32 2147483647, %v2511
        %v2520 = vand.u32 2147483647, %v2512
        %v2521 = vand.u32 2147483647, %v2513
        %v2522 = vand.u32 2147483647, %v2514
        %v2523 = vand.u32 2147483647, %v2515
        %v2524 = vand.u32 2147483647, %v2516
        %v2525 = vmul.f32 %v2517, 0.3275911
        %v2526 = vmul.f32 %v2518, 0.3275911
        %v2527 = vmul.f32 %v2519, 0.3275911
        %v2528 = vmul.f32 %v2520, 0.3275911
        %v2529 = vmul.f32 %v2521, 0.3275911
        %v2530 = vmul.f32 %v2522, 0.3275911
        %v2531 = vmul.f32 %v2523, 0.3275911
        %v2532 = vmul.f32 %v2524, 0.3275911
        %v2533 = vadd.f32 %v2525, 1.0
        %v2534 = vadd.f32 %v2526, 1.0
        %v2535 = vadd.f32 %v2527, 1.0
        %v2536 = vadd.f32 %v2528, 1.0
        %v2537 = vadd.f32 %v2529, 1.0
        %v2538 = vadd.f32 %v2530, 1.0
        %v2539 = vadd.f32 %v2531, 1.0
        %v2540 = vadd.f32 %v2532, 1.0
        %v2541 = vrcp.pop %v2533
        %v2542 = vmul.f32 1.0, %v2541
        %v2543 = vrcp.pop %v2534
        %v2544 = vmul.f32 1.0, %v2543
        %v2545 = vrcp.pop %v2535
        %v2546 = vmul.f32 1.0, %v2545
        %v2547 = vrcp.pop %v2536
        %v2548 = vmul.f32 1.0, %v2547
        %v2549 = vrcp.pop %v2537
        %v2550 = vmul.f32 1.0, %v2549
        %v2551 = vrcp.pop %v2538
        %v2552 = vmul.f32 1.0, %v2551
        %v2553 = vrcp.pop %v2539
        %v2554 = vmul.f32 1.0, %v2553
        %v2555 = vrcp.pop %v2540
        %v2556 = vmul.f32 1.0, %v2555
        %v2557 = vmul.f32 %v2542, 1.0614054
        %v2558 = vmul.f32 %v2544, 1.0614054
        %v2559 = vmul.f32 %v2546, 1.0614054
        %v2560 = vmul.f32 %v2548, 1.0614054
        %v2561 = vmul.f32 %v2550, 1.0614054
        %v2562 = vmul.f32 %v2552, 1.0614054
        %v2563 = vmul.f32 %v2554, 1.0614054
        %v2564 = vmul.f32 %v2556, 1.0614054
        %v2565 = vadd.f32 %v2557, -1.4531521
        %v2566 = vadd.f32 %v2558, -1.4531521
        %v2567 = vadd.f32 %v2559, -1.4531521
        %v2568 = vadd.f32 %v2560, -1.4531521
        %v2569 = vadd.f32 %v2561, -1.4531521
        %v2570 = vadd.f32 %v2562, -1.4531521
        %v2571 = vadd.f32 %v2563, -1.4531521
        %v2572 = vadd.f32 %v2564, -1.4531521
        %v2573 = vmul.f32 %v2542, %v2565
        %v2574 = vmul.f32 %v2544, %v2566
        %v2575 = vmul.f32 %v2546, %v2567
        %v2576 = vmul.f32 %v2548, %v2568
        %v2577 = vmul.f32 %v2550, %v2569
        %v2578 = vmul.f32 %v2552, %v2570
        %v2579 = vmul.f32 %v2554, %v2571
        %v2580 = vmul.f32 %v2556, %v2572
        %v2581 = vadd.f32 %v2573, 1.4214138
        %v2582 = vadd.f32 %v2574, 1.4214138
        %v2583 = vadd.f32 %v2575, 1.4214138
        %v2584 = vadd.f32 %v2576, 1.4214138
        %v2585 = vadd.f32 %v2577, 1.4214138
        %v2586 = vadd.f32 %v2578, 1.4214138
        %v2587 = vadd.f32 %v2579, 1.4214138
        %v2588 = vadd.f32 %v2580, 1.4214138
        %v2589 = vmul.f32 %v2542, %v2581
        %v2590 = vmul.f32 %v2544, %v2582
        %v2591 = vmul.f32 %v2546, %v2583
        %v2592 = vmul.f32 %v2548, %v2584
        %v2593 = vmul.f32 %v2550, %v2585
        %v2594 = vmul.f32 %v2552, %v2586
        %v2595 = vmul.f32 %v2554, %v2587
        %v2596 = vmul.f32 %v2556, %v2588
        %v2597 = vadd.f32 %v2589, -0.28449672
        %v2598 = vadd.f32 %v2590, -0.28449672
        %v2599 = vadd.f32 %v2591, -0.28449672
        %v2600 = vadd.f32 %v2592, -0.28449672
        %v2601 = vadd.f32 %v2593, -0.28449672
        %v2602 = vadd.f32 %v2594, -0.28449672
        %v2603 = vadd.f32 %v2595, -0.28449672
        %v2604 = vadd.f32 %v2596, -0.28449672
        %v2605 = vmul.f32 %v2542, %v2597
        %v2606 = vmul.f32 %v2544, %v2598
        %v2607 = vmul.f32 %v2546, %v2599
        %v2608 = vmul.f32 %v2548, %v2600
        %v2609 = vmul.f32 %v2550, %v2601
        %v2610 = vmul.f32 %v2552, %v2602
        %v2611 = vmul.f32 %v2554, %v2603
        %v2612 = vmul.f32 %v2556, %v2604
        %v2613 = vadd.f32 %v2605, 0.2548296
        %v2614 = vadd.f32 %v2606, 0.2548296
        %v2615 = vadd.f32 %v2607, 0.2548296
        %v2616 = vadd.f32 %v2608, 0.2548296
        %v2617 = vadd.f32 %v2609, 0.2548296
        %v2618 = vadd.f32 %v2610, 0.2548296
        %v2619 = vadd.f32 %v2611, 0.2548296
        %v2620 = vadd.f32 %v2612, 0.2548296
        %v2621 = vmul.f32 %v2542, %v2613
        %v2622 = vmul.f32 %v2544, %v2614
        %v2623 = vmul.f32 %v2546, %v2615
        %v2624 = vmul.f32 %v2548, %v2616
        %v2625 = vmul.f32 %v2550, %v2617
        %v2626 = vmul.f32 %v2552, %v2618
        %v2627 = vmul.f32 %v2554, %v2619
        %v2628 = vmul.f32 %v2556, %v2620
        %v2629 = vsub.f32 0.0, %v2517
        %v2630 = vsub.f32 0.0, %v2518
        %v2631 = vsub.f32 0.0, %v2519
        %v2632 = vsub.f32 0.0, %v2520
        %v2633 = vsub.f32 0.0, %v2521
        %v2634 = vsub.f32 0.0, %v2522
        %v2635 = vsub.f32 0.0, %v2523
        %v2636 = vsub.f32 0.0, %v2524
        %v2637 = vmul.f32 %v2629, %v2517
        %v2638 = vmul.f32 %v2630, %v2518
        %v2639 = vmul.f32 %v2631, %v2519
        %v2640 = vmul.f32 %v2632, %v2520
        %v2641 = vmul.f32 %v2633, %v2521
        %v2642 = vmul.f32 %v2634, %v2522
        %v2643 = vmul.f32 %v2635, %v2523
        %v2644 = vmul.f32 %v2636, %v2524
        %v2645 = vmul.f32 %v2637, 1.442695
        %v2646 = vpow.pop %v2645
        %v2647 = vmul.f32 %v2638, 1.442695
        %v2648 = vpow.pop %v2647
        %v2649 = vmul.f32 %v2639, 1.442695
        %v2650 = vpow.pop %v2649
        %v2651 = vmul.f32 %v2640, 1.442695
        %v2652 = vpow.pop %v2651
        %v2653 = vmul.f32 %v2641, 1.442695
        %v2654 = vpow.pop %v2653
        %v2655 = vmul.f32 %v2642, 1.442695
        %v2656 = vpow.pop %v2655
        %v2657 = vmul.f32 %v2643, 1.442695
        %v2658 = vpow.pop %v2657
        %v2659 = vmul.f32 %v2644, 1.442695
        %v2660 = vpow.pop %v2659
        %v2661 = vmul.f32 %v2621, %v2646
        %v2662 = vmul.f32 %v2622, %v2648
        %v2663 = vmul.f32 %v2623, %v2650
        %v2664 = vmul.f32 %v2624, %v2652
        %v2665 = vmul.f32 %v2625, %v2654
        %v2666 = vmul.f32 %v2626, %v2656
        %v2667 = vmul.f32 %v2627, %v2658
        %v2668 = vmul.f32 %v2628, %v2660
        %v2669 = vsub.f32 1.0, %v2661
        %v2670 = vsub.f32 1.0, %v2662
        %v2671 = vsub.f32 1.0, %v2663
        %v2672 = vsub.f32 1.0, %v2664
        %v2673 = vsub.f32 1.0, %v2665
        %v2674 = vsub.f32 1.0, %v2666
        %v2675 = vsub.f32 1.0, %v2667
        %v2676 = vsub.f32 1.0, %v2668
        %vm2677 = vcmp.ge.f32.partialorder %v2509, 0.0
        %vm2678 = vcmp.ge.f32.partialorder %v2510, 0.0
        %vm2679 = vcmp.ge.f32.partialorder %v2511, 0.0
        %vm2680 = vcmp.ge.f32.partialorder %v2512, 0.0
        %vm2681 = vcmp.ge.f32.partialorder %v2513, 0.0
        %vm2682 = vcmp.ge.f32.partialorder %v2514, 0.0
        %vm2683 = vcmp.ge.f32.partialorder %v2515, 0.0
        %vm2684 = vcmp.ge.f32.partialorder %v2516, 0.0
        %v2685 = vsub.f32 0.0, %v2669
        %v2686 = vsub.f32 0.0, %v2670
        %v2687 = vsub.f32 0.0, %v2671
        %v2688 = vsub.f32 0.0, %v2672
        %v2689 = vsub.f32 0.0, %v2673
        %v2690 = vsub.f32 0.0, %v2674
        %v2691 = vsub.f32 0.0, %v2675
        %v2692 = vsub.f32 0.0, %v2676
        %v2693 = vsel %vm2677, %v2669, %v2685
        %v2694 = vsel %vm2678, %v2670, %v2686
        %v2695 = vsel %vm2679, %v2671, %v2687
        %v2696 = vsel %vm2680, %v2672, %v2688
        %v2697 = vsel %vm2681, %v2673, %v2689
        %v2698 = vsel %vm2682, %v2674, %v2690
        %v2699 = vsel %vm2683, %v2675, %v2691
        %v2700 = vsel %vm2684, %v2676, %v2692
        %v2701 = vmul.f32 %v2479, 0.5
        %v2702 = vmul.f32 %v2482, 0.5
        %v2703 = vmul.f32 %v2487, 0.5
        %v2704 = vmul.f32 %v2490, 0.5
        %v2705 = vmul.f32 %v2495, 0.5
        %v2706 = vmul.f32 %v2498, 0.5
        %v2707 = vmul.f32 %v2503, 0.5
        %v2708 = vmul.f32 %v2506, 0.5
        %v2709 = vadd.f32 %v2693, 1.0
        %v2710 = vadd.f32 %v2694, 1.0
        %v2711 = vadd.f32 %v2695, 1.0
        %v2712 = vadd.f32 %v2696, 1.0
        %v2713 = vadd.f32 %v2697, 1.0
        %v2714 = vadd.f32 %v2698, 1.0
        %v2715 = vadd.f32 %v2699, 1.0
        %v2716 = vadd.f32 %v2700, 1.0
        %v2717 = vmul.f32 %v2701, %v2709
        %v2718 = vmul.f32 %v2702, %v2710
        %v2719 = vmul.f32 %v2703, %v2711
        %v2720 = vmul.f32 %v2704, %v2712
        %v2721 = vmul.f32 %v2705, %v2713
        %v2722 = vmul.f32 %v2706, %v2714
        %v2723 = vmul.f32 %v2707, %v2715
        %v2724 = vmul.f32 %v2708, %v2716
        %v2725 = vld [vmem:[#allocation21] sm:$0xf]
        %v2726 = vld [vmem:[#allocation21 + $0x4] sm:$0xf]
        %v2727 = vld [vmem:[#allocation21 + $0x8] sm:$0xf]
        %v2728 = vld [vmem:[#allocation21 + $0xc] sm:$0xf]
        %v2729 = vld [vmem:[#allocation21 + $0x10] sm:$0xf]
        %v2730 = vld [vmem:[#allocation21 + $0x14] sm:$0xf]
        %v2731 = vld [vmem:[#allocation21 + $0x18] sm:$0xf]
        %v2732 = vld [vmem:[#allocation21 + $0x1c] sm:$0xf]
        %v2733 = vld [vmem:[#allocation21 + $0x20] sm:$0xf]
        %v2734 = vld [vmem:[#allocation21 + $0x24] sm:$0xf]
        %v2735 = vld [vmem:[#allocation21 + $0x28] sm:$0xf]
        %v2736 = vld [vmem:[#allocation21 + $0x2c] sm:$0xf]
        %v2737 = vld [vmem:[#allocation21 + $0x30] sm:$0xf]
        %v2738 = vld [vmem:[#allocation21 + $0x34] sm:$0xf]
        %v2739 = vld [vmem:[#allocation21 + $0x38] sm:$0xf]
        %v2740 = vld [vmem:[#allocation21 + $0x3c] sm:$0xf]
        %v2741 = vld [vmem:[#allocation2] sm:$0xff]
        %v2742 = vld [vmem:[#allocation2 + $0x8] sm:$0xff]
        %v2743 = vld [vmem:[#allocation2 + $0x10] sm:$0xff]
        %v2744 = vld [vmem:[#allocation2 + $0x18] sm:$0xff]
        %v2745 = vld [vmem:[#allocation2 + $0x20] sm:$0xff]
        %v2746 = vld [vmem:[#allocation2 + $0x28] sm:$0xff]
        %v2747 = vld [vmem:[#allocation2 + $0x30] sm:$0xff]
        %v2748 = vld [vmem:[#allocation2 + $0x38] sm:$0xff]
        %v2749 = vpack.c.bf16 %v2718, %v2717
        %v2750 = vpack.c.bf16 %v2720, %v2719
        %v2751 = vpack.c.bf16 %v2722, %v2721
        %v2752 = vpack.c.bf16 %v2724, %v2723
        %v2769 = vunpack.c.l.b16 %v2725
        %v2770 = vunpack.c.l.b16 %v2726
        %v2771 = vunpack.c.l.b16 %v2727
        %v2772 = vunpack.c.l.b16 %v2728
        %v2773 = vunpack.c.l.b16 %v2729
        %v2774 = vunpack.c.l.b16 %v2730
        %v2775 = vunpack.c.l.b16 %v2731
        %v2776 = vunpack.c.l.b16 %v2732
        %v2777 = vunpack.c.l.b16 %v2733
        %v2778 = vunpack.c.l.b16 %v2734
        %v2779 = vunpack.c.l.b16 %v2735
        %v2780 = vunpack.c.l.b16 %v2736
        %v2781 = vunpack.c.l.b16 %v2737
        %v2782 = vunpack.c.l.b16 %v2738
        %v2783 = vunpack.c.l.b16 %v2739
        %v2784 = vunpack.c.l.b16 %v2740
        %v2785 = vpack.c.b16 %v2770, %v2769
        %v2786 = vpack.c.b16 %v2772, %v2771
        %v2787 = vpack.c.b16 %v2774, %v2773
        %v2788 = vpack.c.b16 %v2776, %v2775
        %v2789 = vpack.c.b16 %v2778, %v2777
        %v2790 = vpack.c.b16 %v2780, %v2779
        %v2791 = vpack.c.b16 %v2782, %v2781
        %v2792 = vpack.c.b16 %v2784, %v2783
        %2801 = vmatprep.subr.bf16.mxu0 0
        %2802 = vmatpush1.bf16.msra.mxu0 %v2785
        %2803 = vmatprep.subr.bf16.mxu0 0
        %2804 = vmatpush1.bf16.msra.mxu0 %v2786
        %2805 = vmatprep.subr.bf16.mxu0 0
        %2806 = vmatpush1.bf16.msra.mxu0 %v2787
        %2807 = vmatprep.subr.bf16.mxu0 0
        %2808 = vmatpush1.bf16.msra.mxu0 %v2788
        %2809 = vmatprep.subr.bf16.mxu0 0
        %2810 = vmatpush1.bf16.msra.mxu0 %v2789
        %2811 = vmatprep.subr.bf16.mxu0 0
        %2812 = vmatpush1.bf16.msra.mxu0 %v2790
        %2813 = vmatprep.subr.bf16.mxu0 0
        %2814 = vmatpush1.bf16.msra.mxu0 %v2791
        %2815 = vmatprep.subr.bf16.mxu0 0
        %2816 = vmatpush1.bf16.msra.mxu0 %v2792
        %2817 = vmatprep.subr.bf16.mxu0 0
        %2818 = vmatpush1.bf16.msra.mxu0 0
        %2819 = vmatprep.subr.bf16.mxu0 0
        %2820 = vmatpush1.bf16.msra.mxu0 0
        %2821 = vmatprep.subr.bf16.mxu0 0
        %2822 = vmatpush1.bf16.msra.mxu0 0
        %2823 = vmatprep.subr.bf16.mxu0 0
        %2824 = vmatpush1.bf16.msra.mxu0 0
        %2825 = vmatprep.subr.bf16.mxu0 0
        %2826 = vmatpush1.bf16.msra.mxu0 0
        %2827 = vmatprep.subr.bf16.mxu0 0
        %2828 = vmatpush1.bf16.msra.mxu0 0
        %2829 = vmatprep.subr.bf16.mxu0 0
        %2830 = vmatpush1.bf16.msra.mxu0 0
        %2831 = vmatprep.subr.bf16.mxu0 0
        %2832 = vmatpush1.bf16.msra.mxu0 0
        %2833 = vmatprep.mubr.bf16.mxu0 0
        %2834 = vmatmul.mubr.bf16.gmra.mrb[0].mxu0 %v2749
        %v2835 = vpop.f32.mrb[0].mxu0
        %v2836 = vadd.f32 0.0, %v2835
        %v2837 = vpop.f32.mrb[0].mxu0
        %v2838 = vpop.f32.mrb[0].mxu0
        %v2839 = vadd.f32 0.0, %v2838
        %v2840 = vpop.f32.mrb[0].mxu0
        %2841 = vmatprep.mubr.bf16.mxu0 0
        %2842 = vmatmul.mubr.bf16.gmra.mrb[0].mxu0 %v2750
        %v2843 = vpop.f32.mrb[0].mxu0
        %v2844 = vadd.f32 0.0, %v2843
        %v2845 = vpop.f32.mrb[0].mxu0
        %v2846 = vpop.f32.mrb[0].mxu0
        %v2847 = vadd.f32 0.0, %v2846
        %v2848 = vpop.f32.mrb[0].mxu0
        %2849 = vmatprep.mubr.bf16.mxu0 0
        %2850 = vmatmul.mubr.bf16.gmra.mrb[0].mxu0 %v2751
        %v2851 = vpop.f32.mrb[0].mxu0
        %v2852 = vadd.f32 0.0, %v2851
        %v2853 = vpop.f32.mrb[0].mxu0
        %v2854 = vpop.f32.mrb[0].mxu0
        %v2855 = vadd.f32 0.0, %v2854
        %v2856 = vpop.f32.mrb[0].mxu0
        %2857 = vmatprep.mubr.bf16.mxu0 0
        %2858 = vmatmul.mubr.bf16.gmra.mrb[0].mxu0 %v2752
        %v2859 = vpop.f32.mrb[0].mxu0
        %v2860 = vadd.f32 0.0, %v2859
        %v2861 = vpop.f32.mrb[0].mxu0
        %v2862 = vpop.f32.mrb[0].mxu0
        %v2863 = vadd.f32 0.0, %v2862
        %v2864 = vpop.f32.mrb[0].mxu0
        %2865 = vdwg.mxu0
        %v2866 = vadd.f32 %v2741, %v2836
        %v2867 = vadd.f32 %v2742, %v2839
        %v2868 = vadd.f32 %v2743, %v2844
        %v2869 = vadd.f32 %v2744, %v2847
        %v2870 = vadd.f32 %v2745, %v2852
        %v2871 = vadd.f32 %v2746, %v2855
        %v2872 = vadd.f32 %v2747, %v2860
        %v2873 = vadd.f32 %v2748, %v2863
        %2874 = vst [vmem:[#allocation2] sm:$0xff] %v2866
        %2875 = vst [vmem:[#allocation2 + $0x8] sm:$0xff] %v2867
        %2876 = vst [vmem:[#allocation2 + $0x10] sm:$0xff] %v2868
        %2877 = vst [vmem:[#allocation2 + $0x18] sm:$0xff] %v2869
        %2878 = vst [vmem:[#allocation2 + $0x20] sm:$0xff] %v2870
        %2879 = vst [vmem:[#allocation2 + $0x28] sm:$0xff] %v2871
        %2880 = vst [vmem:[#allocation2 + $0x30] sm:$0xff] %v2872
        %2881 = vst [vmem:[#allocation2 + $0x38] sm:$0xff] %v2873
        %s2882 = scalar_lea.vmem [#allocation18], 4
        %v2883 = vld [vmem:[%s2882] sm:$0xf]
        %v2884 = vld [vmem:[%s2882 + $0x8] sm:$0xf]
        %v2885 = vld [vmem:[%s2882 + $0x10] sm:$0xf]
        %v2886 = vld [vmem:[%s2882 + $0x18] sm:$0xf]
        %v2887 = vld [vmem:[%s2882 + $0x20] sm:$0xf]
        %v2888 = vld [vmem:[%s2882 + $0x28] sm:$0xf]
        %v2889 = vld [vmem:[%s2882 + $0x30] sm:$0xf]
        %v2890 = vld [vmem:[%s2882 + $0x38] sm:$0xf]
        %v2891 = vld [vmem:[%s2882 + $0x40] sm:$0xf]
        %v2892 = vld [vmem:[%s2882 + $0x48] sm:$0xf]
        %v2893 = vld [vmem:[%s2882 + $0x50] sm:$0xf]
        %v2894 = vld [vmem:[%s2882 + $0x58] sm:$0xf]
        %v2895 = vld [vmem:[%s2882 + $0x60] sm:$0xf]
        %v2896 = vld [vmem:[%s2882 + $0x68] sm:$0xf]
        %v2897 = vld [vmem:[%s2882 + $0x70] sm:$0xf]
        %v2898 = vld [vmem:[%s2882 + $0x78] sm:$0xf]
        %s2899 = scalar_lea.vmem [#allocation20], 1
        %v2900 = vld [vmem:[%s2899] sm:$0x1]
        %v2902 = vlaneseq
        %v2903 = vshrl.u32 %v2902, 7
        %v2904 = vsub.s32 0, %v2903
        %v2905 = vrot.slane %v2900, %v2904
        %v2923 = vunpack.c.l.b16 %v2883
        %v2924 = vunpack.c.l.b16 %v2884
        %v2925 = vunpack.c.l.b16 %v2885
        %v2926 = vunpack.c.l.b16 %v2886
        %v2927 = vunpack.c.l.b16 %v2887
        %v2928 = vunpack.c.l.b16 %v2888
        %v2929 = vunpack.c.l.b16 %v2889
        %v2930 = vunpack.c.l.b16 %v2890
        %v2931 = vunpack.c.l.b16 %v2891
        %v2932 = vunpack.c.l.b16 %v2892
        %v2933 = vunpack.c.l.b16 %v2893
        %v2934 = vunpack.c.l.b16 %v2894
        %v2935 = vunpack.c.l.b16 %v2895
        %v2936 = vunpack.c.l.b16 %v2896
        %v2937 = vunpack.c.l.b16 %v2897
        %v2938 = vunpack.c.l.b16 %v2898
        %v2939 = vpack.c.b16 %v2924, %v2923
        %v2940 = vpack.c.b16 %v2926, %v2925
        %v2941 = vpack.c.b16 %v2928, %v2927
        %v2942 = vpack.c.b16 %v2930, %v2929
        %v2943 = vpack.c.b16 %v2932, %v2931
        %v2944 = vpack.c.b16 %v2934, %v2933
        %v2945 = vpack.c.b16 %v2936, %v2935
        %v2946 = vpack.c.b16 %v2938, %v2937
        %2955 = vmatprep.subr.bf16.mxu0 0
        %2956 = vmatpush1.bf16.msra.mxu0 %v2939
        %2957 = vmatprep.subr.bf16.mxu0 0
        %2958 = vmatpush1.bf16.msra.mxu0 %v2940
        %2959 = vmatprep.subr.bf16.mxu0 0
        %2960 = vmatpush1.bf16.msra.mxu0 %v2941
        %2961 = vmatprep.subr.bf16.mxu0 0
        %2962 = vmatpush1.bf16.msra.mxu0 %v2942
        %2963 = vmatprep.subr.bf16.mxu0 0
        %2964 = vmatpush1.bf16.msra.mxu0 %v2943
        %2965 = vmatprep.subr.bf16.mxu0 0
        %2966 = vmatpush1.bf16.msra.mxu0 %v2944
        %2967 = vmatprep.subr.bf16.mxu0 0
        %2968 = vmatpush1.bf16.msra.mxu0 %v2945
        %2969 = vmatprep.subr.bf16.mxu0 0
        %2970 = vmatpush1.bf16.msra.mxu0 %v2946
        %2971 = vmatprep.subr.bf16.mxu0 0
        %2972 = vmatpush1.bf16.msra.mxu0 0
        %2973 = vmatprep.subr.bf16.mxu0 0
        %2974 = vmatpush1.bf16.msra.mxu0 0
        %2975 = vmatprep.subr.bf16.mxu0 0
        %2976 = vmatpush1.bf16.msra.mxu0 0
        %2977 = vmatprep.subr.bf16.mxu0 0
        %2978 = vmatpush1.bf16.msra.mxu0 0
        %2979 = vmatprep.subr.bf16.mxu0 0
        %2980 = vmatpush1.bf16.msra.mxu0 0
        %2981 = vmatprep.subr.bf16.mxu0 0
        %2982 = vmatpush1.bf16.msra.mxu0 0
        %2983 = vmatprep.subr.bf16.mxu0 0
        %2984 = vmatpush1.bf16.msra.mxu0 0
        %2985 = vmatprep.subr.bf16.mxu0 0
        %2986 = vmatpush1.bf16.msra.mxu0 0
        %2987 = vmatprep.mubr.bf16.mxu0 0
        %2988 = vmatmul.mubr.bf16.gmra.mrb[0].mxu0 %v2346
        %v2989 = vpop.f32.mrb[0].mxu0
        %v2990 = vadd.f32 %v2905, %v2989
        %v2991 = vpop.f32.mrb[0].mxu0
        %v2992 = vpop.f32.mrb[0].mxu0
        %v2993 = vadd.f32 %v2905, %v2992
        %v2994 = vpop.f32.mrb[0].mxu0
        %2995 = vmatprep.mubr.bf16.mxu0 0
        %2996 = vmatmul.mubr.bf16.gmra.mrb[0].mxu0 %v2347
        %v2997 = vpop.f32.mrb[0].mxu0
        %v2998 = vadd.f32 %v2905, %v2997
        %v2999 = vpop.f32.mrb[0].mxu0
        %v3000 = vpop.f32.mrb[0].mxu0
        %v3001 = vadd.f32 %v2905, %v3000
        %v3002 = vpop.f32.mrb[0].mxu0
        %3003 = vmatprep.mubr.bf16.mxu0 0
        %3004 = vmatmul.mubr.bf16.gmra.mrb[0].mxu0 %v2348
        %v3005 = vpop.f32.mrb[0].mxu0
        %v3006 = vadd.f32 %v2905, %v3005
        %v3007 = vpop.f32.mrb[0].mxu0
        %v3008 = vpop.f32.mrb[0].mxu0
        %v3009 = vadd.f32 %v2905, %v3008
        %v3010 = vpop.f32.mrb[0].mxu0
        %3011 = vmatprep.mubr.bf16.mxu0 0
        %3012 = vmatmul.mubr.bf16.gmra.mrb[0].mxu0 %v2349
        %v3013 = vpop.f32.mrb[0].mxu0
        %v3014 = vadd.f32 %v2905, %v3013
        %v3015 = vpop.f32.mrb[0].mxu0
        %v3016 = vpop.f32.mrb[0].mxu0
        %v3017 = vadd.f32 %v2905, %v3016
        %v3018 = vpop.f32.mrb[0].mxu0
        %3019 = vdwg.mxu0
        %v3020 = vmul.f32 %v2990, 0.70710677
        %v3021 = vmul.f32 %v2993, 0.70710677
        %v3022 = vmul.f32 %v2998, 0.70710677
        %v3023 = vmul.f32 %v3001, 0.70710677
        %v3024 = vmul.f32 %v3006, 0.70710677
        %v3025 = vmul.f32 %v3009, 0.70710677
        %v3026 = vmul.f32 %v3014, 0.70710677
        %v3027 = vmul.f32 %v3017, 0.70710677
        %v3028 = vand.u32 2147483647, %v3020
        %v3029 = vand.u32 2147483647, %v3021
        %v3030 = vand.u32 2147483647, %v3022
        %v3031 = vand.u32 2147483647, %v3023
        %v3032 = vand.u32 2147483647, %v3024
        %v3033 = vand.u32 2147483647, %v3025
        %v3034 = vand.u32 2147483647, %v3026
        %v3035 = vand.u32 2147483647, %v3027
        %v3036 = vmul.f32 %v3028, 0.3275911
        %v3037 = vmul.f32 %v3029, 0.3275911
        %v3038 = vmul.f32 %v3030, 0.3275911
        %v3039 = vmul.f32 %v3031, 0.3275911
        %v3040 = vmul.f32 %v3032, 0.3275911
        %v3041 = vmul.f32 %v3033, 0.3275911
        %v3042 = vmul.f32 %v3034, 0.3275911
        %v3043 = vmul.f32 %v3035, 0.3275911
        %v3044 = vadd.f32 %v3036, 1.0
        %v3045 = vadd.f32 %v3037, 1.0
        %v3046 = vadd.f32 %v3038, 1.0
        %v3047 = vadd.f32 %v3039, 1.0
        %v3048 = vadd.f32 %v3040, 1.0
        %v3049 = vadd.f32 %v3041, 1.0
        %v3050 = vadd.f32 %v3042, 1.0
        %v3051 = vadd.f32 %v3043, 1.0
        %v3052 = vrcp.pop %v3044
        %v3053 = vmul.f32 1.0, %v3052
        %v3054 = vrcp.pop %v3045
        %v3055 = vmul.f32 1.0, %v3054
        %v3056 = vrcp.pop %v3046
        %v3057 = vmul.f32 1.0, %v3056
        %v3058 = vrcp.pop %v3047
        %v3059 = vmul.f32 1.0, %v3058
        %v3060 = vrcp.pop %v3048
        %v3061 = vmul.f32 1.0, %v3060
        %v3062 = vrcp.pop %v3049
        %v3063 = vmul.f32 1.0, %v3062
        %v3064 = vrcp.pop %v3050
        %v3065 = vmul.f32 1.0, %v3064
        %v3066 = vrcp.pop %v3051
        %v3067 = vmul.f32 1.0, %v3066
        %v3068 = vmul.f32 %v3053, 1.0614054
        %v3069 = vmul.f32 %v3055, 1.0614054
        %v3070 = vmul.f32 %v3057, 1.0614054
        %v3071 = vmul.f32 %v3059, 1.0614054
        %v3072 = vmul.f32 %v3061, 1.0614054
        %v3073 = vmul.f32 %v3063, 1.0614054
        %v3074 = vmul.f32 %v3065, 1.0614054
        %v3075 = vmul.f32 %v3067, 1.0614054
        %v3076 = vadd.f32 %v3068, -1.4531521
        %v3077 = vadd.f32 %v3069, -1.4531521
        %v3078 = vadd.f32 %v3070, -1.4531521
        %v3079 = vadd.f32 %v3071, -1.4531521
        %v3080 = vadd.f32 %v3072, -1.4531521
        %v3081 = vadd.f32 %v3073, -1.4531521
        %v3082 = vadd.f32 %v3074, -1.4531521
        %v3083 = vadd.f32 %v3075, -1.4531521
        %v3084 = vmul.f32 %v3053, %v3076
        %v3085 = vmul.f32 %v3055, %v3077
        %v3086 = vmul.f32 %v3057, %v3078
        %v3087 = vmul.f32 %v3059, %v3079
        %v3088 = vmul.f32 %v3061, %v3080
        %v3089 = vmul.f32 %v3063, %v3081
        %v3090 = vmul.f32 %v3065, %v3082
        %v3091 = vmul.f32 %v3067, %v3083
        %v3092 = vadd.f32 %v3084, 1.4214138
        %v3093 = vadd.f32 %v3085, 1.4214138
        %v3094 = vadd.f32 %v3086, 1.4214138
        %v3095 = vadd.f32 %v3087, 1.4214138
        %v3096 = vadd.f32 %v3088, 1.4214138
        %v3097 = vadd.f32 %v3089, 1.4214138
        %v3098 = vadd.f32 %v3090, 1.4214138
        %v3099 = vadd.f32 %v3091, 1.4214138
        %v3100 = vmul.f32 %v3053, %v3092
        %v3101 = vmul.f32 %v3055, %v3093
        %v3102 = vmul.f32 %v3057, %v3094
        %v3103 = vmul.f32 %v3059, %v3095
        %v3104 = vmul.f32 %v3061, %v3096
        %v3105 = vmul.f32 %v3063, %v3097
        %v3106 = vmul.f32 %v3065, %v3098
        %v3107 = vmul.f32 %v3067, %v3099
        %v3108 = vadd.f32 %v3100, -0.28449672
        %v3109 = vadd.f32 %v3101, -0.28449672
        %v3110 = vadd.f32 %v3102, -0.28449672
        %v3111 = vadd.f32 %v3103, -0.28449672
        %v3112 = vadd.f32 %v3104, -0.28449672
        %v3113 = vadd.f32 %v3105, -0.28449672
        %v3114 = vadd.f32 %v3106, -0.28449672
        %v3115 = vadd.f32 %v3107, -0.28449672
        %v3116 = vmul.f32 %v3053, %v3108
        %v3117 = vmul.f32 %v3055, %v3109
        %v3118 = vmul.f32 %v3057, %v3110
        %v3119 = vmul.f32 %v3059, %v3111
        %v3120 = vmul.f32 %v3061, %v3112
        %v3121 = vmul.f32 %v3063, %v3113
        %v3122 = vmul.f32 %v3065, %v3114
        %v3123 = vmul.f32 %v3067, %v3115
        %v3124 = vadd.f32 %v3116, 0.2548296
        %v3125 = vadd.f32 %v3117, 0.2548296
        %v3126 = vadd.f32 %v3118, 0.2548296
        %v3127 = vadd.f32 %v3119, 0.2548296
        %v3128 = vadd.f32 %v3120, 0.2548296
        %v3129 = vadd.f32 %v3121, 0.2548296
        %v3130 = vadd.f32 %v3122, 0.2548296
        %v3131 = vadd.f32 %v3123, 0.2548296
        %v3132 = vmul.f32 %v3053, %v3124
        %v3133 = vmul.f32 %v3055, %v3125
        %v3134 = vmul.f32 %v3057, %v3126
        %v3135 = vmul.f32 %v3059, %v3127
        %v3136 = vmul.f32 %v3061, %v3128
        %v3137 = vmul.f32 %v3063, %v3129
        %v3138 = vmul.f32 %v3065, %v3130
        %v3139 = vmul.f32 %v3067, %v3131
        %v3140 = vsub.f32 0.0, %v3028
        %v3141 = vsub.f32 0.0, %v3029
        %v3142 = vsub.f32 0.0, %v3030
        %v3143 = vsub.f32 0.0, %v3031
        %v3144 = vsub.f32 0.0, %v3032
        %v3145 = vsub.f32 0.0, %v3033
        %v3146 = vsub.f32 0.0, %v3034
        %v3147 = vsub.f32 0.0, %v3035
        %v3148 = vmul.f32 %v3140, %v3028
        %v3149 = vmul.f32 %v3141, %v3029
        %v3150 = vmul.f32 %v3142, %v3030
        %v3151 = vmul.f32 %v3143, %v3031
        %v3152 = vmul.f32 %v3144, %v3032
        %v3153 = vmul.f32 %v3145, %v3033
        %v3154 = vmul.f32 %v3146, %v3034
        %v3155 = vmul.f32 %v3147, %v3035
        %v3156 = vmul.f32 %v3148, 1.442695
        %v3157 = vpow.pop %v3156
        %v3158 = vmul.f32 %v3149, 1.442695
        %v3159 = vpow.pop %v3158
        %v3160 = vmul.f32 %v3150, 1.442695
        %v3161 = vpow.pop %v3160
        %v3162 = vmul.f32 %v3151, 1.442695
        %v3163 = vpow.pop %v3162
        %v3164 = vmul.f32 %v3152, 1.442695
        %v3165 = vpow.pop %v3164
        %v3166 = vmul.f32 %v3153, 1.442695
        %v3167 = vpow.pop %v3166
        %v3168 = vmul.f32 %v3154, 1.442695
        %v3169 = vpow.pop %v3168
        %v3170 = vmul.f32 %v3155, 1.442695
        %v3171 = vpow.pop %v3170
        %v3172 = vmul.f32 %v3132, %v3157
        %v3173 = vmul.f32 %v3133, %v3159
        %v3174 = vmul.f32 %v3134, %v3161
        %v3175 = vmul.f32 %v3135, %v3163
        %v3176 = vmul.f32 %v3136, %v3165
        %v3177 = vmul.f32 %v3137, %v3167
        %v3178 = vmul.f32 %v3138, %v3169
        %v3179 = vmul.f32 %v3139, %v3171
        %v3180 = vsub.f32 1.0, %v3172
        %v3181 = vsub.f32 1.0, %v3173
        %v3182 = vsub.f32 1.0, %v3174
        %v3183 = vsub.f32 1.0, %v3175
        %v3184 = vsub.f32 1.0, %v3176
        %v3185 = vsub.f32 1.0, %v3177
        %v3186 = vsub.f32 1.0, %v3178
        %v3187 = vsub.f32 1.0, %v3179
        %vm3188 = vcmp.ge.f32.partialorder %v3020, 0.0
        %vm3189 = vcmp.ge.f32.partialorder %v3021, 0.0
        %vm3190 = vcmp.ge.f32.partialorder %v3022, 0.0
        %vm3191 = vcmp.ge.f32.partialorder %v3023, 0.0
        %vm3192 = vcmp.ge.f32.partialorder %v3024, 0.0
        %vm3193 = vcmp.ge.f32.partialorder %v3025, 0.0
        %vm3194 = vcmp.ge.f32.partialorder %v3026, 0.0
        %vm3195 = vcmp.ge.f32.partialorder %v3027, 0.0
        %v3196 = vsub.f32 0.0, %v3180
        %v3197 = vsub.f32 0.0, %v3181
        %v3198 = vsub.f32 0.0, %v3182
        %v3199 = vsub.f32 0.0, %v3183
        %v3200 = vsub.f32 0.0, %v3184
        %v3201 = vsub.f32 0.0, %v3185
        %v3202 = vsub.f32 0.0, %v3186
        %v3203 = vsub.f32 0.0, %v3187
        %v3204 = vsel %vm3188, %v3180, %v3196
        %v3205 = vsel %vm3189, %v3181, %v3197
        %v3206 = vsel %vm3190, %v3182, %v3198
        %v3207 = vsel %vm3191, %v3183, %v3199
        %v3208 = vsel %vm3192, %v3184, %v3200
        %v3209 = vsel %vm3193, %v3185, %v3201
        %v3210 = vsel %vm3194, %v3186, %v3202
        %v3211 = vsel %vm3195, %v3187, %v3203
        %v3212 = vmul.f32 %v2990, 0.5
        %v3213 = vmul.f32 %v2993, 0.5
        %v3214 = vmul.f32 %v2998, 0.5
        %v3215 = vmul.f32 %v3001, 0.5
        %v3216 = vmul.f32 %v3006, 0.5
        %v3217 = vmul.f32 %v3009, 0.5
        %v3218 = vmul.f32 %v3014, 0.5
        %v3219 = vmul.f32 %v3017, 0.5
        %v3220 = vadd.f32 %v3204, 1.0
        %v3221 = vadd.f32 %v3205, 1.0
        %v3222 = vadd.f32 %v3206, 1.0
        %v3223 = vadd.f32 %v3207, 1.0
        %v3224 = vadd.f32 %v3208, 1.0
        %v3225 = vadd.f32 %v3209, 1.0
        %v3226 = vadd.f32 %v3210, 1.0
        %v3227 = vadd.f32 %v3211, 1.0
        %v3228 = vmul.f32 %v3212, %v3220
        %v3229 = vmul.f32 %v3213, %v3221
        %v3230 = vmul.f32 %v3214, %v3222
        %v3231 = vmul.f32 %v3215, %v3223
        %v3232 = vmul.f32 %v3216, %v3224
        %v3233 = vmul.f32 %v3217, %v3225
        %v3234 = vmul.f32 %v3218, %v3226
        %v3235 = vmul.f32 %v3219, %v3227
        %s3236 = scalar_lea.vmem [#allocation21], 64
        %v3237 = vld [vmem:[%s3236] sm:$0xf]
        %v3238 = vld [vmem:[%s3236 + $0x4] sm:$0xf]
        %v3239 = vld [vmem:[%s3236 + $0x8] sm:$0xf]
        %v3240 = vld [vmem:[%s3236 + $0xc] sm:$0xf]
        %v3241 = vld [vmem:[%s3236 + $0x10] sm:$0xf]
        %v3242 = vld [vmem:[%s3236 + $0x14] sm:$0xf]
        %v3243 = vld [vmem:[%s3236 + $0x18] sm:$0xf]
        %v3244 = vld [vmem:[%s3236 + $0x1c] sm:$0xf]
        %v3245 = vld [vmem:[%s3236 + $0x20] sm:$0xf]
        %v3246 = vld [vmem:[%s3236 + $0x24] sm:$0xf]
        %v3247 = vld [vmem:[%s3236 + $0x28] sm:$0xf]
        %v3248 = vld [vmem:[%s3236 + $0x2c] sm:$0xf]
        %v3249 = vld [vmem:[%s3236 + $0x30] sm:$0xf]
        %v3250 = vld [vmem:[%s3236 + $0x34] sm:$0xf]
        %v3251 = vld [vmem:[%s3236 + $0x38] sm:$0xf]
        %v3252 = vld [vmem:[%s3236 + $0x3c] sm:$0xf]
        %v3253 = vld [vmem:[#allocation2] sm:$0xff]
        %v3254 = vld [vmem:[#allocation2 + $0x8] sm:$0xff]
        %v3255 = vld [vmem:[#allocation2 + $0x10] sm:$0xff]
        %v3256 = vld [vmem:[#allocation2 + $0x18] sm:$0xff]
        %v3257 = vld [vmem:[#allocation2 + $0x20] sm:$0xff]
        %v3258 = vld [vmem:[#allocation2 + $0x28] sm:$0xff]
        %v3259 = vld [vmem:[#allocation2 + $0x30] sm:$0xff]
        %v3260 = vld [vmem:[#allocation2 + $0x38] sm:$0xff]
        %v3261 = vpack.c.bf16 %v3229, %v3228
        %v3262 = vpack.c.bf16 %v3231, %v3230
        %v3263 = vpack.c.bf16 %v3233, %v3232
        %v3264 = vpack.c.bf16 %v3235, %v3234
        %v3281 = vunpack.c.l.b16 %v3237
        %v3282 = vunpack.c.l.b16 %v3238
        %v3283 = vunpack.c.l.b16 %v3239
        %v3284 = vunpack.c.l.b16 %v3240
        %v3285 = vunpack.c.l.b16 %v3241
        %v3286 = vunpack.c.l.b16 %v3242
        %v3287 = vunpack.c.l.b16 %v3243
        %v3288 = vunpack.c.l.b16 %v3244
        %v3289 = vunpack.c.l.b16 %v3245
        %v3290 = vunpack.c.l.b16 %v3246
        %v3291 = vunpack.c.l.b16 %v3247
        %v3292 = vunpack.c.l.b16 %v3248
        %v3293 = vunpack.c.l.b16 %v3249
        %v3294 = vunpack.c.l.b16 %v3250
        %v3295 = vunpack.c.l.b16 %v3251
        %v3296 = vunpack.c.l.b16 %v3252
        %v3297 = vpack.c.b16 %v3282, %v3281
        %v3298 = vpack.c.b16 %v3284, %v3283
        %v3299 = vpack.c.b16 %v3286, %v3285
        %v3300 = vpack.c.b16 %v3288, %v3287
        %v3301 = vpack.c.b16 %v3290, %v3289
        %v3302 = vpack.c.b16 %v3292, %v3291
        %v3303 = vpack.c.b16 %v3294, %v3293
        %v3304 = vpack.c.b16 %v3296, %v3295
        %3313 = vmatprep.subr.bf16.mxu0 0
        %3314 = vmatpush1.bf16.msra.mxu0 %v3297
        %3315 = vmatprep.subr.bf16.mxu0 0
        %3316 = vmatpush1.bf16.msra.mxu0 %v3298
        %3317 = vmatprep.subr.bf16.mxu0 0
        %3318 = vmatpush1.bf16.msra.mxu0 %v3299
        %3319 = vmatprep.subr.bf16.mxu0 0
        %3320 = vmatpush1.bf16.msra.mxu0 %v3300
        %3321 = vmatprep.subr.bf16.mxu0 0
        %3322 = vmatpush1.bf16.msra.mxu0 %v3301
        %3323 = vmatprep.subr.bf16.mxu0 0
        %3324 = vmatpush1.bf16.msra.mxu0 %v3302
        %3325 = vmatprep.subr.bf16.mxu0 0
        %3326 = vmatpush1.bf16.msra.mxu0 %v3303
        %3327 = vmatprep.subr.bf16.mxu0 0
        %3328 = vmatpush1.bf16.msra.mxu0 %v3304
        %3329 = vmatprep.subr.bf16.mxu0 0
        %3330 = vmatpush1.bf16.msra.mxu0 0
        %3331 = vmatprep.subr.bf16.mxu0 0
        %3332 = vmatpush1.bf16.msra.mxu0 0
        %3333 = vmatprep.subr.bf16.mxu0 0
        %3334 = vmatpush1.bf16.msra.mxu0 0
        %3335 = vmatprep.subr.bf16.mxu0 0
        %3336 = vmatpush1.bf16.msra.mxu0 0
        %3337 = vmatprep.subr.bf16.mxu0 0
        %3338 = vmatpush1.bf16.msra.mxu0 0
        %3339 = vmatprep.subr.bf16.mxu0 0
        %3340 = vmatpush1.bf16.msra.mxu0 0
        %3341 = vmatprep.subr.bf16.mxu0 0
        %3342 = vmatpush1.bf16.msra.mxu0 0
        %3343 = vmatprep.subr.bf16.mxu0 0
        %3344 = vmatpush1.bf16.msra.mxu0 0
        %3345 = vmatprep.mubr.bf16.mxu0 0
        %3346 = vmatmul.mubr.bf16.gmra.mrb[0].mxu0 %v3261
        %v3347 = vpop.f32.mrb[0].mxu0
        %v3348 = vadd.f32 0.0, %v3347
        %v3349 = vpop.f32.mrb[0].mxu0
        %v3350 = vpop.f32.mrb[0].mxu0
        %v3351 = vadd.f32 0.0, %v3350
        %v3352 = vpop.f32.mrb[0].mxu0
        %3353 = vmatprep.mubr.bf16.mxu0 0
        %3354 = vmatmul.mubr.bf16.gmra.mrb[0].mxu0 %v3262
        %v3355 = vpop.f32.mrb[0].mxu0
        %v3356 = vadd.f32 0.0, %v3355
        %v3357 = vpop.f32.mrb[0].mxu0
        %v3358 = vpop.f32.mrb[0].mxu0
        %v3359 = vadd.f32 0.0, %v3358
        %v3360 = vpop.f32.mrb[0].mxu0
        %3361 = vmatprep.mubr.bf16.mxu0 0
        %3362 = vmatmul.mubr.bf16.gmra.mrb[0].mxu0 %v3263
        %v3363 = vpop.f32.mrb[0].mxu0
        %v3364 = vadd.f32 0.0, %v3363
        %v3365 = vpop.f32.mrb[0].mxu0
        %v3366 = vpop.f32.mrb[0].mxu0
        %v3367 = vadd.f32 0.0, %v3366
        %v3368 = vpop.f32.mrb[0].mxu0
        %3369 = vmatprep.mubr.bf16.mxu0 0
        %3370 = vmatmul.mubr.bf16.gmra.mrb[0].mxu0 %v3264
        %v3371 = vpop.f32.mrb[0].mxu0
        %v3372 = vadd.f32 0.0, %v3371
        %v3373 = vpop.f32.mrb[0].mxu0
        %v3374 = vpop.f32.mrb[0].mxu0
        %v3375 = vadd.f32 0.0, %v3374
        %v3376 = vpop.f32.mrb[0].mxu0
        %3377 = vdwg.mxu0
        %v3378 = vadd.f32 %v3253, %v3348
        %v3379 = vadd.f32 %v3254, %v3351
        %v3380 = vadd.f32 %v3255, %v3356
        %v3381 = vadd.f32 %v3256, %v3359
        %v3382 = vadd.f32 %v3257, %v3364
        %v3383 = vadd.f32 %v3258, %v3367
        %v3384 = vadd.f32 %v3259, %v3372
        %v3385 = vadd.f32 %v3260, %v3375
        %3386 = vst [vmem:[#allocation2] sm:$0xff] %v3378
        %3387 = vst [vmem:[#allocation2 + $0x8] sm:$0xff] %v3379
        %3388 = vst [vmem:[#allocation2 + $0x10] sm:$0xff] %v3380
        %3389 = vst [vmem:[#allocation2 + $0x18] sm:$0xff] %v3381
        %3390 = vst [vmem:[#allocation2 + $0x20] sm:$0xff] %v3382
        %3391 = vst [vmem:[#allocation2 + $0x28] sm:$0xff] %v3383
        %3392 = vst [vmem:[#allocation2 + $0x30] sm:$0xff] %v3384
        %3393 = vst [vmem:[#allocation2 + $0x38] sm:$0xff] %v3385
        %v3394 = vld [vmem:[#allocation2] sm:$0xff]
        %v3395 = vld [vmem:[#allocation2 + $0x8] sm:$0xff]
        %v3396 = vld [vmem:[#allocation2 + $0x10] sm:$0xff]
        %v3397 = vld [vmem:[#allocation2 + $0x18] sm:$0xff]
        %v3398 = vld [vmem:[#allocation2 + $0x20] sm:$0xff]
        %v3399 = vld [vmem:[#allocation2 + $0x28] sm:$0xff]
        %v3400 = vld [vmem:[#allocation2 + $0x30] sm:$0xff]
        %v3401 = vld [vmem:[#allocation2 + $0x38] sm:$0xff]
        %3402 = vst [vmem:[%s621] sm:$0xff] %v3394
        %3403 = vst [vmem:[%s621 + $0x8] sm:$0xff] %v3395
        %3404 = vst [vmem:[%s621 + $0x10] sm:$0xff] %v3396
        %3405 = vst [vmem:[%s621 + $0x18] sm:$0xff] %v3397
        %3406 = vst [vmem:[%s621 + $0x20] sm:$0xff] %v3398
        %3407 = vst [vmem:[%s621 + $0x28] sm:$0xff] %v3399
        %3408 = vst [vmem:[%s621 + $0x30] sm:$0xff] %v3400
        %3409 = vst [vmem:[%s621 + $0x38] sm:$0xff] %v3401
        %s3410 = sand.u32 %s322, 1
        %s3411 = scalar_lea.sflag [#allocation5], %s3410
        %s3412 = sand.u32 %s322, 1
        %s3413 = smul.addr %s3412, 64
        %s3414 = scalar_lea.vmem [#allocation24], %s3413
        // Predicated region
        $region125: #{tpu_custom_call.1} parent=71 // pred_check
          %p3415 = pneg %p332
        $region126: #{tpu_custom_call.1} parent=71 // pred_check_branch
          %3417 = sbr.rel (%p3415) target = $region128
        $region127: #{tpu_custom_call.1} parent=71 // pred_region
          %s3418 = smul.u32 4, %s36
          %s3420 = ssub.s32 1024, 1024
          %3421 = vsyncadd %s3411, %s3420
          %s3422 = smul.addr %s3418, 2
          %s3423 = smul.addr %s3422, 128
          %s3424 = scalar_lea.hbm %s13, %s3423
          %s3425 = sshll.u32 %s3414, 4
          %s3426 = int_to_ptr.vmem [resolvable:$true] %s3425
          %3431 = dma.vmem_to_hbm [thread:$0]  %s3426, 1024, %s3424, %s3411, 128, 128, 8
        $region128: #{tpu_custom_call.1} parent=71 // pred_fallthru
          _
      $region72: #{tpu_custom_call.1} parent=5 // pred_fallthru
        _
      %p3432 = scmp.le.s32.totalorder 2, %s31
      // Predicated region
      $region129: #{tpu_custom_call.1} parent=5 // pred_check
        %p3433 = pneg %p3432
      $region130: #{tpu_custom_call.1} parent=5 // pred_check_branch
        %3435 = sbr.rel (%p3433) target = $region132
      $region131: #{tpu_custom_call.1} parent=5 // pred_region
        %s3436 = ssub.s32 %s31, 2
        // Predicated region
        $region133: #{tpu_custom_call.1} parent=131 // pred_check
          %p3437 = pneg %p338
        $region134: #{tpu_custom_call.1} parent=131 // pred_check_branch
          %3439 = sbr.rel (%p3437) target = $region136
        $region135: #{tpu_custom_call.1} parent=131 // pred_region
          %s3440 = sand.u32 %s323, 1
          %s3441 = scalar_lea.sflag [#allocation5], %s3440
          %s3442 = sand.u32 %s323, 1
          %s3443 = smul.addr %s3442, 64
          %s3444 = scalar_lea.vmem [#allocation24], %s3443
          %3445 = dma.done %s3441, 1024
        $region136: #{tpu_custom_call.1} parent=131 // pred_fallthru
          _
      $region132: #{tpu_custom_call.1} parent=5 // pred_fallthru
        _
    $region6: #{tpu_custom_call.1} parent=1 // loop_footer
      %s35 = sadd.s32 1, %s31
    $region7: #{tpu_custom_call.1} parent=1 // loop_footer_branch
      %30 = sbr.rel target = $region3
    $region8: #{tpu_custom_call.1} parent=1 // loop_exit
      _
    %3446 = vsyncpa [#allocation4], 1
    %s3447 = scalar_lea.sflag [#allocation4], 1
    %3448 = vsyncpa %s3447, 1
    %3449 = vsyncpa [#allocation7], 1
    %3450 = vsyncpa [#allocation10], 1
    %3451 = vsyncpa [#allocation13], 1
    %3452 = vsyncpa [#allocation16], 1
    %3453 = vsyncpa [#allocation19], 1
    %3454 = vsyncpa [#allocation22], 1
    %3455 = vsyncpa [#allocation5], 1
    %s3456 = scalar_lea.sflag [#allocation5], 1
    %3457 = vsyncpa %s3456, 1

</llo_original>
